<compile_context>
chip_gen: v7x
topology: tpu7x:2x2x1
jax: 0.10.0
libtpu: 0.0.40
codegen_flags: <defaults>
</compile_context>

<pallas_src>
import jax
import jax.numpy as jnp
import numpy as np
from jax.experimental import pallas as pl
from jax.experimental.pallas import tpu as pltpu

BN_EPS = 1e-5  # PyTorch BatchNorm2d default eps


# ----------------------------------------------------------------------------
# Fused conv / psi / pre-fc / maxpool / relu kernel (TB batch elements / step)
# ----------------------------------------------------------------------------
def _make_block_kernel(TB, C, H, W, out_dtype):
    HW = H * W
    Wout = W - 2
    Wp = Wout // 2
    W2 = W // 2

    def kernel(x_ref, w_ref, b_ref, x_out_ref, pre_fc_ref):
        b_col = b_ref[...]                       # (C, 1) folded conv+BN bias
        w0 = w_ref[0]                            # (C, C) folded tap weights
        w1 = w_ref[1]
        w2 = w_ref[2]

        for tb in range(TB):                     # static unroll, TB is small
            # x arrives already flattened to (C, H*W): sublane=C, lane=H*W.
            xf = x_ref[tb].astype(jnp.float32)

            # (1,3) conv as 3 accumulated MXU matmuls; tap alignment via lane
            # rolls (XLU slot, overlaps MXU).  Columns w in {Wout, Wout+1} of
            # each W-row pick up wrapped data and are discarded downstream.
            conv = jnp.dot(w0, xf, preferred_element_type=jnp.float32)
            conv = conv + jnp.dot(w1, pltpu.roll(xf, HW - 1, axis=1),
                                  preferred_element_type=jnp.float32)
            conv = conv + jnp.dot(w2, pltpu.roll(xf, HW - 2, axis=1),
                                  preferred_element_type=jnp.float32)
            conv = conv + b_col                  # (C, H*W)

            # psi = mean over H of conv (accumulate W-row slices; no relayout).
            acc = conv[:, 0:W]
            for h in range(1, H):
                acc = acc + conv[:, h * W:(h + 1) * W]
            psi = acc * (1.0 / H)                # (C, W), valid cols < Wout

            # Compact pre-fc output; fc matmul + residual happen in XLA.
            pre_fc_ref[tb] = (jnp.sum(psi[:, 0:Wout], axis=1, keepdims=True)
                              * (1.0 / Wout))    # (C, 1)

            # MaxPool2d((1,2)) + ReLU.  Adjacent-W pairs stay adjacent in the
            # flat layout; the garbage last pair of each W-row is dropped by
            # the per-row Wp-wide stores below.
            pm = jnp.maximum(jnp.max(conv.reshape(C, HW // 2, 2), axis=2), 0.0)
            psi_p = jnp.maximum(
                jnp.max(psi[:, 0:Wout].reshape(C, Wp, 2), axis=2), 0.0)
            psi_p = psi_p.astype(out_dtype)      # (C, Wp), reused for every h

            for h in range(H):                   # per-row stores (opt #7)
                x_out_ref[tb, 0:C, h * Wp:(h + 1) * Wp] = \
                    pm[:, h * W2:h * W2 + Wp].astype(out_dtype)
                x_out_ref[tb, C:2 * C, h * Wp:(h + 1) * Wp] = psi_p

    return kernel


def _choose_tb(B, bytes_per_sample, target_bytes=2 << 20):
    """Largest divisor of B with ~target-sized blocks, keeping >=2 grid steps."""
    tb = 1
    for d in range(1, B + 1):
        if B % d == 0 and d * bytes_per_sample <= target_bytes:
            tb = d
    if B // tb < 2:                              # keep both v7x TCs busy
        for d in range(tb - 1, 0, -1):
            if B % d == 0:
                tb = d
                break
    return tb


@jax.jit
def mspidna_block(x_nchw, output, params):
    """Matches MSPIDNABlock.forward(x, output) -> (x_out, output_new); NCHW I/O."""
    conv_w, conv_b, gamma, beta, fc_w, fc_b = params
    B, C, H, W = x_nchw.shape
    num_output = fc_w.shape[0]
    Wout = W - 2
    assert Wout % 2 == 0, "pair pooling assumes even conv output width"
    # TODO(synk): odd Wout (odd W) would need the trailing W column dropped.
    Wp = Wout // 2

    # ---- BatchNorm batch statistics: fused XLA reduction (opt #8) ----------
    xf32 = x_nchw.astype(jnp.float32)            # fused into the reductions
    mu = jnp.mean(xf32, axis=(0, 2, 3))
    var = jnp.mean(jnp.square(xf32 - mu[None, :, None, None]), axis=(0, 2, 3))
    scale = gamma * jax.lax.rsqrt(var + BN_EPS)  # (C,)
    shift = beta - mu * scale                    # (C,)

    # ---- fold BN affine exactly into the (1,3) conv -------------------------
    w3 = conv_w[:, :, 0, :]                      # (Cout, Cin, 3)
    w_scaled = w3 * scale[None, :, None]
    w_folded = jnp.transpose(w_scaled, (2, 0, 1))            # (3, Cout, Cin)
    b_folded = (conv_b
                + jnp.sum(w3 * shift[None, :, None], axis=(1, 2))).reshape(C, 1)

    # ---- main Pallas kernel, TB samples per grid step ------------------------
    x_flat = x_nchw.reshape(B, C, H * W)         # free trailing-dim collapse
    out_dtype = x_nchw.dtype
    TB = _choose_tb(B, 8 * C * H * W * 4)
    kernel = _make_block_kernel(TB, C, H, W, out_dtype)

    x_out_flat, pre_fc = pl.pallas_call(
        kernel,
        out_shape=(jax.ShapeDtypeStruct((B, 2 * C, H * Wp), out_dtype),
                   jax.ShapeDtypeStruct((B, C, 1), jnp.float32)),
        grid_spec=pltpu.PrefetchScalarGridSpec(
            num_scalar_prefetch=0,
            grid=(B // TB,),
            in_specs=[
                pl.BlockSpec((TB, C, H * W), lambda i: (i, 0, 0)),
                pl.BlockSpec((3, C, C), lambda i: (0, 0, 0)),
                pl.BlockSpec((C, 1), lambda i: (0, 0)),
            ],
            out_specs=(
                pl.BlockSpec((TB, 2 * C, H * Wp), lambda i: (i, 0, 0)),
                pl.BlockSpec((TB, C, 1), lambda i: (i, 0, 0)),
            ),
        ),
        compiler_params=pltpu.CompilerParams(
            dimension_semantics=("parallel",),
            vmem_limit_bytes=48 * 1024 * 1024),
    )(x_flat, w_folded, b_folded)

    # ---- fc head + residual once, in XLA (opt #4) ----------------------------
    cur = pre_fc[:, :, 0] @ fc_w.T + fc_b        # (B, num_output)
    out_new = output.astype(jnp.float32) + cur

    x_out = x_out_flat.reshape(B, 2 * C, H, Wp)  # free split of trailing dim
    return x_out, out_new


# ----------------------------------------------------------------------------
# Pure-JAX NCHW reference mirroring the PyTorch forward (training-mode BN)
# ----------------------------------------------------------------------------
def mspidna_block_ref(x, output, params):
    conv_w, conv_b, gamma, beta, fc_w, fc_b = params
    B, C, H, W = x.shape
    mu = jnp.mean(x, axis=(0, 2, 3), keepdims=True)
    var = jnp.mean((x - mu) ** 2, axis=(0, 2, 3), keepdims=True)
    xb = (x - mu) * jax.lax.rsqrt(var + BN_EPS) * gamma.reshape(1, C, 1, 1) \
        + beta.reshape(1, C, 1, 1)
    Wout = W - 2
    conv = jnp.zeros((B, C, H, Wout), jnp.float32)
    for k in range(3):
        conv = conv + jnp.einsum('bchw,oc->bohw', xb[:, :, :, k:k + Wout],
                                 conv_w[:, :, 0, k],
                                 precision=jax.lax.Precision.HIGHEST)
    conv = conv + conv_b.reshape(1, C, 1, 1)
    psi1 = jnp.mean(conv, axis=2, keepdims=True)           # (B, C, 1, Wout)
    cur = jnp.squeeze(jnp.mean(psi1, axis=3), axis=2) @ fc_w.T + fc_b
    out = output + cur
    psi = jnp.broadcast_to(psi1, (B, C, H, Wout))
    cat = jnp.concatenate([conv, psi], axis=1)
    Wp = Wout // 2
    pooled = jnp.maximum(cat[:, :, :, 0:2 * Wp:2], cat[:, :, :, 1:2 * Wp:2])
    return jnp.maximum(pooled, 0.0), out


if __name__ == "__main__":
    num_feature = 4
    num_output = 3
    C = num_feature * 2            # conv channels (in == out == num_feature*2)
    B, H, W = 2, 16, 16

    key = jax.random.PRNGKey(0)
    kx, ko, k1, k2, k3, k4, k5, k6 = jax.random.split(key, 8)
    x = jax.random.normal(kx, (B, C, H, W), jnp.float32)
    output0 = 0.1 * jax.random.normal(ko, (B, num_output), jnp.float32)

    # Deterministic synthetic parameters (PyTorch native layouts).
    conv_w = 0.1 * jax.random.normal(k1, (C, C, 1, 3), jnp.float32)   # OIHW
    conv_b = 0.1 * jax.random.normal(k2, (C,), jnp.float32)
    gamma = 1.0 + 0.1 * jax.random.normal(k3, (C,), jnp.float32)      # BN weight
    beta = 0.1 * jax.random.normal(k4, (C,), jnp.float32)             # BN bias
    fc_w = 0.1 * jax.random.normal(k5, (num_output, C), jnp.float32)  # (out, in)
    fc_b = 0.1 * jax.random.normal(k6, (num_output,), jnp.float32)
    params = (conv_w, conv_b, gamma, beta, fc_w, fc_b)

    x_out, out_new = jax.block_until_ready(mspidna_block(x, output0, params))
    x_exp, out_exp = mspidna_block_ref(x, output0, params)

    assert x_out.shape == (B, 2 * C, H, (W - 2) // 2), x_out.shape
    assert out_new.shape == (B, num_output), out_new.shape
    np.testing.assert_allclose(np.asarray(x_out), np.asarray(x_exp),
                               rtol=2e-2, atol=2e-2)
    np.testing.assert_allclose(np.asarray(out_new), np.asarray(out_exp),
                               rtol=2e-2, atol=2e-2)
    print("KERNEL_OK")
</pallas_src>

<mosaic_0001>
module attributes {stable_mosaic.version = 11 : i64} {
  func.func @kernel(%arg0: i32, %arg1: memref<1x8x256xf32, #tpu.memory_space<vmem>>, %arg2: memref<3x8x8xf32, #tpu.memory_space<vmem>>, %arg3: memref<8x1xf32, #tpu.memory_space<vmem>>, %arg4: memref<1x16x112xf32, #tpu.memory_space<vmem>>, %arg5: memref<1x8x1xf32, #tpu.memory_space<vmem>>) attributes {dimension_semantics = [#tpu.dimension_semantics<parallel>], iteration_bounds = array<i64: 2>, scalar_prefetch = 0 : i64, scratch_operands = 0 : i64, tpu.core_type = #tpu.core_type<tc>, window_params = [{transform_indices = @transform_0, window_bounds = array<i64: 1, 8, 256>}, {pipeline_mode = #tpu.pipeline_mode<synchronous>, transform_indices = @transform_1, window_bounds = array<i64: 3, 8, 8>}, {pipeline_mode = #tpu.pipeline_mode<synchronous>, transform_indices = @transform_2, window_bounds = array<i64: 8, 1>}, {transform_indices = @transform_3, window_bounds = array<i64: 1, 16, 112>}, {transform_indices = @transform_4, window_bounds = array<i64: 1, 8, 1>}]} {
    %c0 = arith.constant 0 : index
    %c0_0 = arith.constant 0 : index
    %0 = vector.load %arg3[%c0, %c0_0] : memref<8x1xf32, #tpu.memory_space<vmem>>, vector<8x1xf32>
    %c0_1 = arith.constant 0 : index
    %c0_2 = arith.constant 0 : index
    %c0_3 = arith.constant 0 : index
    %1 = vector.load %arg2[%c0_1, %c0_2, %c0_3] : memref<3x8x8xf32, #tpu.memory_space<vmem>>, vector<1x8x8xf32>
    %2 = vector.shape_cast %1 : vector<1x8x8xf32> to vector<8x8xf32>
    %c1 = arith.constant 1 : index
    %c0_4 = arith.constant 0 : index
    %c0_5 = arith.constant 0 : index
    %3 = vector.load %arg2[%c1, %c0_4, %c0_5] : memref<3x8x8xf32, #tpu.memory_space<vmem>>, vector<1x8x8xf32>
    %4 = vector.shape_cast %3 : vector<1x8x8xf32> to vector<8x8xf32>
    %c2 = arith.constant 2 : index
    %c0_6 = arith.constant 0 : index
    %c0_7 = arith.constant 0 : index
    %5 = vector.load %arg2[%c2, %c0_6, %c0_7] : memref<3x8x8xf32, #tpu.memory_space<vmem>>, vector<1x8x8xf32>
    %6 = vector.shape_cast %5 : vector<1x8x8xf32> to vector<8x8xf32>
    %c0_8 = arith.constant 0 : index
    %c0_9 = arith.constant 0 : index
    %c0_10 = arith.constant 0 : index
    %7 = vector.load %arg1[%c0_8, %c0_9, %c0_10] : memref<1x8x256xf32, #tpu.memory_space<vmem>>, vector<1x8x256xf32>
    %8 = vector.shape_cast %7 : vector<1x8x256xf32> to vector<8x256xf32>
    %cst = arith.constant dense<0.000000e+00> : vector<8x256xf32>
    %9 = tpu.matmul %2, %8, %cst {dimension_numbers = #tpu.dot_dimension_numbers<[1], [0], [0], [1], [0, 0, 1, 1], [], []>} : vector<8x8xf32>, vector<8x256xf32>, vector<8x256xf32> -> vector<8x256xf32>
    %c255_i32 = arith.constant 255 : i32
    %10 = tpu.dynamic_rotate %8 by %c255_i32 dim 1 : vector<8x256xf32>, i32 -> vector<8x256xf32>
    %cst_11 = arith.constant dense<0.000000e+00> : vector<8x256xf32>
    %11 = tpu.matmul %4, %10, %cst_11 {dimension_numbers = #tpu.dot_dimension_numbers<[1], [0], [0], [1], [0, 0, 1, 1], [], []>} : vector<8x8xf32>, vector<8x256xf32>, vector<8x256xf32> -> vector<8x256xf32>
    %12 = arith.addf %9, %11 : vector<8x256xf32>
    %c254_i32 = arith.constant 254 : i32
    %13 = tpu.dynamic_rotate %8 by %c254_i32 dim 1 : vector<8x256xf32>, i32 -> vector<8x256xf32>
    %cst_12 = arith.constant dense<0.000000e+00> : vector<8x256xf32>
    %14 = tpu.matmul %6, %13, %cst_12 {dimension_numbers = #tpu.dot_dimension_numbers<[1], [0], [0], [1], [0, 0, 1, 1], [], []>} : vector<8x8xf32>, vector<8x256xf32>, vector<8x256xf32> -> vector<8x256xf32>
    %15 = arith.addf %12, %14 : vector<8x256xf32>
    %16 = vector.broadcast %0 : vector<8x1xf32> to vector<8x256xf32>
    %17 = arith.addf %15, %16 : vector<8x256xf32>
    %18 = vector.extract_strided_slice %17 {offsets = [0, 0], sizes = [8, 16], strides = [1, 1]} : vector<8x256xf32> to vector<8x16xf32>
    %19 = vector.extract_strided_slice %17 {offsets = [0, 16], sizes = [8, 16], strides = [1, 1]} : vector<8x256xf32> to vector<8x16xf32>
    %20 = arith.addf %18, %19 : vector<8x16xf32>
    %21 = vector.extract_strided_slice %17 {offsets = [0, 32], sizes = [8, 16], strides = [1, 1]} : vector<8x256xf32> to vector<8x16xf32>
    %22 = arith.addf %20, %21 : vector<8x16xf32>
    %23 = vector.extract_strided_slice %17 {offsets = [0, 48], sizes = [8, 16], strides = [1, 1]} : vector<8x256xf32> to vector<8x16xf32>
    %24 = arith.addf %22, %23 : vector<8x16xf32>
    %25 = vector.extract_strided_slice %17 {offsets = [0, 64], sizes = [8, 16], strides = [1, 1]} : vector<8x256xf32> to vector<8x16xf32>
    %26 = arith.addf %24, %25 : vector<8x16xf32>
    %27 = vector.extract_strided_slice %17 {offsets = [0, 80], sizes = [8, 16], strides = [1, 1]} : vector<8x256xf32> to vector<8x16xf32>
    %28 = arith.addf %26, %27 : vector<8x16xf32>
    %29 = vector.extract_strided_slice %17 {offsets = [0, 96], sizes = [8, 16], strides = [1, 1]} : vector<8x256xf32> to vector<8x16xf32>
    %30 = arith.addf %28, %29 : vector<8x16xf32>
    %31 = vector.extract_strided_slice %17 {offsets = [0, 112], sizes = [8, 16], strides = [1, 1]} : vector<8x256xf32> to vector<8x16xf32>
    %32 = arith.addf %30, %31 : vector<8x16xf32>
    %33 = vector.extract_strided_slice %17 {offsets = [0, 128], sizes = [8, 16], strides = [1, 1]} : vector<8x256xf32> to vector<8x16xf32>
    %34 = arith.addf %32, %33 : vector<8x16xf32>
    %35 = vector.extract_strided_slice %17 {offsets = [0, 144], sizes = [8, 16], strides = [1, 1]} : vector<8x256xf32> to vector<8x16xf32>
    %36 = arith.addf %34, %35 : vector<8x16xf32>
    %37 = vector.extract_strided_slice %17 {offsets = [0, 160], sizes = [8, 16], strides = [1, 1]} : vector<8x256xf32> to vector<8x16xf32>
    %38 = arith.addf %36, %37 : vector<8x16xf32>
    %39 = vector.extract_strided_slice %17 {offsets = [0, 176], sizes = [8, 16], strides = [1, 1]} : vector<8x256xf32> to vector<8x16xf32>
    %40 = arith.addf %38, %39 : vector<8x16xf32>
    %41 = vector.extract_strided_slice %17 {offsets = [0, 192], sizes = [8, 16], strides = [1, 1]} : vector<8x256xf32> to vector<8x16xf32>
    %42 = arith.addf %40, %41 : vector<8x16xf32>
    %43 = vector.extract_strided_slice %17 {offsets = [0, 208], sizes = [8, 16], strides = [1, 1]} : vector<8x256xf32> to vector<8x16xf32>
    %44 = arith.addf %42, %43 : vector<8x16xf32>
    %45 = vector.extract_strided_slice %17 {offsets = [0, 224], sizes = [8, 16], strides = [1, 1]} : vector<8x256xf32> to vector<8x16xf32>
    %46 = arith.addf %44, %45 : vector<8x16xf32>
    %47 = vector.extract_strided_slice %17 {offsets = [0, 240], sizes = [8, 16], strides = [1, 1]} : vector<8x256xf32> to vector<8x16xf32>
    %48 = arith.addf %46, %47 : vector<8x16xf32>
    %cst_13 = arith.constant 6.250000e-02 : f32
    %49 = vector.broadcast %cst_13 : f32 to vector<8x16xf32>
    %50 = arith.mulf %48, %49 : vector<8x16xf32>
    %51 = vector.extract_strided_slice %50 {offsets = [0, 0], sizes = [8, 14], strides = [1, 1]} : vector<8x16xf32> to vector<8x14xf32>
    %cst_14 = arith.constant dense<0.000000e+00> : vector<8xf32>
    %52 = vector.multi_reduction <add>, %51, %cst_14 [1] : vector<8x14xf32> to vector<8xf32>
    %53 = vector.shape_cast %52 : vector<8xf32> to vector<8x1xf32>
    %cst_15 = arith.constant 0.0714285746 : f32
    %54 = vector.broadcast %cst_15 : f32 to vector<8x1xf32>
    %55 = arith.mulf %53, %54 : vector<8x1xf32>
    %c0_16 = arith.constant 0 : index
    %c0_17 = arith.constant 0 : index
    %c0_18 = arith.constant 0 : index
    %56 = vector.load %arg5[%c0_16, %c0_17, %c0_18] : memref<1x8x1xf32, #tpu.memory_space<vmem>>, vector<1x8x1xf32>
    %57 = vector.shape_cast %56 : vector<1x8x1xf32> to vector<8x1xf32>
    %58 = vector.shape_cast %55 : vector<8x1xf32> to vector<1x8x1xf32>
    tpu.vector_store %arg5[%c0_16, %c0_17, %c0_18], %58 {strides = array<i32>} : memref<1x8x1xf32, #tpu.memory_space<vmem>>, vector<1x8x1xf32>,
    %59 = vector.shape_cast %17 : vector<8x256xf32> to vector<8x128x2xf32>
    %cst_19 = arith.constant dense<0xFF800000> : vector<8x128xf32>
    %60 = vector.multi_reduction <maximumf>, %59, %cst_19 [2] : vector<8x128x2xf32> to vector<8x128xf32>
    %cst_20 = arith.constant 0.000000e+00 : f32
    %61 = vector.broadcast %cst_20 : f32 to vector<8x128xf32>
    %62 = arith.maximumf %60, %61 : vector<8x128xf32>
    %63 = vector.extract_strided_slice %50 {offsets = [0, 0], sizes = [8, 14], strides = [1, 1]} : vector<8x16xf32> to vector<8x14xf32>
    %64 = vector.shape_cast %63 : vector<8x14xf32> to vector<8x7x2xf32>
    %cst_21 = arith.constant dense<0xFF800000> : vector<8x7xf32>
    %65 = vector.multi_reduction <maximumf>, %64, %cst_21 [2] : vector<8x7x2xf32> to vector<8x7xf32>
    %cst_22 = arith.constant 0.000000e+00 : f32
    %66 = vector.broadcast %cst_22 : f32 to vector<8x7xf32>
    %67 = arith.maximumf %65, %66 : vector<8x7xf32>
    %68 = vector.extract_strided_slice %62 {offsets = [0, 0], sizes = [8, 7], strides = [1, 1]} : vector<8x128xf32> to vector<8x7xf32>
    %c0_23 = arith.constant 0 : index
    %c0_24 = arith.constant 0 : index
    %c0_25 = arith.constant 0 : index
    %69 = vector.load %arg4[%c0_23, %c0_24, %c0_25] : memref<1x16x112xf32, #tpu.memory_space<vmem>>, vector<1x8x7xf32>
    %70 = vector.shape_cast %69 : vector<1x8x7xf32> to vector<8x7xf32>
    %71 = vector.shape_cast %68 : vector<8x7xf32> to vector<1x8x7xf32>
    tpu.vector_store %arg4[%c0_23, %c0_24, %c0_25], %71 {strides = array<i32>} : memref<1x16x112xf32, #tpu.memory_space<vmem>>, vector<1x8x7xf32>,
    %c0_26 = arith.constant 0 : index
    %c8 = arith.constant 8 : index
    %c0_27 = arith.constant 0 : index
    %72 = vector.load %arg4[%c0_26, %c8, %c0_27] : memref<1x16x112xf32, #tpu.memory_space<vmem>>, vector<1x8x7xf32>
    %73 = vector.shape_cast %72 : vector<1x8x7xf32> to vector<8x7xf32>
    %74 = vector.shape_cast %67 : vector<8x7xf32> to vector<1x8x7xf32>
    tpu.vector_store %arg4[%c0_26, %c8, %c0_27], %74 {strides = array<i32>} : memref<1x16x112xf32, #tpu.memory_space<vmem>>, vector<1x8x7xf32>,
    %75 = vector.extract_strided_slice %62 {offsets = [0, 8], sizes = [8, 7], strides = [1, 1]} : vector<8x128xf32> to vector<8x7xf32>
    %c0_28 = arith.constant 0 : index
    %c0_29 = arith.constant 0 : index
    %c7 = arith.constant 7 : index
    %76 = vector.load %arg4[%c0_28, %c0_29, %c7] : memref<1x16x112xf32, #tpu.memory_space<vmem>>, vector<1x8x7xf32>
    %77 = vector.shape_cast %76 : vector<1x8x7xf32> to vector<8x7xf32>
    %78 = vector.shape_cast %75 : vector<8x7xf32> to vector<1x8x7xf32>
    tpu.vector_store %arg4[%c0_28, %c0_29, %c7], %78 {strides = array<i32>} : memref<1x16x112xf32, #tpu.memory_space<vmem>>, vector<1x8x7xf32>,
    %c0_30 = arith.constant 0 : index
    %c8_31 = arith.constant 8 : index
    %c7_32 = arith.constant 7 : index
    %79 = vector.load %arg4[%c0_30, %c8_31, %c7_32] : memref<1x16x112xf32, #tpu.memory_space<vmem>>, vector<1x8x7xf32>
    %80 = vector.shape_cast %79 : vector<1x8x7xf32> to vector<8x7xf32>
    %81 = vector.shape_cast %67 : vector<8x7xf32> to vector<1x8x7xf32>
    tpu.vector_store %arg4[%c0_30, %c8_31, %c7_32], %81 {strides = array<i32>} : memref<1x16x112xf32, #tpu.memory_space<vmem>>, vector<1x8x7xf32>,
    %82 = vector.extract_strided_slice %62 {offsets = [0, 16], sizes = [8, 7], strides = [1, 1]} : vector<8x128xf32> to vector<8x7xf32>
    %c0_33 = arith.constant 0 : index
    %c0_34 = arith.constant 0 : index
    %c14 = arith.constant 14 : index
    %83 = vector.load %arg4[%c0_33, %c0_34, %c14] : memref<1x16x112xf32, #tpu.memory_space<vmem>>, vector<1x8x7xf32>
    %84 = vector.shape_cast %83 : vector<1x8x7xf32> to vector<8x7xf32>
    %85 = vector.shape_cast %82 : vector<8x7xf32> to vector<1x8x7xf32>
    tpu.vector_store %arg4[%c0_33, %c0_34, %c14], %85 {strides = array<i32>} : memref<1x16x112xf32, #tpu.memory_space<vmem>>, vector<1x8x7xf32>,
    %c0_35 = arith.constant 0 : index
    %c8_36 = arith.constant 8 : index
    %c14_37 = arith.constant 14 : index
    %86 = vector.load %arg4[%c0_35, %c8_36, %c14_37] : memref<1x16x112xf32, #tpu.memory_space<vmem>>, vector<1x8x7xf32>
    %87 = vector.shape_cast %86 : vector<1x8x7xf32> to vector<8x7xf32>
    %88 = vector.shape_cast %67 : vector<8x7xf32> to vector<1x8x7xf32>
    tpu.vector_store %arg4[%c0_35, %c8_36, %c14_37], %88 {strides = array<i32>} : memref<1x16x112xf32, #tpu.memory_space<vmem>>, vector<1x8x7xf32>,
    %89 = vector.extract_strided_slice %62 {offsets = [0, 24], sizes = [8, 7], strides = [1, 1]} : vector<8x128xf32> to vector<8x7xf32>
    %c0_38 = arith.constant 0 : index
    %c0_39 = arith.constant 0 : index
    %c21 = arith.constant 21 : index
    %90 = vector.load %arg4[%c0_38, %c0_39, %c21] : memref<1x16x112xf32, #tpu.memory_space<vmem>>, vector<1x8x7xf32>
    %91 = vector.shape_cast %90 : vector<1x8x7xf32> to vector<8x7xf32>
    %92 = vector.shape_cast %89 : vector<8x7xf32> to vector<1x8x7xf32>
    tpu.vector_store %arg4[%c0_38, %c0_39, %c21], %92 {strides = array<i32>} : memref<1x16x112xf32, #tpu.memory_space<vmem>>, vector<1x8x7xf32>,
    %c0_40 = arith.constant 0 : index
    %c8_41 = arith.constant 8 : index
    %c21_42 = arith.constant 21 : index
    %93 = vector.load %arg4[%c0_40, %c8_41, %c21_42] : memref<1x16x112xf32, #tpu.memory_space<vmem>>, vector<1x8x7xf32>
    %94 = vector.shape_cast %93 : vector<1x8x7xf32> to vector<8x7xf32>
    %95 = vector.shape_cast %67 : vector<8x7xf32> to vector<1x8x7xf32>
    tpu.vector_store %arg4[%c0_40, %c8_41, %c21_42], %95 {strides = array<i32>} : memref<1x16x112xf32, #tpu.memory_space<vmem>>, vector<1x8x7xf32>,
    %96 = vector.extract_strided_slice %62 {offsets = [0, 32], sizes = [8, 7], strides = [1, 1]} : vector<8x128xf32> to vector<8x7xf32>
    %c0_43 = arith.constant 0 : index
    %c0_44 = arith.constant 0 : index
    %c28 = arith.constant 28 : index
    %97 = vector.load %arg4[%c0_43, %c0_44, %c28] : memref<1x16x112xf32, #tpu.memory_space<vmem>>, vector<1x8x7xf32>
    %98 = vector.shape_cast %97 : vector<1x8x7xf32> to vector<8x7xf32>
    %99 = vector.shape_cast %96 : vector<8x7xf32> to vector<1x8x7xf32>
    tpu.vector_store %arg4[%c0_43, %c0_44, %c28], %99 {strides = array<i32>} : memref<1x16x112xf32, #tpu.memory_space<vmem>>, vector<1x8x7xf32>,
    %c0_45 = arith.constant 0 : index
    %c8_46 = arith.constant 8 : index
    %c28_47 = arith.constant 28 : index
    %100 = vector.load %arg4[%c0_45, %c8_46, %c28_47] : memref<1x16x112xf32, #tpu.memory_space<vmem>>, vector<1x8x7xf32>
    %101 = vector.shape_cast %100 : vector<1x8x7xf32> to vector<8x7xf32>
    %102 = vector.shape_cast %67 : vector<8x7xf32> to vector<1x8x7xf32>
    tpu.vector_store %arg4[%c0_45, %c8_46, %c28_47], %102 {strides = array<i32>} : memref<1x16x112xf32, #tpu.memory_space<vmem>>, vector<1x8x7xf32>,
    %103 = vector.extract_strided_slice %62 {offsets = [0, 40], sizes = [8, 7], strides = [1, 1]} : vector<8x128xf32> to vector<8x7xf32>
    %c0_48 = arith.constant 0 : index
    %c0_49 = arith.constant 0 : index
    %c35 = arith.constant 35 : index
    %104 = vector.load %arg4[%c0_48, %c0_49, %c35] : memref<1x16x112xf32, #tpu.memory_space<vmem>>, vector<1x8x7xf32>
    %105 = vector.shape_cast %104 : vector<1x8x7xf32> to vector<8x7xf32>
    %106 = vector.shape_cast %103 : vector<8x7xf32> to vector<1x8x7xf32>
    tpu.vector_store %arg4[%c0_48, %c0_49, %c35], %106 {strides = array<i32>} : memref<1x16x112xf32, #tpu.memory_space<vmem>>, vector<1x8x7xf32>,
    %c0_50 = arith.constant 0 : index
    %c8_51 = arith.constant 8 : index
    %c35_52 = arith.constant 35 : index
    %107 = vector.load %arg4[%c0_50, %c8_51, %c35_52] : memref<1x16x112xf32, #tpu.memory_space<vmem>>, vector<1x8x7xf32>
    %108 = vector.shape_cast %107 : vector<1x8x7xf32> to vector<8x7xf32>
    %109 = vector.shape_cast %67 : vector<8x7xf32> to vector<1x8x7xf32>
    tpu.vector_store %arg4[%c0_50, %c8_51, %c35_52], %109 {strides = array<i32>} : memref<1x16x112xf32, #tpu.memory_space<vmem>>, vector<1x8x7xf32>,
    %110 = vector.extract_strided_slice %62 {offsets = [0, 48], sizes = [8, 7], strides = [1, 1]} : vector<8x128xf32> to vector<8x7xf32>
    %c0_53 = arith.constant 0 : index
    %c0_54 = arith.constant 0 : index
    %c42 = arith.constant 42 : index
    %111 = vector.load %arg4[%c0_53, %c0_54, %c42] : memref<1x16x112xf32, #tpu.memory_space<vmem>>, vector<1x8x7xf32>
    %112 = vector.shape_cast %111 : vector<1x8x7xf32> to vector<8x7xf32>
    %113 = vector.shape_cast %110 : vector<8x7xf32> to vector<1x8x7xf32>
    tpu.vector_store %arg4[%c0_53, %c0_54, %c42], %113 {strides = array<i32>} : memref<1x16x112xf32, #tpu.memory_space<vmem>>, vector<1x8x7xf32>,
    %c0_55 = arith.constant 0 : index
    %c8_56 = arith.constant 8 : index
    %c42_57 = arith.constant 42 : index
    %114 = vector.load %arg4[%c0_55, %c8_56, %c42_57] : memref<1x16x112xf32, #tpu.memory_space<vmem>>, vector<1x8x7xf32>
    %115 = vector.shape_cast %114 : vector<1x8x7xf32> to vector<8x7xf32>
    %116 = vector.shape_cast %67 : vector<8x7xf32> to vector<1x8x7xf32>
    tpu.vector_store %arg4[%c0_55, %c8_56, %c42_57], %116 {strides = array<i32>} : memref<1x16x112xf32, #tpu.memory_space<vmem>>, vector<1x8x7xf32>,
    %117 = vector.extract_strided_slice %62 {offsets = [0, 56], sizes = [8, 7], strides = [1, 1]} : vector<8x128xf32> to vector<8x7xf32>
    %c0_58 = arith.constant 0 : index
    %c0_59 = arith.constant 0 : index
    %c49 = arith.constant 49 : index
    %118 = vector.load %arg4[%c0_58, %c0_59, %c49] : memref<1x16x112xf32, #tpu.memory_space<vmem>>, vector<1x8x7xf32>
    %119 = vector.shape_cast %118 : vector<1x8x7xf32> to vector<8x7xf32>
    %120 = vector.shape_cast %117 : vector<8x7xf32> to vector<1x8x7xf32>
    tpu.vector_store %arg4[%c0_58, %c0_59, %c49], %120 {strides = array<i32>} : memref<1x16x112xf32, #tpu.memory_space<vmem>>, vector<1x8x7xf32>,
    %c0_60 = arith.constant 0 : index
    %c8_61 = arith.constant 8 : index
    %c49_62 = arith.constant 49 : index
    %121 = vector.load %arg4[%c0_60, %c8_61, %c49_62] : memref<1x16x112xf32, #tpu.memory_space<vmem>>, vector<1x8x7xf32>
    %122 = vector.shape_cast %121 : vector<1x8x7xf32> to vector<8x7xf32>
    %123 = vector.shape_cast %67 : vector<8x7xf32> to vector<1x8x7xf32>
    tpu.vector_store %arg4[%c0_60, %c8_61, %c49_62], %123 {strides = array<i32>} : memref<1x16x112xf32, #tpu.memory_space<vmem>>, vector<1x8x7xf32>,
    %124 = vector.extract_strided_slice %62 {offsets = [0, 64], sizes = [8, 7], strides = [1, 1]} : vector<8x128xf32> to vector<8x7xf32>
    %c0_63 = arith.constant 0 : index
    %c0_64 = arith.constant 0 : index
    %c56 = arith.constant 56 : index
    %125 = vector.load %arg4[%c0_63, %c0_64, %c56] : memref<1x16x112xf32, #tpu.memory_space<vmem>>, vector<1x8x7xf32>
    %126 = vector.shape_cast %125 : vector<1x8x7xf32> to vector<8x7xf32>
    %127 = vector.shape_cast %124 : vector<8x7xf32> to vector<1x8x7xf32>
    tpu.vector_store %arg4[%c0_63, %c0_64, %c56], %127 {strides = array<i32>} : memref<1x16x112xf32, #tpu.memory_space<vmem>>, vector<1x8x7xf32>,
    %c0_65 = arith.constant 0 : index
    %c8_66 = arith.constant 8 : index
    %c56_67 = arith.constant 56 : index
    %128 = vector.load %arg4[%c0_65, %c8_66, %c56_67] : memref<1x16x112xf32, #tpu.memory_space<vmem>>, vector<1x8x7xf32>
    %129 = vector.shape_cast %128 : vector<1x8x7xf32> to vector<8x7xf32>
    %130 = vector.shape_cast %67 : vector<8x7xf32> to vector<1x8x7xf32>
    tpu.vector_store %arg4[%c0_65, %c8_66, %c56_67], %130 {strides = array<i32>} : memref<1x16x112xf32, #tpu.memory_space<vmem>>, vector<1x8x7xf32>,
    %131 = vector.extract_strided_slice %62 {offsets = [0, 72], sizes = [8, 7], strides = [1, 1]} : vector<8x128xf32> to vector<8x7xf32>
    %c0_68 = arith.constant 0 : index
    %c0_69 = arith.constant 0 : index
    %c63 = arith.constant 63 : index
    %132 = vector.load %arg4[%c0_68, %c0_69, %c63] : memref<1x16x112xf32, #tpu.memory_space<vmem>>, vector<1x8x7xf32>
    %133 = vector.shape_cast %132 : vector<1x8x7xf32> to vector<8x7xf32>
    %134 = vector.shape_cast %131 : vector<8x7xf32> to vector<1x8x7xf32>
    tpu.vector_store %arg4[%c0_68, %c0_69, %c63], %134 {strides = array<i32>} : memref<1x16x112xf32, #tpu.memory_space<vmem>>, vector<1x8x7xf32>,
    %c0_70 = arith.constant 0 : index
    %c8_71 = arith.constant 8 : index
    %c63_72 = arith.constant 63 : index
    %135 = vector.load %arg4[%c0_70, %c8_71, %c63_72] : memref<1x16x112xf32, #tpu.memory_space<vmem>>, vector<1x8x7xf32>
    %136 = vector.shape_cast %135 : vector<1x8x7xf32> to vector<8x7xf32>
    %137 = vector.shape_cast %67 : vector<8x7xf32> to vector<1x8x7xf32>
    tpu.vector_store %arg4[%c0_70, %c8_71, %c63_72], %137 {strides = array<i32>} : memref<1x16x112xf32, #tpu.memory_space<vmem>>, vector<1x8x7xf32>,
    %138 = vector.extract_strided_slice %62 {offsets = [0, 80], sizes = [8, 7], strides = [1, 1]} : vector<8x128xf32> to vector<8x7xf32>
    %c0_73 = arith.constant 0 : index
    %c0_74 = arith.constant 0 : index
    %c70 = arith.constant 70 : index
    %139 = vector.load %arg4[%c0_73, %c0_74, %c70] : memref<1x16x112xf32, #tpu.memory_space<vmem>>, vector<1x8x7xf32>
    %140 = vector.shape_cast %139 : vector<1x8x7xf32> to vector<8x7xf32>
    %141 = vector.shape_cast %138 : vector<8x7xf32> to vector<1x8x7xf32>
    tpu.vector_store %arg4[%c0_73, %c0_74, %c70], %141 {strides = array<i32>} : memref<1x16x112xf32, #tpu.memory_space<vmem>>, vector<1x8x7xf32>,
    %c0_75 = arith.constant 0 : index
    %c8_76 = arith.constant 8 : index
    %c70_77 = arith.constant 70 : index
    %142 = vector.load %arg4[%c0_75, %c8_76, %c70_77] : memref<1x16x112xf32, #tpu.memory_space<vmem>>, vector<1x8x7xf32>
    %143 = vector.shape_cast %142 : vector<1x8x7xf32> to vector<8x7xf32>
    %144 = vector.shape_cast %67 : vector<8x7xf32> to vector<1x8x7xf32>
    tpu.vector_store %arg4[%c0_75, %c8_76, %c70_77], %144 {strides = array<i32>} : memref<1x16x112xf32, #tpu.memory_space<vmem>>, vector<1x8x7xf32>,
    %145 = vector.extract_strided_slice %62 {offsets = [0, 88], sizes = [8, 7], strides = [1, 1]} : vector<8x128xf32> to vector<8x7xf32>
    %c0_78 = arith.constant 0 : index
    %c0_79 = arith.constant 0 : index
    %c77 = arith.constant 77 : index
    %146 = vector.load %arg4[%c0_78, %c0_79, %c77] : memref<1x16x112xf32, #tpu.memory_space<vmem>>, vector<1x8x7xf32>
    %147 = vector.shape_cast %146 : vector<1x8x7xf32> to vector<8x7xf32>
    %148 = vector.shape_cast %145 : vector<8x7xf32> to vector<1x8x7xf32>
    tpu.vector_store %arg4[%c0_78, %c0_79, %c77], %148 {strides = array<i32>} : memref<1x16x112xf32, #tpu.memory_space<vmem>>, vector<1x8x7xf32>,
    %c0_80 = arith.constant 0 : index
    %c8_81 = arith.constant 8 : index
    %c77_82 = arith.constant 77 : index
    %149 = vector.load %arg4[%c0_80, %c8_81, %c77_82] : memref<1x16x112xf32, #tpu.memory_space<vmem>>, vector<1x8x7xf32>
    %150 = vector.shape_cast %149 : vector<1x8x7xf32> to vector<8x7xf32>
    %151 = vector.shape_cast %67 : vector<8x7xf32> to vector<1x8x7xf32>
    tpu.vector_store %arg4[%c0_80, %c8_81, %c77_82], %151 {strides = array<i32>} : memref<1x16x112xf32, #tpu.memory_space<vmem>>, vector<1x8x7xf32>,
    %152 = vector.extract_strided_slice %62 {offsets = [0, 96], sizes = [8, 7], strides = [1, 1]} : vector<8x128xf32> to vector<8x7xf32>
    %c0_83 = arith.constant 0 : index
    %c0_84 = arith.constant 0 : index
    %c84 = arith.constant 84 : index
    %153 = vector.load %arg4[%c0_83, %c0_84, %c84] : memref<1x16x112xf32, #tpu.memory_space<vmem>>, vector<1x8x7xf32>
    %154 = vector.shape_cast %153 : vector<1x8x7xf32> to vector<8x7xf32>
    %155 = vector.shape_cast %152 : vector<8x7xf32> to vector<1x8x7xf32>
    tpu.vector_store %arg4[%c0_83, %c0_84, %c84], %155 {strides = array<i32>} : memref<1x16x112xf32, #tpu.memory_space<vmem>>, vector<1x8x7xf32>,
    %c0_85 = arith.constant 0 : index
    %c8_86 = arith.constant 8 : index
    %c84_87 = arith.constant 84 : index
    %156 = vector.load %arg4[%c0_85, %c8_86, %c84_87] : memref<1x16x112xf32, #tpu.memory_space<vmem>>, vector<1x8x7xf32>
    %157 = vector.shape_cast %156 : vector<1x8x7xf32> to vector<8x7xf32>
    %158 = vector.shape_cast %67 : vector<8x7xf32> to vector<1x8x7xf32>
    tpu.vector_store %arg4[%c0_85, %c8_86, %c84_87], %158 {strides = array<i32>} : memref<1x16x112xf32, #tpu.memory_space<vmem>>, vector<1x8x7xf32>,
    %159 = vector.extract_strided_slice %62 {offsets = [0, 104], sizes = [8, 7], strides = [1, 1]} : vector<8x128xf32> to vector<8x7xf32>
    %c0_88 = arith.constant 0 : index
    %c0_89 = arith.constant 0 : index
    %c91 = arith.constant 91 : index
    %160 = vector.load %arg4[%c0_88, %c0_89, %c91] : memref<1x16x112xf32, #tpu.memory_space<vmem>>, vector<1x8x7xf32>
    %161 = vector.shape_cast %160 : vector<1x8x7xf32> to vector<8x7xf32>
    %162 = vector.shape_cast %159 : vector<8x7xf32> to vector<1x8x7xf32>
    tpu.vector_store %arg4[%c0_88, %c0_89, %c91], %162 {strides = array<i32>} : memref<1x16x112xf32, #tpu.memory_space<vmem>>, vector<1x8x7xf32>,
    %c0_90 = arith.constant 0 : index
    %c8_91 = arith.constant 8 : index
    %c91_92 = arith.constant 91 : index
    %163 = vector.load %arg4[%c0_90, %c8_91, %c91_92] : memref<1x16x112xf32, #tpu.memory_space<vmem>>, vector<1x8x7xf32>
    %164 = vector.shape_cast %163 : vector<1x8x7xf32> to vector<8x7xf32>
    %165 = vector.shape_cast %67 : vector<8x7xf32> to vector<1x8x7xf32>
    tpu.vector_store %arg4[%c0_90, %c8_91, %c91_92], %165 {strides = array<i32>} : memref<1x16x112xf32, #tpu.memory_space<vmem>>, vector<1x8x7xf32>,
    %166 = vector.extract_strided_slice %62 {offsets = [0, 112], sizes = [8, 7], strides = [1, 1]} : vector<8x128xf32> to vector<8x7xf32>
    %c0_93 = arith.constant 0 : index
    %c0_94 = arith.constant 0 : index
    %c98 = arith.constant 98 : index
    %167 = vector.load %arg4[%c0_93, %c0_94, %c98] : memref<1x16x112xf32, #tpu.memory_space<vmem>>, vector<1x8x7xf32>
    %168 = vector.shape_cast %167 : vector<1x8x7xf32> to vector<8x7xf32>
    %169 = vector.shape_cast %166 : vector<8x7xf32> to vector<1x8x7xf32>
    tpu.vector_store %arg4[%c0_93, %c0_94, %c98], %169 {strides = array<i32>} : memref<1x16x112xf32, #tpu.memory_space<vmem>>, vector<1x8x7xf32>,
    %c0_95 = arith.constant 0 : index
    %c8_96 = arith.constant 8 : index
    %c98_97 = arith.constant 98 : index
    %170 = vector.load %arg4[%c0_95, %c8_96, %c98_97] : memref<1x16x112xf32, #tpu.memory_space<vmem>>, vector<1x8x7xf32>
    %171 = vector.shape_cast %170 : vector<1x8x7xf32> to vector<8x7xf32>
    %172 = vector.shape_cast %67 : vector<8x7xf32> to vector<1x8x7xf32>
    tpu.vector_store %arg4[%c0_95, %c8_96, %c98_97], %172 {strides = array<i32>} : memref<1x16x112xf32, #tpu.memory_space<vmem>>, vector<1x8x7xf32>,
    %173 = vector.extract_strided_slice %62 {offsets = [0, 120], sizes = [8, 7], strides = [1, 1]} : vector<8x128xf32> to vector<8x7xf32>
    %c0_98 = arith.constant 0 : index
    %c0_99 = arith.constant 0 : index
    %c105 = arith.constant 105 : index
    %174 = vector.load %arg4[%c0_98, %c0_99, %c105] : memref<1x16x112xf32, #tpu.memory_space<vmem>>, vector<1x8x7xf32>
    %175 = vector.shape_cast %174 : vector<1x8x7xf32> to vector<8x7xf32>
    %176 = vector.shape_cast %173 : vector<8x7xf32> to vector<1x8x7xf32>
    tpu.vector_store %arg4[%c0_98, %c0_99, %c105], %176 {strides = array<i32>} : memref<1x16x112xf32, #tpu.memory_space<vmem>>, vector<1x8x7xf32>,
    %c0_100 = arith.constant 0 : index
    %c8_101 = arith.constant 8 : index
    %c105_102 = arith.constant 105 : index
    %177 = vector.load %arg4[%c0_100, %c8_101, %c105_102] : memref<1x16x112xf32, #tpu.memory_space<vmem>>, vector<1x8x7xf32>
    %178 = vector.shape_cast %177 : vector<1x8x7xf32> to vector<8x7xf32>
    %179 = vector.shape_cast %67 : vector<8x7xf32> to vector<1x8x7xf32>
    tpu.vector_store %arg4[%c0_100, %c8_101, %c105_102], %179 {strides = array<i32>} : memref<1x16x112xf32, #tpu.memory_space<vmem>>, vector<1x8x7xf32>,
    return
  }
  func.func @transform_0(%arg0: i32) -> (i32, i32, i32) {
    %c0_i32 = arith.constant 0 : i32
    %c0_i32_0 = arith.constant 0 : i32
    %c0_i32_1 = arith.constant 0 : i32
    return %arg0, %c0_i32, %c0_i32_0 : i32, i32, i32
  }
  func.func @transform_1(%arg0: i32) -> (i32, i32, i32) {
    %c0_i32 = arith.constant 0 : i32
    %c0_i32_0 = arith.constant 0 : i32
    %c0_i32_1 = arith.constant 0 : i32
    %c0_i32_2 = arith.constant 0 : i32
    return %c0_i32, %c0_i32_0, %c0_i32_1 : i32, i32, i32
  }
  func.func @transform_2(%arg0: i32) -> (i32, i32) {
    %c0_i32 = arith.constant 0 : i32
    %c0_i32_0 = arith.constant 0 : i32
    %c0_i32_1 = arith.constant 0 : i32
    return %c0_i32, %c0_i32_0 : i32, i32
  }
  func.func @transform_3(%arg0: i32) -> (i32, i32, i32) {
    %c0_i32 = arith.constant 0 : i32
    %c0_i32_0 = arith.constant 0 : i32
    %c0_i32_1 = arith.constant 0 : i32
    return %arg0, %c0_i32, %c0_i32_0 : i32, i32, i32
  }
  func.func @transform_4(%arg0: i32) -> (i32, i32, i32) {
    %c0_i32 = arith.constant 0 : i32
    %c0_i32_0 = arith.constant 0 : i32
    %c0_i32_1 = arith.constant 0 : i32
    return %arg0, %c0_i32, %c0_i32_0 : i32, i32, i32
  }
}

</mosaic_0001>

<llo_original>
// kernel: mspidna_block.1
$region0: #{mspidna_block.1}
  #allocation0 [shape = 'u32[]', space=smem, size = 0x4, offset = 0x4, fixed_abs, tag = 'smem constant byte address 0x4 - core index']
  #allocation1 [shape = 'u32[144,128]{1,0:T(1,128)}', space=vmem, size = 0x12000, scoped, tag = 'internal scratch']
  %s0 = inlined_call_operand.vmem [shape: f32[2,8,256], index: 0, kind: input, shape index: {}]
  %s1 = inlined_call_operand.vmem [shape: f32[3,8,8], index: 1, kind: input, shape index: {}]
  %s2 = inlined_call_operand.vmem [shape: f32[8,1], index: 2, kind: input, shape index: {}]
  %s3 = inlined_call_operand.vmem [shape: f32[2,16,112], index: 3, kind: output, shape index: {0}]
  %s4 = inlined_call_operand.vmem [shape: f32[2,8,1], index: 4, kind: output, shape index: {1}]
  %5 = xla_tuple %s3, %s4
  %s6 = sld [smem:[#allocation0]]
  $region53: #{mspidna_block.1} parent=0
    _
  %s8 = ssub.s32 1, %s6
  %s9 = scalar_select 0, %s8, %s6
  loop: start=0, step=1, limit=4
  $region2: #{mspidna_block.1} parent=0 // loop_pre_header
    _
  $region3: #{mspidna_block.1} parent=0 // loop_header
    %s11 = sphi 0, %s15
    %p12 = scmp.ge.s32.totalorder %s11, 4
    %s21 = sphi 0, %s23
    %s24 = sphi 0, %s21
    %s25 = sphi 0, %s24
    %s41 = sphi 0, %s25
    %s45 = sphi 0, %s45
    %s47 = sphi 0, %s45
    %s48 = sphi 0, %s47
    %s62 = sphi 0, %s48
    %s66 = sphi 0, %s66
    %s68 = sphi 0, %s66
    %s69 = sphi 0, %s68
    %s83 = sphi 0, %s69
    %s89 = sphi 0, %s91
    %s92 = sphi 0, %s89
    %s93 = sphi 0, %s92
    %s109 = sphi 0, %s93
    %s115 = sphi 0, %s117
    %s118 = sphi 0, %s115
    %s119 = sphi 0, %s118
    %s135 = sphi 0, %s119
  $region4: #{mspidna_block.1} parent=0 // loop_header_branch
    %14 = sbr.rel (%p12) target = $region8
  $region5: #{mspidna_block.1} parent=0 // loop_body
    %s16 = ssub.s32 %s11, 1
    %s17 = ssub.s32 %s11, 2
    %s18 = sadd.s32 %s11, 1
    %s19 = ssub.s32 %s11, %s18
    %p20 = scmp.eq.s32.totalorder %s19, 0
    %s22 = sadd.s32 %s21, 1
    %s23 = scalar_select %p20, %s21, %s22
    %p26 = pneg %p20
    %p27 = scmp.eq.s32.totalorder %s11, 1
    %p28 = por %p26, %p27
    %p29 = scmp.ne.s32.totalorder %s21, %s24
    %p30 = scmp.eq.s32.totalorder %s11, 0
    %p31 = por %p29, %p30
    %p32 = scmp.ne.s32.totalorder %s21, %s24
    %p33 = scmp.eq.s32.totalorder %s16, 1
    %p34 = por %p32, %p33
    %p35 = scmp.ne.s32.totalorder %s24, %s25
    %p36 = scmp.eq.s32.totalorder %s16, 0
    %p37 = por %p35, %p36
    %p38 = scmp.ne.s32.totalorder %s24, %s25
    %p39 = scmp.eq.s32.totalorder %s17, 1
    %p40 = por %p38, %p39
    %p42 = scmp.ne.s32.totalorder %s25, %s41
    %p43 = scmp.eq.s32.totalorder %s17, 0
    %p44 = por %p42, %p43
    %s46 = sadd.s32 %s45, 1
    %p49 = scmp.eq.s32.totalorder %s11, 1
    %p50 = scmp.ne.s32.totalorder %s45, %s47
    %p51 = scmp.eq.s32.totalorder %s11, 0
    %p52 = por %p50, %p51
    %p53 = scmp.ne.s32.totalorder %s45, %s47
    %p54 = scmp.eq.s32.totalorder %s16, 1
    %p55 = por %p53, %p54
    %p56 = scmp.ne.s32.totalorder %s47, %s48
    %p57 = scmp.eq.s32.totalorder %s16, 0
    %p58 = por %p56, %p57
    %p59 = scmp.ne.s32.totalorder %s47, %s48
    %p60 = scmp.eq.s32.totalorder %s17, 1
    %p61 = por %p59, %p60
    %p63 = scmp.ne.s32.totalorder %s48, %s62
    %p64 = scmp.eq.s32.totalorder %s17, 0
    %p65 = por %p63, %p64
    %s67 = sadd.s32 %s66, 1
    %p70 = scmp.eq.s32.totalorder %s11, 1
    %p71 = scmp.ne.s32.totalorder %s66, %s68
    %p72 = scmp.eq.s32.totalorder %s11, 0
    %p73 = por %p71, %p72
    %p74 = scmp.ne.s32.totalorder %s66, %s68
    %p75 = scmp.eq.s32.totalorder %s16, 1
    %p76 = por %p74, %p75
    %p77 = scmp.ne.s32.totalorder %s68, %s69
    %p78 = scmp.eq.s32.totalorder %s16, 0
    %p79 = por %p77, %p78
    %p80 = scmp.ne.s32.totalorder %s68, %s69
    %p81 = scmp.eq.s32.totalorder %s17, 1
    %p82 = por %p80, %p81
    %p84 = scmp.ne.s32.totalorder %s69, %s83
    %p85 = scmp.eq.s32.totalorder %s17, 0
    %p86 = por %p84, %p85
    %s87 = ssub.s32 %s11, %s18
    %p88 = scmp.eq.s32.totalorder %s87, 0
    %s90 = sadd.s32 %s89, 1
    %s91 = scalar_select %p88, %s89, %s90
    %p94 = pneg %p88
    %p95 = scmp.eq.s32.totalorder %s11, 1
    %p96 = por %p94, %p95
    %p97 = scmp.ne.s32.totalorder %s89, %s92
    %p98 = scmp.eq.s32.totalorder %s11, 0
    %p99 = por %p97, %p98
    %p100 = scmp.ne.s32.totalorder %s89, %s92
    %p101 = scmp.eq.s32.totalorder %s16, 1
    %p102 = por %p100, %p101
    %p103 = scmp.ne.s32.totalorder %s92, %s93
    %p104 = scmp.eq.s32.totalorder %s16, 0
    %p105 = por %p103, %p104
    %p106 = scmp.ne.s32.totalorder %s92, %s93
    %p107 = scmp.eq.s32.totalorder %s17, 1
    %p108 = por %p106, %p107
    %p110 = scmp.ne.s32.totalorder %s93, %s109
    %p111 = scmp.eq.s32.totalorder %s17, 0
    %p112 = por %p110, %p111
    %s113 = ssub.s32 %s11, %s18
    %p114 = scmp.eq.s32.totalorder %s113, 0
    %s116 = sadd.s32 %s115, 1
    %s117 = scalar_select %p114, %s115, %s116
    %p120 = pneg %p114
    %p121 = scmp.eq.s32.totalorder %s11, 1
    %p122 = por %p120, %p121
    %p123 = scmp.ne.s32.totalorder %s115, %s118
    %p124 = scmp.eq.s32.totalorder %s11, 0
    %p125 = por %p123, %p124
    %p126 = scmp.ne.s32.totalorder %s115, %s118
    %p127 = scmp.eq.s32.totalorder %s16, 1
    %p128 = por %p126, %p127
    %p129 = scmp.ne.s32.totalorder %s118, %s119
    %p130 = scmp.eq.s32.totalorder %s16, 0
    %p131 = por %p129, %p130
    %p132 = scmp.ne.s32.totalorder %s118, %s119
    %p133 = scmp.eq.s32.totalorder %s17, 1
    %p134 = por %p132, %p133
    %p136 = scmp.ne.s32.totalorder %s119, %s135
    %p137 = scmp.eq.s32.totalorder %s17, 0
    %p138 = por %p136, %p137
    %p139 = scmp.le.s32.totalorder 1, %s11
    %p140 = scmp.lt.s32.totalorder %s11, 3
    %p141 = pnand %p139, %p140
    %p142 = pneg %p141
    // Predicated region
    $region9: #{mspidna_block.1} parent=5 // pred_check
      _
    $region10: #{mspidna_block.1} parent=5 // pred_check_branch
      %144 = sbr.rel (%p141) target = $region12
    $region11: #{mspidna_block.1} parent=5 // pred_region
      %s145 = ssub.s32 %s11, 1
      // Predicated region
      $region13: #{mspidna_block.1} parent=11 // pred_check
        %p146 = pneg %p58
      $region14: #{mspidna_block.1} parent=11 // pred_check_branch
        %148 = sbr.rel (%p146) target = $region16
      $region15: #{mspidna_block.1} parent=11 // pred_region
        _
      $region16: #{mspidna_block.1} parent=11 // pred_fallthru
        _
      // Predicated region
      $region17: #{mspidna_block.1} parent=11 // pred_check
        %p149 = pneg %p79
      $region18: #{mspidna_block.1} parent=11 // pred_check_branch
        %151 = sbr.rel (%p149) target = $region20
      $region19: #{mspidna_block.1} parent=11 // pred_region
        _
      $region20: #{mspidna_block.1} parent=11 // pred_fallthru
        _
    $region12: #{mspidna_block.1} parent=5 // pred_fallthru
      _
    %p152 = scmp.lt.s32.totalorder %s11, 2
    // Predicated region
    $region21: #{mspidna_block.1} parent=5 // pred_check
      %p153 = pneg %p152
    $region22: #{mspidna_block.1} parent=5 // pred_check_branch
      %155 = sbr.rel (%p153) target = $region24
    $region23: #{mspidna_block.1} parent=5 // pred_region
      // Predicated region
      $region25: #{mspidna_block.1} parent=23 // pred_check
        %p156 = pneg %p31
      $region26: #{mspidna_block.1} parent=23 // pred_check_branch
        %158 = sbr.rel (%p156) target = $region28
      $region27: #{mspidna_block.1} parent=23 // pred_region
        %p159 = scmp.lt.s32.totalorder %s11, 1
        %s160 = scalar_select %p159, %s11, 1
        %s161 = smul.addr %s160, 2
        %s162 = smul.addr %s161, 8
        %s163 = scalar_lea.vmem %s0, %s162
      $region28: #{mspidna_block.1} parent=23 // pred_fallthru
        _
    $region24: #{mspidna_block.1} parent=5 // pred_fallthru
      _
    %p164 = scmp.le.s32.totalorder 1, %s11
    %p165 = scmp.lt.s32.totalorder %s11, 3
    %p166 = pnand %p164, %p165
    %p167 = pneg %p166
    // Predicated region
    $region29: #{mspidna_block.1} parent=5 // pred_check
      _
    $region30: #{mspidna_block.1} parent=5 // pred_check_branch
      %169 = sbr.rel (%p166) target = $region32
    $region31: #{mspidna_block.1} parent=5 // pred_region
      %s170 = ssub.s32 %s11, 1
      %p171 = scmp.lt.s32.totalorder %s16, 1
      %s172 = scalar_select %p171, %s16, 1
      %s173 = smul.addr %s172, 2
      %s174 = smul.addr %s173, 8
      %s175 = scalar_lea.vmem %s0, %s174
      %p176 = pneg %p37
      %p177 = pneg %p34
      %p178 = pneg %p58
      %p179 = pneg %p55
      %p180 = pneg %p79
      %p181 = pneg %p76
      %p182 = pneg %p105
      %p183 = pneg %p102
      %p184 = scmp.lt.s32.totalorder %s16, 1
      %s185 = scalar_select %p184, %s16, 1
      %s186 = smul.addr %s185, 2
      %s187 = smul.addr %s186, 8
      %s188 = scalar_lea.vmem %s3, %s187
      %p189 = pneg %p131
      %p190 = pneg %p128
      %p191 = scmp.lt.s32.totalorder %s16, 1
      %s192 = scalar_select %p191, %s16, 1
      %s193 = smul.addr %s192, 8
      %s194 = scalar_lea.vmem %s4, %s193
      %p195 = scmp.lt.s32.totalorder %s16, 1
      %s196 = scalar_select %p195, %s16, 1
      %s197 = smul.addr %s196, 2
      %s198 = smul.addr %s197, 8
      %s199 = scalar_lea.vmem %s0, %s198
      %p200 = scmp.lt.s32.totalorder %s16, 1
      %s201 = scalar_select %p200, %s16, 1
      %s202 = smul.addr %s201, 2
      %s203 = smul.addr %s202, 8
      %s204 = scalar_lea.vmem %s3, %s203
      %p205 = scmp.lt.s32.totalorder %s16, 1
      %s206 = scalar_select %p205, %s16, 1
      %s207 = smul.addr %s206, 8
      %s208 = scalar_lea.vmem %s4, %s207
      %v209 = vld [vmem:[%s2] sm:$0xff]
      %v210 = vld [vmem:[%s1] sm:$0xff]
      %s211 = scalar_lea.vmem %s1, 8
      %v212 = vld [vmem:[%s211] sm:$0xff]
      %s213 = scalar_lea.vmem %s1, 16
      %v214 = vld [vmem:[%s213] sm:$0xff]
      %v215 = vld [vmem:[%s199] sm:$0xff]
      %v216 = vld [vmem:[%s199 + $0x8] sm:$0xff]
      %217 = vrot.lane.b32.xlu0 %v215, 127
      %v218 = vpop.permute.xlu0 %217
      %219 = vrot.lane.b32.xlu0 %v216, 127
      %v220 = vpop.permute.xlu0 %219
      %v221 = vlaneseq
      %v222 = vand.u32 %v221, 127
      %vm223 = vcmp.lt.s32.totalorder %v222, 127
      %v224 = vsel %vm223, %v218, %v220
      %v225 = vsel %vm223, %v220, %v218
      %vm226 = vcmask 64512
      %v228 = vsel %vm226, %v212, 0
      %230 = vmatprep.subr.mxu0 %v225
      %231 = vmatpush1.msra.mxu0 %v224
      %232 = vmatprep.subr.mxu0 0.0
      %233 = vmatpush1.msra.mxu0 0.0
      %234 = vmatprep.subr.mxu0 0.0
      %235 = vmatpush1.msra.mxu0 0.0
      %236 = vmatprep.subr.mxu0 0.0
      %237 = vmatpush1.msra.mxu0 0.0
      %238 = vmatprep.subr.mxu0 0.0
      %239 = vmatpush1.msra.mxu0 0.0
      %240 = vmatprep.subr.mxu0 0.0
      %241 = vmatpush1.msra.mxu0 0.0
      %242 = vmatprep.subr.mxu0 0.0
      %243 = vmatpush1.msra.mxu0 0.0
      %244 = vmatprep.subr.mxu0 0.0
      %245 = vmatpush1.msra.mxu0 0.0
      %246 = vmatprep.subr.mxu0 0.0
      %247 = vmatpush1.msra.mxu0 0.0
      %248 = vmatprep.subr.mxu0 0.0
      %249 = vmatpush1.msra.mxu0 0.0
      %250 = vmatprep.subr.mxu0 0.0
      %251 = vmatpush1.msra.mxu0 0.0
      %252 = vmatprep.subr.mxu0 0.0
      %253 = vmatpush1.msra.mxu0 0.0
      %254 = vmatprep.subr.mxu0 0.0
      %255 = vmatpush1.msra.mxu0 0.0
      %256 = vmatprep.subr.mxu0 0.0
      %257 = vmatpush1.msra.mxu0 0.0
      %258 = vmatprep.subr.mxu0 0.0
      %259 = vmatpush1.msra.mxu0 0.0
      %260 = vmatprep.subr.mxu0 0.0
      %261 = vmatpush1.msra.mxu0 0.0
      %262 = vmatprep.subr.mxu0 0.0
      %263 = vmatpush1.msra.mxu0 0.0
      %264 = vmatprep.subr.mxu0 0.0
      %265 = vmatpush1.msra.mxu0 0.0
      %266 = vmatprep.subr.mxu0 0.0
      %267 = vmatpush1.msra.mxu0 0.0
      %268 = vmatprep.subr.mxu0 0.0
      %269 = vmatpush1.msra.mxu0 0.0
      %270 = vmatprep.subr.mxu0 0.0
      %271 = vmatpush1.msra.mxu0 0.0
      %272 = vmatprep.subr.mxu0 0.0
      %273 = vmatpush1.msra.mxu0 0.0
      %274 = vmatprep.subr.mxu0 0.0
      %275 = vmatpush1.msra.mxu0 0.0
      %276 = vmatprep.subr.mxu0 0.0
      %277 = vmatpush1.msra.mxu0 0.0
      %278 = vmatprep.subr.mxu0 0.0
      %279 = vmatpush1.msra.mxu0 0.0
      %280 = vmatprep.subr.mxu0 0.0
      %281 = vmatpush1.msra.mxu0 0.0
      %282 = vmatprep.subr.mxu0 0.0
      %283 = vmatpush1.msra.mxu0 0.0
      %284 = vmatprep.subr.mxu0 0.0
      %285 = vmatpush1.msra.mxu0 0.0
      %286 = vmatprep.subr.mxu0 0.0
      %287 = vmatpush1.msra.mxu0 0.0
      %288 = vmatprep.subr.mxu0 0.0
      %289 = vmatpush1.msra.mxu0 0.0
      %290 = vmatprep.subr.mxu0 0.0
      %291 = vmatpush1.msra.mxu0 0.0
      %292 = vmatprep.subr.mxu0 0.0
      %293 = vmatpush1.msra.mxu0 0.0
      %294 = vmatprep.mubr.f32.mxu0 0.0
      %295 = vmatmul.mubr.f32.gmra.mrb[0].mxu0 %v228
      %v296 = vpop.f32.mrb[0].mxu0
      %v297 = vadd.f32 0.0, %v296
      %v298 = vpop.f32.mrb[0].mxu0
      %v299 = vadd.f32 0.0, %v298
      %300 = vdwg.mxu0
      %v302 = vsel %vm226, %v210, 0
      %304 = vmatprep.subr.mxu0 %v216
      %305 = vmatpush1.msra.mxu0 %v215
      %306 = vmatprep.subr.mxu0 0.0
      %307 = vmatpush1.msra.mxu0 0.0
      %308 = vmatprep.subr.mxu0 0.0
      %309 = vmatpush1.msra.mxu0 0.0
      %310 = vmatprep.subr.mxu0 0.0
      %311 = vmatpush1.msra.mxu0 0.0
      %312 = vmatprep.subr.mxu0 0.0
      %313 = vmatpush1.msra.mxu0 0.0
      %314 = vmatprep.subr.mxu0 0.0
      %315 = vmatpush1.msra.mxu0 0.0
      %316 = vmatprep.subr.mxu0 0.0
      %317 = vmatpush1.msra.mxu0 0.0
      %318 = vmatprep.subr.mxu0 0.0
      %319 = vmatpush1.msra.mxu0 0.0
      %320 = vmatprep.subr.mxu0 0.0
      %321 = vmatpush1.msra.mxu0 0.0
      %322 = vmatprep.subr.mxu0 0.0
      %323 = vmatpush1.msra.mxu0 0.0
      %324 = vmatprep.subr.mxu0 0.0
      %325 = vmatpush1.msra.mxu0 0.0
      %326 = vmatprep.subr.mxu0 0.0
      %327 = vmatpush1.msra.mxu0 0.0
      %328 = vmatprep.subr.mxu0 0.0
      %329 = vmatpush1.msra.mxu0 0.0
      %330 = vmatprep.subr.mxu0 0.0
      %331 = vmatpush1.msra.mxu0 0.0
      %332 = vmatprep.subr.mxu0 0.0
      %333 = vmatpush1.msra.mxu0 0.0
      %334 = vmatprep.subr.mxu0 0.0
      %335 = vmatpush1.msra.mxu0 0.0
      %336 = vmatprep.subr.mxu0 0.0
      %337 = vmatpush1.msra.mxu0 0.0
      %338 = vmatprep.subr.mxu0 0.0
      %339 = vmatpush1.msra.mxu0 0.0
      %340 = vmatprep.subr.mxu0 0.0
      %341 = vmatpush1.msra.mxu0 0.0
      %342 = vmatprep.subr.mxu0 0.0
      %343 = vmatpush1.msra.mxu0 0.0
      %344 = vmatprep.subr.mxu0 0.0
      %345 = vmatpush1.msra.mxu0 0.0
      %346 = vmatprep.subr.mxu0 0.0
      %347 = vmatpush1.msra.mxu0 0.0
      %348 = vmatprep.subr.mxu0 0.0
      %349 = vmatpush1.msra.mxu0 0.0
      %350 = vmatprep.subr.mxu0 0.0
      %351 = vmatpush1.msra.mxu0 0.0
      %352 = vmatprep.subr.mxu0 0.0
      %353 = vmatpush1.msra.mxu0 0.0
      %354 = vmatprep.subr.mxu0 0.0
      %355 = vmatpush1.msra.mxu0 0.0
      %356 = vmatprep.subr.mxu0 0.0
      %357 = vmatpush1.msra.mxu0 0.0
      %358 = vmatprep.subr.mxu0 0.0
      %359 = vmatpush1.msra.mxu0 0.0
      %360 = vmatprep.subr.mxu0 0.0
      %361 = vmatpush1.msra.mxu0 0.0
      %362 = vmatprep.subr.mxu0 0.0
      %363 = vmatpush1.msra.mxu0 0.0
      %364 = vmatprep.subr.mxu0 0.0
      %365 = vmatpush1.msra.mxu0 0.0
      %366 = vmatprep.subr.mxu0 0.0
      %367 = vmatpush1.msra.mxu0 0.0
      %368 = vmatprep.mubr.f32.mxu0 0.0
      %369 = vmatmul.mubr.f32.gmra.mrb[0].mxu0 %v302
      %v370 = vpop.f32.mrb[0].mxu0
      %v371 = vadd.f32 %v297, %v370
      %v372 = vpop.f32.mrb[0].mxu0
      %v373 = vadd.f32 %v299, %v372
      %374 = vdwg.mxu0
      %375 = vrot.lane.b32.xlu0 %v215, 126
      %v376 = vpop.permute.xlu0 %375
      %377 = vrot.lane.b32.xlu0 %v216, 126
      %v378 = vpop.permute.xlu0 %377
      %vm379 = vcmp.lt.s32.totalorder %v222, 126
      %v380 = vsel %vm379, %v376, %v378
      %v381 = vsel %vm379, %v378, %v376
      %v383 = vsel %vm226, %v214, 0
      %385 = vmatprep.subr.mxu0 %v381
      %386 = vmatpush1.msra.mxu0 %v380
      %387 = vmatprep.subr.mxu0 0.0
      %388 = vmatpush1.msra.mxu0 0.0
      %389 = vmatprep.subr.mxu0 0.0
      %390 = vmatpush1.msra.mxu0 0.0
      %391 = vmatprep.subr.mxu0 0.0
      %392 = vmatpush1.msra.mxu0 0.0
      %393 = vmatprep.subr.mxu0 0.0
      %394 = vmatpush1.msra.mxu0 0.0
      %395 = vmatprep.subr.mxu0 0.0
      %396 = vmatpush1.msra.mxu0 0.0
      %397 = vmatprep.subr.mxu0 0.0
      %398 = vmatpush1.msra.mxu0 0.0
      %399 = vmatprep.subr.mxu0 0.0
      %400 = vmatpush1.msra.mxu0 0.0
      %401 = vmatprep.subr.mxu0 0.0
      %402 = vmatpush1.msra.mxu0 0.0
      %403 = vmatprep.subr.mxu0 0.0
      %404 = vmatpush1.msra.mxu0 0.0
      %405 = vmatprep.subr.mxu0 0.0
      %406 = vmatpush1.msra.mxu0 0.0
      %407 = vmatprep.subr.mxu0 0.0
      %408 = vmatpush1.msra.mxu0 0.0
      %409 = vmatprep.subr.mxu0 0.0
      %410 = vmatpush1.msra.mxu0 0.0
      %411 = vmatprep.subr.mxu0 0.0
      %412 = vmatpush1.msra.mxu0 0.0
      %413 = vmatprep.subr.mxu0 0.0
      %414 = vmatpush1.msra.mxu0 0.0
      %415 = vmatprep.subr.mxu0 0.0
      %416 = vmatpush1.msra.mxu0 0.0
      %417 = vmatprep.subr.mxu0 0.0
      %418 = vmatpush1.msra.mxu0 0.0
      %419 = vmatprep.subr.mxu0 0.0
      %420 = vmatpush1.msra.mxu0 0.0
      %421 = vmatprep.subr.mxu0 0.0
      %422 = vmatpush1.msra.mxu0 0.0
      %423 = vmatprep.subr.mxu0 0.0
      %424 = vmatpush1.msra.mxu0 0.0
      %425 = vmatprep.subr.mxu0 0.0
      %426 = vmatpush1.msra.mxu0 0.0
      %427 = vmatprep.subr.mxu0 0.0
      %428 = vmatpush1.msra.mxu0 0.0
      %429 = vmatprep.subr.mxu0 0.0
      %430 = vmatpush1.msra.mxu0 0.0
      %431 = vmatprep.subr.mxu0 0.0
      %432 = vmatpush1.msra.mxu0 0.0
      %433 = vmatprep.subr.mxu0 0.0
      %434 = vmatpush1.msra.mxu0 0.0
      %435 = vmatprep.subr.mxu0 0.0
      %436 = vmatpush1.msra.mxu0 0.0
      %437 = vmatprep.subr.mxu0 0.0
      %438 = vmatpush1.msra.mxu0 0.0
      %439 = vmatprep.subr.mxu0 0.0
      %440 = vmatpush1.msra.mxu0 0.0
      %441 = vmatprep.subr.mxu0 0.0
      %442 = vmatpush1.msra.mxu0 0.0
      %443 = vmatprep.subr.mxu0 0.0
      %444 = vmatpush1.msra.mxu0 0.0
      %445 = vmatprep.subr.mxu0 0.0
      %446 = vmatpush1.msra.mxu0 0.0
      %447 = vmatprep.subr.mxu0 0.0
      %448 = vmatpush1.msra.mxu0 0.0
      %449 = vmatprep.mubr.f32.mxu0 0.0
      %450 = vmatmul.mubr.f32.gmra.mrb[0].mxu0 %v383
      %v451 = vpop.f32.mrb[0].mxu0
      %v452 = vadd.f32 0.0, %v451
      %v453 = vpop.f32.mrb[0].mxu0
      %v454 = vadd.f32 0.0, %v453
      %455 = vdwg.mxu0
      %v456 = vadd.f32 %v371, %v452
      %v457 = vadd.f32 %v373, %v454
      %459 = vset.pattern.permute.xlu0 0
      %460 = vperm.xlu0 %459, %v209
      %v461 = vpop.permute.xlu0 %460
      %v463 = vadd.f32 %v456, %v461
      %v464 = vadd.f32 %v457, %v461
      %466 = vrot.lane.b32.xlu0 %v463, 112
      %v467 = vpop.permute.xlu0 %466
      %v469 = vadd.f32 %v463, %v467
      %470 = vrot.lane.b32.xlu0 %v463, 96
      %v471 = vpop.permute.xlu0 %470
      %v473 = vadd.f32 %v469, %v471
      %474 = vrot.lane.b32.xlu0 %v463, 80
      %v475 = vpop.permute.xlu0 %474
      %v477 = vadd.f32 %v473, %v475
      %478 = vrot.lane.b32.xlu0 %v463, 64
      %v479 = vpop.permute.xlu0 %478
      %v481 = vadd.f32 %v477, %v479
      %482 = vrot.lane.b32.xlu0 %v463, 48
      %v483 = vpop.permute.xlu0 %482
      %v485 = vadd.f32 %v481, %v483
      %486 = vrot.lane.b32.xlu0 %v463, 32
      %v487 = vpop.permute.xlu0 %486
      %v489 = vadd.f32 %v485, %v487
      %490 = vrot.lane.b32.xlu0 %v463, 16
      %v491 = vpop.permute.xlu0 %490
      %v493 = vadd.f32 %v489, %v491
      %v494 = vadd.f32 %v493, %v464
      %496 = vrot.lane.b32.xlu0 %v464, 112
      %v497 = vpop.permute.xlu0 %496
      %v499 = vadd.f32 %v494, %v497
      %500 = vrot.lane.b32.xlu0 %v464, 96
      %v501 = vpop.permute.xlu0 %500
      %v503 = vadd.f32 %v499, %v501
      %504 = vrot.lane.b32.xlu0 %v464, 80
      %v505 = vpop.permute.xlu0 %504
      %v507 = vadd.f32 %v503, %v505
      %508 = vrot.lane.b32.xlu0 %v464, 64
      %v509 = vpop.permute.xlu0 %508
      %v511 = vadd.f32 %v507, %v509
      %512 = vrot.lane.b32.xlu0 %v464, 48
      %v513 = vpop.permute.xlu0 %512
      %v515 = vadd.f32 %v511, %v513
      %516 = vrot.lane.b32.xlu0 %v464, 32
      %v517 = vpop.permute.xlu0 %516
      %v519 = vadd.f32 %v515, %v517
      %520 = vrot.lane.b32.xlu0 %v464, 16
      %v521 = vpop.permute.xlu0 %520
      %v523 = vadd.f32 %v519, %v521
      %v524 = vmul.f32 %v523, 0.0625
      %vm525 = vcmask 113664
      %v526 = vsel %vm525, %v524, 0.0
      %527 = vadd.xlane.f32.xlu0 %v526
      %v528 = vpop.xlane.xlu0 %527
      %v529 = vmul.f32 %v528, 0.071428575
      %vm530 = vcmask 7168
      %531 = vst.msk [vmem:[%s208] sm:$0xff] %vm530, %v529
      %532 = vrot.lane.b32.xlu0 %v463, 126
      %v533 = vpop.permute.xlu0 %532
      %535 = vrot.lane.b32.xlu0 %v463, 124
      %v536 = vpop.permute.xlu0 %535
      %538 = vrot.lane.b32.xlu0 %v463, 122
      %v539 = vpop.permute.xlu0 %538
      %541 = vrot.lane.b32.xlu0 %v463, 120
      %v542 = vpop.permute.xlu0 %541
      %544 = vrot.lane.b32.xlu0 %v463, 118
      %v545 = vpop.permute.xlu0 %544
      %547 = vrot.lane.b32.xlu0 %v463, 116
      %v548 = vpop.permute.xlu0 %547
      %550 = vrot.lane.b32.xlu0 %v463, 114
      %v551 = vpop.permute.xlu0 %550
      %553 = vrot.lane.b32.xlu0 %v463, 110
      %v554 = vpop.permute.xlu0 %553
      %556 = vrot.lane.b32.xlu0 %v463, 108
      %v557 = vpop.permute.xlu0 %556
      %559 = vrot.lane.b32.xlu0 %v463, 106
      %v560 = vpop.permute.xlu0 %559
      %562 = vrot.lane.b32.xlu0 %v463, 104
      %v563 = vpop.permute.xlu0 %562
      %565 = vrot.lane.b32.xlu0 %v463, 102
      %v566 = vpop.permute.xlu0 %565
      %568 = vrot.lane.b32.xlu0 %v463, 100
      %v569 = vpop.permute.xlu0 %568
      %571 = vrot.lane.b32.xlu0 %v463, 98
      %v572 = vpop.permute.xlu0 %571
      %574 = vrot.lane.b32.xlu0 %v463, 94
      %v575 = vpop.permute.xlu0 %574
      %577 = vrot.lane.b32.xlu0 %v463, 92
      %v578 = vpop.permute.xlu0 %577
      %580 = vrot.lane.b32.xlu0 %v463, 90
      %v581 = vpop.permute.xlu0 %580
      %583 = vrot.lane.b32.xlu0 %v463, 88
      %v584 = vpop.permute.xlu0 %583
      %586 = vrot.lane.b32.xlu0 %v463, 86
      %v587 = vpop.permute.xlu0 %586
      %589 = vrot.lane.b32.xlu0 %v463, 84
      %v590 = vpop.permute.xlu0 %589
      %592 = vrot.lane.b32.xlu0 %v463, 82
      %v593 = vpop.permute.xlu0 %592
      %595 = vrot.lane.b32.xlu0 %v463, 78
      %v596 = vpop.permute.xlu0 %595
      %598 = vrot.lane.b32.xlu0 %v463, 76
      %v599 = vpop.permute.xlu0 %598
      %601 = vrot.lane.b32.xlu0 %v463, 74
      %v602 = vpop.permute.xlu0 %601
      %604 = vrot.lane.b32.xlu0 %v463, 72
      %v605 = vpop.permute.xlu0 %604
      %607 = vrot.lane.b32.xlu0 %v463, 70
      %v608 = vpop.permute.xlu0 %607
      %610 = vrot.lane.b32.xlu0 %v463, 68
      %v611 = vpop.permute.xlu0 %610
      %613 = vrot.lane.b32.xlu0 %v463, 66
      %v614 = vpop.permute.xlu0 %613
      %616 = vrot.lane.b32.xlu0 %v463, 62
      %v617 = vpop.permute.xlu0 %616
      %619 = vrot.lane.b32.xlu0 %v463, 60
      %v620 = vpop.permute.xlu0 %619
      %622 = vrot.lane.b32.xlu0 %v463, 58
      %v623 = vpop.permute.xlu0 %622
      %625 = vrot.lane.b32.xlu0 %v463, 56
      %v626 = vpop.permute.xlu0 %625
      %628 = vrot.lane.b32.xlu0 %v463, 54
      %v629 = vpop.permute.xlu0 %628
      %631 = vrot.lane.b32.xlu0 %v463, 52
      %v632 = vpop.permute.xlu0 %631
      %634 = vrot.lane.b32.xlu0 %v463, 50
      %v635 = vpop.permute.xlu0 %634
      %637 = vrot.lane.b32.xlu0 %v463, 46
      %v638 = vpop.permute.xlu0 %637
      %640 = vrot.lane.b32.xlu0 %v463, 44
      %v641 = vpop.permute.xlu0 %640
      %643 = vrot.lane.b32.xlu0 %v463, 42
      %v644 = vpop.permute.xlu0 %643
      %646 = vrot.lane.b32.xlu0 %v463, 40
      %v647 = vpop.permute.xlu0 %646
      %649 = vrot.lane.b32.xlu0 %v463, 38
      %v650 = vpop.permute.xlu0 %649
      %652 = vrot.lane.b32.xlu0 %v463, 36
      %v653 = vpop.permute.xlu0 %652
      %655 = vrot.lane.b32.xlu0 %v463, 34
      %v656 = vpop.permute.xlu0 %655
      %658 = vrot.lane.b32.xlu0 %v463, 30
      %v659 = vpop.permute.xlu0 %658
      %661 = vrot.lane.b32.xlu0 %v463, 28
      %v662 = vpop.permute.xlu0 %661
      %664 = vrot.lane.b32.xlu0 %v463, 26
      %v665 = vpop.permute.xlu0 %664
      %667 = vrot.lane.b32.xlu0 %v463, 24
      %v668 = vpop.permute.xlu0 %667
      %670 = vrot.lane.b32.xlu0 %v463, 22
      %v671 = vpop.permute.xlu0 %670
      %673 = vrot.lane.b32.xlu0 %v463, 20
      %v674 = vpop.permute.xlu0 %673
      %676 = vrot.lane.b32.xlu0 %v463, 18
      %v677 = vpop.permute.xlu0 %676
      %679 = vrot.lane.b32.xlu0 %v463, 14
      %v680 = vpop.permute.xlu0 %679
      %682 = vrot.lane.b32.xlu0 %v463, 12
      %v683 = vpop.permute.xlu0 %682
      %685 = vrot.lane.b32.xlu0 %v463, 10
      %v686 = vpop.permute.xlu0 %685
      %688 = vrot.lane.b32.xlu0 %v463, 8
      %v689 = vpop.permute.xlu0 %688
      %691 = vrot.lane.b32.xlu0 %v463, 6
      %v692 = vpop.permute.xlu0 %691
      %694 = vrot.lane.b32.xlu0 %v463, 4
      %v695 = vpop.permute.xlu0 %694
      %697 = vrot.lane.b32.xlu0 %v463, 2
      %v698 = vpop.permute.xlu0 %697
      %700 = vrot.lane.b32.xlu0 %v464, 126
      %v701 = vpop.permute.xlu0 %700
      %703 = vrot.lane.b32.xlu0 %v464, 124
      %v704 = vpop.permute.xlu0 %703
      %706 = vrot.lane.b32.xlu0 %v464, 122
      %v707 = vpop.permute.xlu0 %706
      %709 = vrot.lane.b32.xlu0 %v464, 120
      %v710 = vpop.permute.xlu0 %709
      %712 = vrot.lane.b32.xlu0 %v464, 118
      %v713 = vpop.permute.xlu0 %712
      %715 = vrot.lane.b32.xlu0 %v464, 116
      %v716 = vpop.permute.xlu0 %715
      %718 = vrot.lane.b32.xlu0 %v464, 114
      %v719 = vpop.permute.xlu0 %718
      %721 = vrot.lane.b32.xlu0 %v464, 110
      %v722 = vpop.permute.xlu0 %721
      %724 = vrot.lane.b32.xlu0 %v464, 108
      %v725 = vpop.permute.xlu0 %724
      %727 = vrot.lane.b32.xlu0 %v464, 106
      %v728 = vpop.permute.xlu0 %727
      %730 = vrot.lane.b32.xlu0 %v464, 104
      %v731 = vpop.permute.xlu0 %730
      %733 = vrot.lane.b32.xlu0 %v464, 102
      %v734 = vpop.permute.xlu0 %733
      %736 = vrot.lane.b32.xlu0 %v464, 100
      %v737 = vpop.permute.xlu0 %736
      %739 = vrot.lane.b32.xlu0 %v464, 98
      %v740 = vpop.permute.xlu0 %739
      %742 = vrot.lane.b32.xlu0 %v464, 94
      %v743 = vpop.permute.xlu0 %742
      %745 = vrot.lane.b32.xlu0 %v464, 92
      %v746 = vpop.permute.xlu0 %745
      %748 = vrot.lane.b32.xlu0 %v464, 90
      %v749 = vpop.permute.xlu0 %748
      %751 = vrot.lane.b32.xlu0 %v464, 88
      %v752 = vpop.permute.xlu0 %751
      %754 = vrot.lane.b32.xlu0 %v464, 86
      %v755 = vpop.permute.xlu0 %754
      %757 = vrot.lane.b32.xlu0 %v464, 84
      %v758 = vpop.permute.xlu0 %757
      %760 = vrot.lane.b32.xlu0 %v464, 82
      %v761 = vpop.permute.xlu0 %760
      %763 = vrot.lane.b32.xlu0 %v464, 78
      %v764 = vpop.permute.xlu0 %763
      %766 = vrot.lane.b32.xlu0 %v464, 76
      %v767 = vpop.permute.xlu0 %766
      %769 = vrot.lane.b32.xlu0 %v464, 74
      %v770 = vpop.permute.xlu0 %769
      %772 = vrot.lane.b32.xlu0 %v464, 72
      %v773 = vpop.permute.xlu0 %772
      %775 = vrot.lane.b32.xlu0 %v464, 70
      %v776 = vpop.permute.xlu0 %775
      %778 = vrot.lane.b32.xlu0 %v464, 68
      %v779 = vpop.permute.xlu0 %778
      %781 = vrot.lane.b32.xlu0 %v464, 66
      %v782 = vpop.permute.xlu0 %781
      %784 = vrot.lane.b32.xlu0 %v464, 62
      %v785 = vpop.permute.xlu0 %784
      %787 = vrot.lane.b32.xlu0 %v464, 60
      %v788 = vpop.permute.xlu0 %787
      %790 = vrot.lane.b32.xlu0 %v464, 58
      %v791 = vpop.permute.xlu0 %790
      %793 = vrot.lane.b32.xlu0 %v464, 56
      %v794 = vpop.permute.xlu0 %793
      %796 = vrot.lane.b32.xlu0 %v464, 54
      %v797 = vpop.permute.xlu0 %796
      %799 = vrot.lane.b32.xlu0 %v464, 52
      %v800 = vpop.permute.xlu0 %799
      %802 = vrot.lane.b32.xlu0 %v464, 50
      %v803 = vpop.permute.xlu0 %802
      %805 = vrot.lane.b32.xlu0 %v464, 46
      %v806 = vpop.permute.xlu0 %805
      %808 = vrot.lane.b32.xlu0 %v464, 44
      %v809 = vpop.permute.xlu0 %808
      %811 = vrot.lane.b32.xlu0 %v464, 42
      %v812 = vpop.permute.xlu0 %811
      %814 = vrot.lane.b32.xlu0 %v464, 40
      %v815 = vpop.permute.xlu0 %814
      %817 = vrot.lane.b32.xlu0 %v464, 38
      %v818 = vpop.permute.xlu0 %817
      %820 = vrot.lane.b32.xlu0 %v464, 36
      %v821 = vpop.permute.xlu0 %820
      %823 = vrot.lane.b32.xlu0 %v464, 34
      %v824 = vpop.permute.xlu0 %823
      %826 = vrot.lane.b32.xlu0 %v464, 30
      %v827 = vpop.permute.xlu0 %826
      %829 = vrot.lane.b32.xlu0 %v464, 28
      %v830 = vpop.permute.xlu0 %829
      %832 = vrot.lane.b32.xlu0 %v464, 26
      %v833 = vpop.permute.xlu0 %832
      %835 = vrot.lane.b32.xlu0 %v464, 24
      %v836 = vpop.permute.xlu0 %835
      %838 = vrot.lane.b32.xlu0 %v464, 22
      %v839 = vpop.permute.xlu0 %838
      %841 = vrot.lane.b32.xlu0 %v464, 20
      %v842 = vpop.permute.xlu0 %841
      %844 = vrot.lane.b32.xlu0 %v464, 18
      %v845 = vpop.permute.xlu0 %844
      %847 = vrot.lane.b32.xlu0 %v464, 14
      %v848 = vpop.permute.xlu0 %847
      %850 = vrot.lane.b32.xlu0 %v464, 12
      %v851 = vpop.permute.xlu0 %850
      %853 = vrot.lane.b32.xlu0 %v464, 10
      %v854 = vpop.permute.xlu0 %853
      %856 = vrot.lane.b32.xlu0 %v464, 8
      %v857 = vpop.permute.xlu0 %856
      %859 = vrot.lane.b32.xlu0 %v464, 6
      %v860 = vpop.permute.xlu0 %859
      %862 = vrot.lane.b32.xlu0 %v464, 4
      %v863 = vpop.permute.xlu0 %862
      %865 = vrot.lane.b32.xlu0 %v464, 2
      %v866 = vpop.permute.xlu0 %865
      %v868 = vcombine.low %v463, %v536
      %v869 = vcombine.high %v463, %v536
      %v871 = vunpack.c.l.s4 1983009808
      %v872 = vunpack.c.0.s8 %v871
      %v873 = vlaneseq
      %v874 = vshrl.u32 %v873, 7
      %v875 = vsub.s32 %v872, %v874
      %v876 = vrot.slane %v868, %v875
      %v878 = vunpack.c.l.s4 1983009808
      %v879 = vunpack.c.0.s8 %v878
      %v880 = vlaneseq
      %v881 = vshrl.u32 %v880, 7
      %v882 = vsub.s32 %v879, %v881
      %v883 = vrot.slane %v869, %v882
      %v884 = vcombine.low %v533, %v539
      %v885 = vcombine.high %v533, %v539
      %v887 = vunpack.c.l.s4 1983009808
      %v888 = vunpack.c.0.s8 %v887
      %v889 = vlaneseq
      %v890 = vshrl.u32 %v889, 7
      %v891 = vsub.s32 %v888, %v890
      %v892 = vrot.slane %v884, %v891
      %v894 = vunpack.c.l.s4 1983009808
      %v895 = vunpack.c.0.s8 %v894
      %v896 = vlaneseq
      %v897 = vshrl.u32 %v896, 7
      %v898 = vsub.s32 %v895, %v897
      %v899 = vrot.slane %v885, %v898
      %v900 = vcombine.low %v542, %v548
      %v901 = vcombine.high %v542, %v548
      %v903 = vunpack.c.l.s4 1983009808
      %v904 = vunpack.c.0.s8 %v903
      %v905 = vlaneseq
      %v906 = vshrl.u32 %v905, 7
      %v907 = vsub.s32 %v904, %v906
      %v908 = vrot.slane %v900, %v907
      %v910 = vunpack.c.l.s4 1983009808
      %v911 = vunpack.c.0.s8 %v910
      %v912 = vlaneseq
      %v913 = vshrl.u32 %v912, 7
      %v914 = vsub.s32 %v911, %v913
      %v915 = vrot.slane %v901, %v914
      %v916 = vcombine.low %v545, %v551
      %v917 = vcombine.high %v545, %v551
      %v919 = vunpack.c.l.s4 1983009808
      %v920 = vunpack.c.0.s8 %v919
      %v921 = vlaneseq
      %v922 = vshrl.u32 %v921, 7
      %v923 = vsub.s32 %v920, %v922
      %v924 = vrot.slane %v916, %v923
      %v926 = vunpack.c.l.s4 1983009808
      %v927 = vunpack.c.0.s8 %v926
      %v928 = vlaneseq
      %v929 = vshrl.u32 %v928, 7
      %v930 = vsub.s32 %v927, %v929
      %v931 = vrot.slane %v917, %v930
      %v932 = vcombine.low %v876, %v892
      %v933 = vcombine.high %v876, %v892
      %v935 = vunpack.c.l.s4 1934713408
      %v936 = vunpack.c.0.s8 %v935
      %v937 = vlaneseq
      %v938 = vshrl.u32 %v937, 7
      %v939 = vsub.s32 %v936, %v938
      %v940 = vrot.slane %v932, %v939
      %v942 = vunpack.c.l.s4 1934713408
      %v943 = vunpack.c.0.s8 %v942
      %v944 = vlaneseq
      %v945 = vshrl.u32 %v944, 7
      %v946 = vsub.s32 %v943, %v945
      %v947 = vrot.slane %v933, %v946
      %v948 = vcombine.low %v883, %v899
      %v949 = vcombine.high %v883, %v899
      %v951 = vunpack.c.l.s4 1934713408
      %v952 = vunpack.c.0.s8 %v951
      %v953 = vlaneseq
      %v954 = vshrl.u32 %v953, 7
      %v955 = vsub.s32 %v952, %v954
      %v956 = vrot.slane %v948, %v955
      %v958 = vunpack.c.l.s4 1934713408
      %v959 = vunpack.c.0.s8 %v958
      %v960 = vlaneseq
      %v961 = vshrl.u32 %v960, 7
      %v962 = vsub.s32 %v959, %v961
      %v963 = vrot.slane %v949, %v962
      %v964 = vcombine.low %v908, %v924
      %v965 = vcombine.high %v908, %v924
      %v967 = vunpack.c.l.s4 1934713408
      %v968 = vunpack.c.0.s8 %v967
      %v969 = vlaneseq
      %v970 = vshrl.u32 %v969, 7
      %v971 = vsub.s32 %v968, %v970
      %v972 = vrot.slane %v964, %v971
      %v974 = vunpack.c.l.s4 1934713408
      %v975 = vunpack.c.0.s8 %v974
      %v976 = vlaneseq
      %v977 = vshrl.u32 %v976, 7
      %v978 = vsub.s32 %v975, %v977
      %v979 = vrot.slane %v965, %v978
      %v980 = vcombine.low %v915, %v931
      %v981 = vcombine.high %v915, %v931
      %v983 = vunpack.c.l.s4 1934713408
      %v984 = vunpack.c.0.s8 %v983
      %v985 = vlaneseq
      %v986 = vshrl.u32 %v985, 7
      %v987 = vsub.s32 %v984, %v986
      %v988 = vrot.slane %v980, %v987
      %v990 = vunpack.c.l.s4 1934713408
      %v991 = vunpack.c.0.s8 %v990
      %v992 = vlaneseq
      %v993 = vshrl.u32 %v992, 7
      %v994 = vsub.s32 %v991, %v993
      %v995 = vrot.slane %v981, %v994
      %v996 = vcombine.low %v940, %v972
      %v997 = vcombine.high %v940, %v972
      %v998 = vcombine.low %v947, %v979
      %v999 = vcombine.high %v947, %v979
      %v1000 = vcombine.low %v956, %v988
      %v1001 = vcombine.high %v956, %v988
      %v1002 = vcombine.low %v963, %v995
      %v1003 = vcombine.high %v963, %v995
      %v1004 = vcombine.low %v467, %v557
      %v1005 = vcombine.high %v467, %v557
      %v1007 = vunpack.c.l.s4 1983009808
      %v1008 = vunpack.c.0.s8 %v1007
      %v1009 = vlaneseq
      %v1010 = vshrl.u32 %v1009, 7
      %v1011 = vsub.s32 %v1008, %v1010
      %v1012 = vrot.slane %v1004, %v1011
      %v1014 = vunpack.c.l.s4 1983009808
      %v1015 = vunpack.c.0.s8 %v1014
      %v1016 = vlaneseq
      %v1017 = vshrl.u32 %v1016, 7
      %v1018 = vsub.s32 %v1015, %v1017
      %v1019 = vrot.slane %v1005, %v1018
      %v1020 = vcombine.low %v554, %v560
      %v1021 = vcombine.high %v554, %v560
      %v1023 = vunpack.c.l.s4 1983009808
      %v1024 = vunpack.c.0.s8 %v1023
      %v1025 = vlaneseq
      %v1026 = vshrl.u32 %v1025, 7
      %v1027 = vsub.s32 %v1024, %v1026
      %v1028 = vrot.slane %v1020, %v1027
      %v1030 = vunpack.c.l.s4 1983009808
      %v1031 = vunpack.c.0.s8 %v1030
      %v1032 = vlaneseq
      %v1033 = vshrl.u32 %v1032, 7
      %v1034 = vsub.s32 %v1031, %v1033
      %v1035 = vrot.slane %v1021, %v1034
      %v1036 = vcombine.low %v563, %v569
      %v1037 = vcombine.high %v563, %v569
      %v1039 = vunpack.c.l.s4 1983009808
      %v1040 = vunpack.c.0.s8 %v1039
      %v1041 = vlaneseq
      %v1042 = vshrl.u32 %v1041, 7
      %v1043 = vsub.s32 %v1040, %v1042
      %v1044 = vrot.slane %v1036, %v1043
      %v1046 = vunpack.c.l.s4 1983009808
      %v1047 = vunpack.c.0.s8 %v1046
      %v1048 = vlaneseq
      %v1049 = vshrl.u32 %v1048, 7
      %v1050 = vsub.s32 %v1047, %v1049
      %v1051 = vrot.slane %v1037, %v1050
      %v1052 = vcombine.low %v566, %v572
      %v1053 = vcombine.high %v566, %v572
      %v1055 = vunpack.c.l.s4 1983009808
      %v1056 = vunpack.c.0.s8 %v1055
      %v1057 = vlaneseq
      %v1058 = vshrl.u32 %v1057, 7
      %v1059 = vsub.s32 %v1056, %v1058
      %v1060 = vrot.slane %v1052, %v1059
      %v1062 = vunpack.c.l.s4 1983009808
      %v1063 = vunpack.c.0.s8 %v1062
      %v1064 = vlaneseq
      %v1065 = vshrl.u32 %v1064, 7
      %v1066 = vsub.s32 %v1063, %v1065
      %v1067 = vrot.slane %v1053, %v1066
      %v1068 = vcombine.low %v1012, %v1028
      %v1069 = vcombine.high %v1012, %v1028
      %v1071 = vunpack.c.l.s4 1934713408
      %v1072 = vunpack.c.0.s8 %v1071
      %v1073 = vlaneseq
      %v1074 = vshrl.u32 %v1073, 7
      %v1075 = vsub.s32 %v1072, %v1074
      %v1076 = vrot.slane %v1068, %v1075
      %v1078 = vunpack.c.l.s4 1934713408
      %v1079 = vunpack.c.0.s8 %v1078
      %v1080 = vlaneseq
      %v1081 = vshrl.u32 %v1080, 7
      %v1082 = vsub.s32 %v1079, %v1081
      %v1083 = vrot.slane %v1069, %v1082
      %v1084 = vcombine.low %v1019, %v1035
      %v1085 = vcombine.high %v1019, %v1035
      %v1087 = vunpack.c.l.s4 1934713408
      %v1088 = vunpack.c.0.s8 %v1087
      %v1089 = vlaneseq
      %v1090 = vshrl.u32 %v1089, 7
      %v1091 = vsub.s32 %v1088, %v1090
      %v1092 = vrot.slane %v1084, %v1091
      %v1094 = vunpack.c.l.s4 1934713408
      %v1095 = vunpack.c.0.s8 %v1094
      %v1096 = vlaneseq
      %v1097 = vshrl.u32 %v1096, 7
      %v1098 = vsub.s32 %v1095, %v1097
      %v1099 = vrot.slane %v1085, %v1098
      %v1100 = vcombine.low %v1044, %v1060
      %v1101 = vcombine.high %v1044, %v1060
      %v1103 = vunpack.c.l.s4 1934713408
      %v1104 = vunpack.c.0.s8 %v1103
      %v1105 = vlaneseq
      %v1106 = vshrl.u32 %v1105, 7
      %v1107 = vsub.s32 %v1104, %v1106
      %v1108 = vrot.slane %v1100, %v1107
      %v1110 = vunpack.c.l.s4 1934713408
      %v1111 = vunpack.c.0.s8 %v1110
      %v1112 = vlaneseq
      %v1113 = vshrl.u32 %v1112, 7
      %v1114 = vsub.s32 %v1111, %v1113
      %v1115 = vrot.slane %v1101, %v1114
      %v1116 = vcombine.low %v1051, %v1067
      %v1117 = vcombine.high %v1051, %v1067
      %v1119 = vunpack.c.l.s4 1934713408
      %v1120 = vunpack.c.0.s8 %v1119
      %v1121 = vlaneseq
      %v1122 = vshrl.u32 %v1121, 7
      %v1123 = vsub.s32 %v1120, %v1122
      %v1124 = vrot.slane %v1116, %v1123
      %v1126 = vunpack.c.l.s4 1934713408
      %v1127 = vunpack.c.0.s8 %v1126
      %v1128 = vlaneseq
      %v1129 = vshrl.u32 %v1128, 7
      %v1130 = vsub.s32 %v1127, %v1129
      %v1131 = vrot.slane %v1117, %v1130
      %v1132 = vcombine.low %v1076, %v1108
      %v1133 = vcombine.high %v1076, %v1108
      %v1134 = vcombine.low %v1083, %v1115
      %v1135 = vcombine.high %v1083, %v1115
      %v1136 = vcombine.low %v1092, %v1124
      %v1137 = vcombine.high %v1092, %v1124
      %v1138 = vcombine.low %v1099, %v1131
      %v1139 = vcombine.high %v1099, %v1131
      %v1140 = vcombine.low %v471, %v578
      %v1141 = vcombine.high %v471, %v578
      %v1143 = vunpack.c.l.s4 1983009808
      %v1144 = vunpack.c.0.s8 %v1143
      %v1145 = vlaneseq
      %v1146 = vshrl.u32 %v1145, 7
      %v1147 = vsub.s32 %v1144, %v1146
      %v1148 = vrot.slane %v1140, %v1147
      %v1150 = vunpack.c.l.s4 1983009808
      %v1151 = vunpack.c.0.s8 %v1150
      %v1152 = vlaneseq
      %v1153 = vshrl.u32 %v1152, 7
      %v1154 = vsub.s32 %v1151, %v1153
      %v1155 = vrot.slane %v1141, %v1154
      %v1156 = vcombine.low %v575, %v581
      %v1157 = vcombine.high %v575, %v581
      %v1159 = vunpack.c.l.s4 1983009808
      %v1160 = vunpack.c.0.s8 %v1159
      %v1161 = vlaneseq
      %v1162 = vshrl.u32 %v1161, 7
      %v1163 = vsub.s32 %v1160, %v1162
      %v1164 = vrot.slane %v1156, %v1163
      %v1166 = vunpack.c.l.s4 1983009808
      %v1167 = vunpack.c.0.s8 %v1166
      %v1168 = vlaneseq
      %v1169 = vshrl.u32 %v1168, 7
      %v1170 = vsub.s32 %v1167, %v1169
      %v1171 = vrot.slane %v1157, %v1170
      %v1172 = vcombine.low %v584, %v590
      %v1173 = vcombine.high %v584, %v590
      %v1175 = vunpack.c.l.s4 1983009808
      %v1176 = vunpack.c.0.s8 %v1175
      %v1177 = vlaneseq
      %v1178 = vshrl.u32 %v1177, 7
      %v1179 = vsub.s32 %v1176, %v1178
      %v1180 = vrot.slane %v1172, %v1179
      %v1182 = vunpack.c.l.s4 1983009808
      %v1183 = vunpack.c.0.s8 %v1182
      %v1184 = vlaneseq
      %v1185 = vshrl.u32 %v1184, 7
      %v1186 = vsub.s32 %v1183, %v1185
      %v1187 = vrot.slane %v1173, %v1186
      %v1188 = vcombine.low %v587, %v593
      %v1189 = vcombine.high %v587, %v593
      %v1191 = vunpack.c.l.s4 1983009808
      %v1192 = vunpack.c.0.s8 %v1191
      %v1193 = vlaneseq
      %v1194 = vshrl.u32 %v1193, 7
      %v1195 = vsub.s32 %v1192, %v1194
      %v1196 = vrot.slane %v1188, %v1195
      %v1198 = vunpack.c.l.s4 1983009808
      %v1199 = vunpack.c.0.s8 %v1198
      %v1200 = vlaneseq
      %v1201 = vshrl.u32 %v1200, 7
      %v1202 = vsub.s32 %v1199, %v1201
      %v1203 = vrot.slane %v1189, %v1202
      %v1204 = vcombine.low %v1148, %v1164
      %v1205 = vcombine.high %v1148, %v1164
      %v1207 = vunpack.c.l.s4 1934713408
      %v1208 = vunpack.c.0.s8 %v1207
      %v1209 = vlaneseq
      %v1210 = vshrl.u32 %v1209, 7
      %v1211 = vsub.s32 %v1208, %v1210
      %v1212 = vrot.slane %v1204, %v1211
      %v1214 = vunpack.c.l.s4 1934713408
      %v1215 = vunpack.c.0.s8 %v1214
      %v1216 = vlaneseq
      %v1217 = vshrl.u32 %v1216, 7
      %v1218 = vsub.s32 %v1215, %v1217
      %v1219 = vrot.slane %v1205, %v1218
      %v1220 = vcombine.low %v1155, %v1171
      %v1221 = vcombine.high %v1155, %v1171
      %v1223 = vunpack.c.l.s4 1934713408
      %v1224 = vunpack.c.0.s8 %v1223
      %v1225 = vlaneseq
      %v1226 = vshrl.u32 %v1225, 7
      %v1227 = vsub.s32 %v1224, %v1226
      %v1228 = vrot.slane %v1220, %v1227
      %v1230 = vunpack.c.l.s4 1934713408
      %v1231 = vunpack.c.0.s8 %v1230
      %v1232 = vlaneseq
      %v1233 = vshrl.u32 %v1232, 7
      %v1234 = vsub.s32 %v1231, %v1233
      %v1235 = vrot.slane %v1221, %v1234
      %v1236 = vcombine.low %v1180, %v1196
      %v1237 = vcombine.high %v1180, %v1196
      %v1239 = vunpack.c.l.s4 1934713408
      %v1240 = vunpack.c.0.s8 %v1239
      %v1241 = vlaneseq
      %v1242 = vshrl.u32 %v1241, 7
      %v1243 = vsub.s32 %v1240, %v1242
      %v1244 = vrot.slane %v1236, %v1243
      %v1246 = vunpack.c.l.s4 1934713408
      %v1247 = vunpack.c.0.s8 %v1246
      %v1248 = vlaneseq
      %v1249 = vshrl.u32 %v1248, 7
      %v1250 = vsub.s32 %v1247, %v1249
      %v1251 = vrot.slane %v1237, %v1250
      %v1252 = vcombine.low %v1187, %v1203
      %v1253 = vcombine.high %v1187, %v1203
      %v1255 = vunpack.c.l.s4 1934713408
      %v1256 = vunpack.c.0.s8 %v1255
      %v1257 = vlaneseq
      %v1258 = vshrl.u32 %v1257, 7
      %v1259 = vsub.s32 %v1256, %v1258
      %v1260 = vrot.slane %v1252, %v1259
      %v1262 = vunpack.c.l.s4 1934713408
      %v1263 = vunpack.c.0.s8 %v1262
      %v1264 = vlaneseq
      %v1265 = vshrl.u32 %v1264, 7
      %v1266 = vsub.s32 %v1263, %v1265
      %v1267 = vrot.slane %v1253, %v1266
      %v1268 = vcombine.low %v1212, %v1244
      %v1269 = vcombine.high %v1212, %v1244
      %v1270 = vcombine.low %v1219, %v1251
      %v1271 = vcombine.high %v1219, %v1251
      %v1272 = vcombine.low %v1228, %v1260
      %v1273 = vcombine.high %v1228, %v1260
      %v1274 = vcombine.low %v1235, %v1267
      %v1275 = vcombine.high %v1235, %v1267
      %v1276 = vcombine.low %v475, %v599
      %v1277 = vcombine.high %v475, %v599
      %v1279 = vunpack.c.l.s4 1983009808
      %v1280 = vunpack.c.0.s8 %v1279
      %v1281 = vlaneseq
      %v1282 = vshrl.u32 %v1281, 7
      %v1283 = vsub.s32 %v1280, %v1282
      %v1284 = vrot.slane %v1276, %v1283
      %v1286 = vunpack.c.l.s4 1983009808
      %v1287 = vunpack.c.0.s8 %v1286
      %v1288 = vlaneseq
      %v1289 = vshrl.u32 %v1288, 7
      %v1290 = vsub.s32 %v1287, %v1289
      %v1291 = vrot.slane %v1277, %v1290
      %v1292 = vcombine.low %v596, %v602
      %v1293 = vcombine.high %v596, %v602
      %v1295 = vunpack.c.l.s4 1983009808
      %v1296 = vunpack.c.0.s8 %v1295
      %v1297 = vlaneseq
      %v1298 = vshrl.u32 %v1297, 7
      %v1299 = vsub.s32 %v1296, %v1298
      %v1300 = vrot.slane %v1292, %v1299
      %v1302 = vunpack.c.l.s4 1983009808
      %v1303 = vunpack.c.0.s8 %v1302
      %v1304 = vlaneseq
      %v1305 = vshrl.u32 %v1304, 7
      %v1306 = vsub.s32 %v1303, %v1305
      %v1307 = vrot.slane %v1293, %v1306
      %v1308 = vcombine.low %v605, %v611
      %v1309 = vcombine.high %v605, %v611
      %v1311 = vunpack.c.l.s4 1983009808
      %v1312 = vunpack.c.0.s8 %v1311
      %v1313 = vlaneseq
      %v1314 = vshrl.u32 %v1313, 7
      %v1315 = vsub.s32 %v1312, %v1314
      %v1316 = vrot.slane %v1308, %v1315
      %v1318 = vunpack.c.l.s4 1983009808
      %v1319 = vunpack.c.0.s8 %v1318
      %v1320 = vlaneseq
      %v1321 = vshrl.u32 %v1320, 7
      %v1322 = vsub.s32 %v1319, %v1321
      %v1323 = vrot.slane %v1309, %v1322
      %v1324 = vcombine.low %v608, %v614
      %v1325 = vcombine.high %v608, %v614
      %v1327 = vunpack.c.l.s4 1983009808
      %v1328 = vunpack.c.0.s8 %v1327
      %v1329 = vlaneseq
      %v1330 = vshrl.u32 %v1329, 7
      %v1331 = vsub.s32 %v1328, %v1330
      %v1332 = vrot.slane %v1324, %v1331
      %v1334 = vunpack.c.l.s4 1983009808
      %v1335 = vunpack.c.0.s8 %v1334
      %v1336 = vlaneseq
      %v1337 = vshrl.u32 %v1336, 7
      %v1338 = vsub.s32 %v1335, %v1337
      %v1339 = vrot.slane %v1325, %v1338
      %v1340 = vcombine.low %v1284, %v1300
      %v1341 = vcombine.high %v1284, %v1300
      %v1343 = vunpack.c.l.s4 1934713408
      %v1344 = vunpack.c.0.s8 %v1343
      %v1345 = vlaneseq
      %v1346 = vshrl.u32 %v1345, 7
      %v1347 = vsub.s32 %v1344, %v1346
      %v1348 = vrot.slane %v1340, %v1347
      %v1350 = vunpack.c.l.s4 1934713408
      %v1351 = vunpack.c.0.s8 %v1350
      %v1352 = vlaneseq
      %v1353 = vshrl.u32 %v1352, 7
      %v1354 = vsub.s32 %v1351, %v1353
      %v1355 = vrot.slane %v1341, %v1354
      %v1356 = vcombine.low %v1291, %v1307
      %v1357 = vcombine.high %v1291, %v1307
      %v1359 = vunpack.c.l.s4 1934713408
      %v1360 = vunpack.c.0.s8 %v1359
      %v1361 = vlaneseq
      %v1362 = vshrl.u32 %v1361, 7
      %v1363 = vsub.s32 %v1360, %v1362
      %v1364 = vrot.slane %v1356, %v1363
      %v1366 = vunpack.c.l.s4 1934713408
      %v1367 = vunpack.c.0.s8 %v1366
      %v1368 = vlaneseq
      %v1369 = vshrl.u32 %v1368, 7
      %v1370 = vsub.s32 %v1367, %v1369
      %v1371 = vrot.slane %v1357, %v1370
      %v1372 = vcombine.low %v1316, %v1332
      %v1373 = vcombine.high %v1316, %v1332
      %v1375 = vunpack.c.l.s4 1934713408
      %v1376 = vunpack.c.0.s8 %v1375
      %v1377 = vlaneseq
      %v1378 = vshrl.u32 %v1377, 7
      %v1379 = vsub.s32 %v1376, %v1378
      %v1380 = vrot.slane %v1372, %v1379
      %v1382 = vunpack.c.l.s4 1934713408
      %v1383 = vunpack.c.0.s8 %v1382
      %v1384 = vlaneseq
      %v1385 = vshrl.u32 %v1384, 7
      %v1386 = vsub.s32 %v1383, %v1385
      %v1387 = vrot.slane %v1373, %v1386
      %v1388 = vcombine.low %v1323, %v1339
      %v1389 = vcombine.high %v1323, %v1339
      %v1391 = vunpack.c.l.s4 1934713408
      %v1392 = vunpack.c.0.s8 %v1391
      %v1393 = vlaneseq
      %v1394 = vshrl.u32 %v1393, 7
      %v1395 = vsub.s32 %v1392, %v1394
      %v1396 = vrot.slane %v1388, %v1395
      %v1398 = vunpack.c.l.s4 1934713408
      %v1399 = vunpack.c.0.s8 %v1398
      %v1400 = vlaneseq
      %v1401 = vshrl.u32 %v1400, 7
      %v1402 = vsub.s32 %v1399, %v1401
      %v1403 = vrot.slane %v1389, %v1402
      %v1404 = vcombine.low %v1348, %v1380
      %v1405 = vcombine.high %v1348, %v1380
      %v1406 = vcombine.low %v1355, %v1387
      %v1407 = vcombine.high %v1355, %v1387
      %v1408 = vcombine.low %v1364, %v1396
      %v1409 = vcombine.high %v1364, %v1396
      %v1410 = vcombine.low %v1371, %v1403
      %v1411 = vcombine.high %v1371, %v1403
      %v1412 = vcombine.low %v479, %v620
      %v1413 = vcombine.high %v479, %v620
      %v1415 = vunpack.c.l.s4 1983009808
      %v1416 = vunpack.c.0.s8 %v1415
      %v1417 = vlaneseq
      %v1418 = vshrl.u32 %v1417, 7
      %v1419 = vsub.s32 %v1416, %v1418
      %v1420 = vrot.slane %v1412, %v1419
      %v1422 = vunpack.c.l.s4 1983009808
      %v1423 = vunpack.c.0.s8 %v1422
      %v1424 = vlaneseq
      %v1425 = vshrl.u32 %v1424, 7
      %v1426 = vsub.s32 %v1423, %v1425
      %v1427 = vrot.slane %v1413, %v1426
      %v1428 = vcombine.low %v617, %v623
      %v1429 = vcombine.high %v617, %v623
      %v1431 = vunpack.c.l.s4 1983009808
      %v1432 = vunpack.c.0.s8 %v1431
      %v1433 = vlaneseq
      %v1434 = vshrl.u32 %v1433, 7
      %v1435 = vsub.s32 %v1432, %v1434
      %v1436 = vrot.slane %v1428, %v1435
      %v1438 = vunpack.c.l.s4 1983009808
      %v1439 = vunpack.c.0.s8 %v1438
      %v1440 = vlaneseq
      %v1441 = vshrl.u32 %v1440, 7
      %v1442 = vsub.s32 %v1439, %v1441
      %v1443 = vrot.slane %v1429, %v1442
      %v1444 = vcombine.low %v626, %v632
      %v1445 = vcombine.high %v626, %v632
      %v1447 = vunpack.c.l.s4 1983009808
      %v1448 = vunpack.c.0.s8 %v1447
      %v1449 = vlaneseq
      %v1450 = vshrl.u32 %v1449, 7
      %v1451 = vsub.s32 %v1448, %v1450
      %v1452 = vrot.slane %v1444, %v1451
      %v1454 = vunpack.c.l.s4 1983009808
      %v1455 = vunpack.c.0.s8 %v1454
      %v1456 = vlaneseq
      %v1457 = vshrl.u32 %v1456, 7
      %v1458 = vsub.s32 %v1455, %v1457
      %v1459 = vrot.slane %v1445, %v1458
      %v1460 = vcombine.low %v629, %v635
      %v1461 = vcombine.high %v629, %v635
      %v1463 = vunpack.c.l.s4 1983009808
      %v1464 = vunpack.c.0.s8 %v1463
      %v1465 = vlaneseq
      %v1466 = vshrl.u32 %v1465, 7
      %v1467 = vsub.s32 %v1464, %v1466
      %v1468 = vrot.slane %v1460, %v1467
      %v1470 = vunpack.c.l.s4 1983009808
      %v1471 = vunpack.c.0.s8 %v1470
      %v1472 = vlaneseq
      %v1473 = vshrl.u32 %v1472, 7
      %v1474 = vsub.s32 %v1471, %v1473
      %v1475 = vrot.slane %v1461, %v1474
      %v1476 = vcombine.low %v1420, %v1436
      %v1477 = vcombine.high %v1420, %v1436
      %v1479 = vunpack.c.l.s4 1934713408
      %v1480 = vunpack.c.0.s8 %v1479
      %v1481 = vlaneseq
      %v1482 = vshrl.u32 %v1481, 7
      %v1483 = vsub.s32 %v1480, %v1482
      %v1484 = vrot.slane %v1476, %v1483
      %v1486 = vunpack.c.l.s4 1934713408
      %v1487 = vunpack.c.0.s8 %v1486
      %v1488 = vlaneseq
      %v1489 = vshrl.u32 %v1488, 7
      %v1490 = vsub.s32 %v1487, %v1489
      %v1491 = vrot.slane %v1477, %v1490
      %v1492 = vcombine.low %v1427, %v1443
      %v1493 = vcombine.high %v1427, %v1443
      %v1495 = vunpack.c.l.s4 1934713408
      %v1496 = vunpack.c.0.s8 %v1495
      %v1497 = vlaneseq
      %v1498 = vshrl.u32 %v1497, 7
      %v1499 = vsub.s32 %v1496, %v1498
      %v1500 = vrot.slane %v1492, %v1499
      %v1502 = vunpack.c.l.s4 1934713408
      %v1503 = vunpack.c.0.s8 %v1502
      %v1504 = vlaneseq
      %v1505 = vshrl.u32 %v1504, 7
      %v1506 = vsub.s32 %v1503, %v1505
      %v1507 = vrot.slane %v1493, %v1506
      %v1508 = vcombine.low %v1452, %v1468
      %v1509 = vcombine.high %v1452, %v1468
      %v1511 = vunpack.c.l.s4 1934713408
      %v1512 = vunpack.c.0.s8 %v1511
      %v1513 = vlaneseq
      %v1514 = vshrl.u32 %v1513, 7
      %v1515 = vsub.s32 %v1512, %v1514
      %v1516 = vrot.slane %v1508, %v1515
      %v1518 = vunpack.c.l.s4 1934713408
      %v1519 = vunpack.c.0.s8 %v1518
      %v1520 = vlaneseq
      %v1521 = vshrl.u32 %v1520, 7
      %v1522 = vsub.s32 %v1519, %v1521
      %v1523 = vrot.slane %v1509, %v1522
      %v1524 = vcombine.low %v1459, %v1475
      %v1525 = vcombine.high %v1459, %v1475
      %v1527 = vunpack.c.l.s4 1934713408
      %v1528 = vunpack.c.0.s8 %v1527
      %v1529 = vlaneseq
      %v1530 = vshrl.u32 %v1529, 7
      %v1531 = vsub.s32 %v1528, %v1530
      %v1532 = vrot.slane %v1524, %v1531
      %v1534 = vunpack.c.l.s4 1934713408
      %v1535 = vunpack.c.0.s8 %v1534
      %v1536 = vlaneseq
      %v1537 = vshrl.u32 %v1536, 7
      %v1538 = vsub.s32 %v1535, %v1537
      %v1539 = vrot.slane %v1525, %v1538
      %v1540 = vcombine.low %v1484, %v1516
      %v1541 = vcombine.high %v1484, %v1516
      %v1542 = vcombine.low %v1491, %v1523
      %v1543 = vcombine.high %v1491, %v1523
      %v1544 = vcombine.low %v1500, %v1532
      %v1545 = vcombine.high %v1500, %v1532
      %v1546 = vcombine.low %v1507, %v1539
      %v1547 = vcombine.high %v1507, %v1539
      %v1548 = vcombine.low %v483, %v641
      %v1549 = vcombine.high %v483, %v641
      %v1551 = vunpack.c.l.s4 1983009808
      %v1552 = vunpack.c.0.s8 %v1551
      %v1553 = vlaneseq
      %v1554 = vshrl.u32 %v1553, 7
      %v1555 = vsub.s32 %v1552, %v1554
      %v1556 = vrot.slane %v1548, %v1555
      %v1558 = vunpack.c.l.s4 1983009808
      %v1559 = vunpack.c.0.s8 %v1558
      %v1560 = vlaneseq
      %v1561 = vshrl.u32 %v1560, 7
      %v1562 = vsub.s32 %v1559, %v1561
      %v1563 = vrot.slane %v1549, %v1562
      %v1564 = vcombine.low %v638, %v644
      %v1565 = vcombine.high %v638, %v644
      %v1567 = vunpack.c.l.s4 1983009808
      %v1568 = vunpack.c.0.s8 %v1567
      %v1569 = vlaneseq
      %v1570 = vshrl.u32 %v1569, 7
      %v1571 = vsub.s32 %v1568, %v1570
      %v1572 = vrot.slane %v1564, %v1571
      %v1574 = vunpack.c.l.s4 1983009808
      %v1575 = vunpack.c.0.s8 %v1574
      %v1576 = vlaneseq
      %v1577 = vshrl.u32 %v1576, 7
      %v1578 = vsub.s32 %v1575, %v1577
      %v1579 = vrot.slane %v1565, %v1578
      %v1580 = vcombine.low %v647, %v653
      %v1581 = vcombine.high %v647, %v653
      %v1583 = vunpack.c.l.s4 1983009808
      %v1584 = vunpack.c.0.s8 %v1583
      %v1585 = vlaneseq
      %v1586 = vshrl.u32 %v1585, 7
      %v1587 = vsub.s32 %v1584, %v1586
      %v1588 = vrot.slane %v1580, %v1587
      %v1590 = vunpack.c.l.s4 1983009808
      %v1591 = vunpack.c.0.s8 %v1590
      %v1592 = vlaneseq
      %v1593 = vshrl.u32 %v1592, 7
      %v1594 = vsub.s32 %v1591, %v1593
      %v1595 = vrot.slane %v1581, %v1594
      %v1596 = vcombine.low %v650, %v656
      %v1597 = vcombine.high %v650, %v656
      %v1599 = vunpack.c.l.s4 1983009808
      %v1600 = vunpack.c.0.s8 %v1599
      %v1601 = vlaneseq
      %v1602 = vshrl.u32 %v1601, 7
      %v1603 = vsub.s32 %v1600, %v1602
      %v1604 = vrot.slane %v1596, %v1603
      %v1606 = vunpack.c.l.s4 1983009808
      %v1607 = vunpack.c.0.s8 %v1606
      %v1608 = vlaneseq
      %v1609 = vshrl.u32 %v1608, 7
      %v1610 = vsub.s32 %v1607, %v1609
      %v1611 = vrot.slane %v1597, %v1610
      %v1612 = vcombine.low %v1556, %v1572
      %v1613 = vcombine.high %v1556, %v1572
      %v1615 = vunpack.c.l.s4 1934713408
      %v1616 = vunpack.c.0.s8 %v1615
      %v1617 = vlaneseq
      %v1618 = vshrl.u32 %v1617, 7
      %v1619 = vsub.s32 %v1616, %v1618
      %v1620 = vrot.slane %v1612, %v1619
      %v1622 = vunpack.c.l.s4 1934713408
      %v1623 = vunpack.c.0.s8 %v1622
      %v1624 = vlaneseq
      %v1625 = vshrl.u32 %v1624, 7
      %v1626 = vsub.s32 %v1623, %v1625
      %v1627 = vrot.slane %v1613, %v1626
      %v1628 = vcombine.low %v1563, %v1579
      %v1629 = vcombine.high %v1563, %v1579
      %v1631 = vunpack.c.l.s4 1934713408
      %v1632 = vunpack.c.0.s8 %v1631
      %v1633 = vlaneseq
      %v1634 = vshrl.u32 %v1633, 7
      %v1635 = vsub.s32 %v1632, %v1634
      %v1636 = vrot.slane %v1628, %v1635
      %v1638 = vunpack.c.l.s4 1934713408
      %v1639 = vunpack.c.0.s8 %v1638
      %v1640 = vlaneseq
      %v1641 = vshrl.u32 %v1640, 7
      %v1642 = vsub.s32 %v1639, %v1641
      %v1643 = vrot.slane %v1629, %v1642
      %v1644 = vcombine.low %v1588, %v1604
      %v1645 = vcombine.high %v1588, %v1604
      %v1647 = vunpack.c.l.s4 1934713408
      %v1648 = vunpack.c.0.s8 %v1647
      %v1649 = vlaneseq
      %v1650 = vshrl.u32 %v1649, 7
      %v1651 = vsub.s32 %v1648, %v1650
      %v1652 = vrot.slane %v1644, %v1651
      %v1654 = vunpack.c.l.s4 1934713408
      %v1655 = vunpack.c.0.s8 %v1654
      %v1656 = vlaneseq
      %v1657 = vshrl.u32 %v1656, 7
      %v1658 = vsub.s32 %v1655, %v1657
      %v1659 = vrot.slane %v1645, %v1658
      %v1660 = vcombine.low %v1595, %v1611
      %v1661 = vcombine.high %v1595, %v1611
      %v1663 = vunpack.c.l.s4 1934713408
      %v1664 = vunpack.c.0.s8 %v1663
      %v1665 = vlaneseq
      %v1666 = vshrl.u32 %v1665, 7
      %v1667 = vsub.s32 %v1664, %v1666
      %v1668 = vrot.slane %v1660, %v1667
      %v1670 = vunpack.c.l.s4 1934713408
      %v1671 = vunpack.c.0.s8 %v1670
      %v1672 = vlaneseq
      %v1673 = vshrl.u32 %v1672, 7
      %v1674 = vsub.s32 %v1671, %v1673
      %v1675 = vrot.slane %v1661, %v1674
      %v1676 = vcombine.low %v1620, %v1652
      %v1677 = vcombine.high %v1620, %v1652
      %v1678 = vcombine.low %v1627, %v1659
      %v1679 = vcombine.high %v1627, %v1659
      %v1680 = vcombine.low %v1636, %v1668
      %v1681 = vcombine.high %v1636, %v1668
      %v1682 = vcombine.low %v1643, %v1675
      %v1683 = vcombine.high %v1643, %v1675
      %v1684 = vcombine.low %v487, %v662
      %v1685 = vcombine.high %v487, %v662
      %v1687 = vunpack.c.l.s4 1983009808
      %v1688 = vunpack.c.0.s8 %v1687
      %v1689 = vlaneseq
      %v1690 = vshrl.u32 %v1689, 7
      %v1691 = vsub.s32 %v1688, %v1690
      %v1692 = vrot.slane %v1684, %v1691
      %v1694 = vunpack.c.l.s4 1983009808
      %v1695 = vunpack.c.0.s8 %v1694
      %v1696 = vlaneseq
      %v1697 = vshrl.u32 %v1696, 7
      %v1698 = vsub.s32 %v1695, %v1697
      %v1699 = vrot.slane %v1685, %v1698
      %v1700 = vcombine.low %v659, %v665
      %v1701 = vcombine.high %v659, %v665
      %v1703 = vunpack.c.l.s4 1983009808
      %v1704 = vunpack.c.0.s8 %v1703
      %v1705 = vlaneseq
      %v1706 = vshrl.u32 %v1705, 7
      %v1707 = vsub.s32 %v1704, %v1706
      %v1708 = vrot.slane %v1700, %v1707
      %v1710 = vunpack.c.l.s4 1983009808
      %v1711 = vunpack.c.0.s8 %v1710
      %v1712 = vlaneseq
      %v1713 = vshrl.u32 %v1712, 7
      %v1714 = vsub.s32 %v1711, %v1713
      %v1715 = vrot.slane %v1701, %v1714
      %v1716 = vcombine.low %v668, %v674
      %v1717 = vcombine.high %v668, %v674
      %v1719 = vunpack.c.l.s4 1983009808
      %v1720 = vunpack.c.0.s8 %v1719
      %v1721 = vlaneseq
      %v1722 = vshrl.u32 %v1721, 7
      %v1723 = vsub.s32 %v1720, %v1722
      %v1724 = vrot.slane %v1716, %v1723
      %v1726 = vunpack.c.l.s4 1983009808
      %v1727 = vunpack.c.0.s8 %v1726
      %v1728 = vlaneseq
      %v1729 = vshrl.u32 %v1728, 7
      %v1730 = vsub.s32 %v1727, %v1729
      %v1731 = vrot.slane %v1717, %v1730
      %v1732 = vcombine.low %v671, %v677
      %v1733 = vcombine.high %v671, %v677
      %v1735 = vunpack.c.l.s4 1983009808
      %v1736 = vunpack.c.0.s8 %v1735
      %v1737 = vlaneseq
      %v1738 = vshrl.u32 %v1737, 7
      %v1739 = vsub.s32 %v1736, %v1738
      %v1740 = vrot.slane %v1732, %v1739
      %v1742 = vunpack.c.l.s4 1983009808
      %v1743 = vunpack.c.0.s8 %v1742
      %v1744 = vlaneseq
      %v1745 = vshrl.u32 %v1744, 7
      %v1746 = vsub.s32 %v1743, %v1745
      %v1747 = vrot.slane %v1733, %v1746
      %v1748 = vcombine.low %v1692, %v1708
      %v1749 = vcombine.high %v1692, %v1708
      %v1751 = vunpack.c.l.s4 1934713408
      %v1752 = vunpack.c.0.s8 %v1751
      %v1753 = vlaneseq
      %v1754 = vshrl.u32 %v1753, 7
      %v1755 = vsub.s32 %v1752, %v1754
      %v1756 = vrot.slane %v1748, %v1755
      %v1758 = vunpack.c.l.s4 1934713408
      %v1759 = vunpack.c.0.s8 %v1758
      %v1760 = vlaneseq
      %v1761 = vshrl.u32 %v1760, 7
      %v1762 = vsub.s32 %v1759, %v1761
      %v1763 = vrot.slane %v1749, %v1762
      %v1764 = vcombine.low %v1699, %v1715
      %v1765 = vcombine.high %v1699, %v1715
      %v1767 = vunpack.c.l.s4 1934713408
      %v1768 = vunpack.c.0.s8 %v1767
      %v1769 = vlaneseq
      %v1770 = vshrl.u32 %v1769, 7
      %v1771 = vsub.s32 %v1768, %v1770
      %v1772 = vrot.slane %v1764, %v1771
      %v1774 = vunpack.c.l.s4 1934713408
      %v1775 = vunpack.c.0.s8 %v1774
      %v1776 = vlaneseq
      %v1777 = vshrl.u32 %v1776, 7
      %v1778 = vsub.s32 %v1775, %v1777
      %v1779 = vrot.slane %v1765, %v1778
      %v1780 = vcombine.low %v1724, %v1740
      %v1781 = vcombine.high %v1724, %v1740
      %v1783 = vunpack.c.l.s4 1934713408
      %v1784 = vunpack.c.0.s8 %v1783
      %v1785 = vlaneseq
      %v1786 = vshrl.u32 %v1785, 7
      %v1787 = vsub.s32 %v1784, %v1786
      %v1788 = vrot.slane %v1780, %v1787
      %v1790 = vunpack.c.l.s4 1934713408
      %v1791 = vunpack.c.0.s8 %v1790
      %v1792 = vlaneseq
      %v1793 = vshrl.u32 %v1792, 7
      %v1794 = vsub.s32 %v1791, %v1793
      %v1795 = vrot.slane %v1781, %v1794
      %v1796 = vcombine.low %v1731, %v1747
      %v1797 = vcombine.high %v1731, %v1747
      %v1799 = vunpack.c.l.s4 1934713408
      %v1800 = vunpack.c.0.s8 %v1799
      %v1801 = vlaneseq
      %v1802 = vshrl.u32 %v1801, 7
      %v1803 = vsub.s32 %v1800, %v1802
      %v1804 = vrot.slane %v1796, %v1803
      %v1806 = vunpack.c.l.s4 1934713408
      %v1807 = vunpack.c.0.s8 %v1806
      %v1808 = vlaneseq
      %v1809 = vshrl.u32 %v1808, 7
      %v1810 = vsub.s32 %v1807, %v1809
      %v1811 = vrot.slane %v1797, %v1810
      %v1812 = vcombine.low %v1756, %v1788
      %v1813 = vcombine.high %v1756, %v1788
      %v1814 = vcombine.low %v1763, %v1795
      %v1815 = vcombine.high %v1763, %v1795
      %v1816 = vcombine.low %v1772, %v1804
      %v1817 = vcombine.high %v1772, %v1804
      %v1818 = vcombine.low %v1779, %v1811
      %v1819 = vcombine.high %v1779, %v1811
      %v1820 = vcombine.low %v491, %v683
      %v1821 = vcombine.high %v491, %v683
      %v1823 = vunpack.c.l.s4 1983009808
      %v1824 = vunpack.c.0.s8 %v1823
      %v1825 = vlaneseq
      %v1826 = vshrl.u32 %v1825, 7
      %v1827 = vsub.s32 %v1824, %v1826
      %v1828 = vrot.slane %v1820, %v1827
      %v1830 = vunpack.c.l.s4 1983009808
      %v1831 = vunpack.c.0.s8 %v1830
      %v1832 = vlaneseq
      %v1833 = vshrl.u32 %v1832, 7
      %v1834 = vsub.s32 %v1831, %v1833
      %v1835 = vrot.slane %v1821, %v1834
      %v1836 = vcombine.low %v680, %v686
      %v1837 = vcombine.high %v680, %v686
      %v1839 = vunpack.c.l.s4 1983009808
      %v1840 = vunpack.c.0.s8 %v1839
      %v1841 = vlaneseq
      %v1842 = vshrl.u32 %v1841, 7
      %v1843 = vsub.s32 %v1840, %v1842
      %v1844 = vrot.slane %v1836, %v1843
      %v1846 = vunpack.c.l.s4 1983009808
      %v1847 = vunpack.c.0.s8 %v1846
      %v1848 = vlaneseq
      %v1849 = vshrl.u32 %v1848, 7
      %v1850 = vsub.s32 %v1847, %v1849
      %v1851 = vrot.slane %v1837, %v1850
      %v1852 = vcombine.low %v689, %v695
      %v1853 = vcombine.high %v689, %v695
      %v1855 = vunpack.c.l.s4 1983009808
      %v1856 = vunpack.c.0.s8 %v1855
      %v1857 = vlaneseq
      %v1858 = vshrl.u32 %v1857, 7
      %v1859 = vsub.s32 %v1856, %v1858
      %v1860 = vrot.slane %v1852, %v1859
      %v1862 = vunpack.c.l.s4 1983009808
      %v1863 = vunpack.c.0.s8 %v1862
      %v1864 = vlaneseq
      %v1865 = vshrl.u32 %v1864, 7
      %v1866 = vsub.s32 %v1863, %v1865
      %v1867 = vrot.slane %v1853, %v1866
      %v1868 = vcombine.low %v692, %v698
      %v1869 = vcombine.high %v692, %v698
      %v1871 = vunpack.c.l.s4 1983009808
      %v1872 = vunpack.c.0.s8 %v1871
      %v1873 = vlaneseq
      %v1874 = vshrl.u32 %v1873, 7
      %v1875 = vsub.s32 %v1872, %v1874
      %v1876 = vrot.slane %v1868, %v1875
      %v1878 = vunpack.c.l.s4 1983009808
      %v1879 = vunpack.c.0.s8 %v1878
      %v1880 = vlaneseq
      %v1881 = vshrl.u32 %v1880, 7
      %v1882 = vsub.s32 %v1879, %v1881
      %v1883 = vrot.slane %v1869, %v1882
      %v1884 = vcombine.low %v1828, %v1844
      %v1885 = vcombine.high %v1828, %v1844
      %v1887 = vunpack.c.l.s4 1934713408
      %v1888 = vunpack.c.0.s8 %v1887
      %v1889 = vlaneseq
      %v1890 = vshrl.u32 %v1889, 7
      %v1891 = vsub.s32 %v1888, %v1890
      %v1892 = vrot.slane %v1884, %v1891
      %v1894 = vunpack.c.l.s4 1934713408
      %v1895 = vunpack.c.0.s8 %v1894
      %v1896 = vlaneseq
      %v1897 = vshrl.u32 %v1896, 7
      %v1898 = vsub.s32 %v1895, %v1897
      %v1899 = vrot.slane %v1885, %v1898
      %v1900 = vcombine.low %v1835, %v1851
      %v1901 = vcombine.high %v1835, %v1851
      %v1903 = vunpack.c.l.s4 1934713408
      %v1904 = vunpack.c.0.s8 %v1903
      %v1905 = vlaneseq
      %v1906 = vshrl.u32 %v1905, 7
      %v1907 = vsub.s32 %v1904, %v1906
      %v1908 = vrot.slane %v1900, %v1907
      %v1910 = vunpack.c.l.s4 1934713408
      %v1911 = vunpack.c.0.s8 %v1910
      %v1912 = vlaneseq
      %v1913 = vshrl.u32 %v1912, 7
      %v1914 = vsub.s32 %v1911, %v1913
      %v1915 = vrot.slane %v1901, %v1914
      %v1916 = vcombine.low %v1860, %v1876
      %v1917 = vcombine.high %v1860, %v1876
      %v1919 = vunpack.c.l.s4 1934713408
      %v1920 = vunpack.c.0.s8 %v1919
      %v1921 = vlaneseq
      %v1922 = vshrl.u32 %v1921, 7
      %v1923 = vsub.s32 %v1920, %v1922
      %v1924 = vrot.slane %v1916, %v1923
      %v1926 = vunpack.c.l.s4 1934713408
      %v1927 = vunpack.c.0.s8 %v1926
      %v1928 = vlaneseq
      %v1929 = vshrl.u32 %v1928, 7
      %v1930 = vsub.s32 %v1927, %v1929
      %v1931 = vrot.slane %v1917, %v1930
      %v1932 = vcombine.low %v1867, %v1883
      %v1933 = vcombine.high %v1867, %v1883
      %v1935 = vunpack.c.l.s4 1934713408
      %v1936 = vunpack.c.0.s8 %v1935
      %v1937 = vlaneseq
      %v1938 = vshrl.u32 %v1937, 7
      %v1939 = vsub.s32 %v1936, %v1938
      %v1940 = vrot.slane %v1932, %v1939
      %v1942 = vunpack.c.l.s4 1934713408
      %v1943 = vunpack.c.0.s8 %v1942
      %v1944 = vlaneseq
      %v1945 = vshrl.u32 %v1944, 7
      %v1946 = vsub.s32 %v1943, %v1945
      %v1947 = vrot.slane %v1933, %v1946
      %v1948 = vcombine.low %v1892, %v1924
      %v1949 = vcombine.high %v1892, %v1924
      %v1950 = vcombine.low %v1899, %v1931
      %v1951 = vcombine.high %v1899, %v1931
      %v1952 = vcombine.low %v1908, %v1940
      %v1953 = vcombine.high %v1908, %v1940
      %v1954 = vcombine.low %v1915, %v1947
      %v1955 = vcombine.high %v1915, %v1947
      %v1956 = vcombine.low %v464, %v704
      %v1957 = vcombine.high %v464, %v704
      %v1959 = vunpack.c.l.s4 1983009808
      %v1960 = vunpack.c.0.s8 %v1959
      %v1961 = vlaneseq
      %v1962 = vshrl.u32 %v1961, 7
      %v1963 = vsub.s32 %v1960, %v1962
      %v1964 = vrot.slane %v1956, %v1963
      %v1966 = vunpack.c.l.s4 1983009808
      %v1967 = vunpack.c.0.s8 %v1966
      %v1968 = vlaneseq
      %v1969 = vshrl.u32 %v1968, 7
      %v1970 = vsub.s32 %v1967, %v1969
      %v1971 = vrot.slane %v1957, %v1970
      %v1972 = vcombine.low %v701, %v707
      %v1973 = vcombine.high %v701, %v707
      %v1975 = vunpack.c.l.s4 1983009808
      %v1976 = vunpack.c.0.s8 %v1975
      %v1977 = vlaneseq
      %v1978 = vshrl.u32 %v1977, 7
      %v1979 = vsub.s32 %v1976, %v1978
      %v1980 = vrot.slane %v1972, %v1979
      %v1982 = vunpack.c.l.s4 1983009808
      %v1983 = vunpack.c.0.s8 %v1982
      %v1984 = vlaneseq
      %v1985 = vshrl.u32 %v1984, 7
      %v1986 = vsub.s32 %v1983, %v1985
      %v1987 = vrot.slane %v1973, %v1986
      %v1988 = vcombine.low %v710, %v716
      %v1989 = vcombine.high %v710, %v716
      %v1991 = vunpack.c.l.s4 1983009808
      %v1992 = vunpack.c.0.s8 %v1991
      %v1993 = vlaneseq
      %v1994 = vshrl.u32 %v1993, 7
      %v1995 = vsub.s32 %v1992, %v1994
      %v1996 = vrot.slane %v1988, %v1995
      %v1998 = vunpack.c.l.s4 1983009808
      %v1999 = vunpack.c.0.s8 %v1998
      %v2000 = vlaneseq
      %v2001 = vshrl.u32 %v2000, 7
      %v2002 = vsub.s32 %v1999, %v2001
      %v2003 = vrot.slane %v1989, %v2002
      %v2004 = vcombine.low %v713, %v719
      %v2005 = vcombine.high %v713, %v719
      %v2007 = vunpack.c.l.s4 1983009808
      %v2008 = vunpack.c.0.s8 %v2007
      %v2009 = vlaneseq
      %v2010 = vshrl.u32 %v2009, 7
      %v2011 = vsub.s32 %v2008, %v2010
      %v2012 = vrot.slane %v2004, %v2011
      %v2014 = vunpack.c.l.s4 1983009808
      %v2015 = vunpack.c.0.s8 %v2014
      %v2016 = vlaneseq
      %v2017 = vshrl.u32 %v2016, 7
      %v2018 = vsub.s32 %v2015, %v2017
      %v2019 = vrot.slane %v2005, %v2018
      %v2020 = vcombine.low %v1964, %v1980
      %v2021 = vcombine.high %v1964, %v1980
      %v2023 = vunpack.c.l.s4 1934713408
      %v2024 = vunpack.c.0.s8 %v2023
      %v2025 = vlaneseq
      %v2026 = vshrl.u32 %v2025, 7
      %v2027 = vsub.s32 %v2024, %v2026
      %v2028 = vrot.slane %v2020, %v2027
      %v2030 = vunpack.c.l.s4 1934713408
      %v2031 = vunpack.c.0.s8 %v2030
      %v2032 = vlaneseq
      %v2033 = vshrl.u32 %v2032, 7
      %v2034 = vsub.s32 %v2031, %v2033
      %v2035 = vrot.slane %v2021, %v2034
      %v2036 = vcombine.low %v1971, %v1987
      %v2037 = vcombine.high %v1971, %v1987
      %v2039 = vunpack.c.l.s4 1934713408
      %v2040 = vunpack.c.0.s8 %v2039
      %v2041 = vlaneseq
      %v2042 = vshrl.u32 %v2041, 7
      %v2043 = vsub.s32 %v2040, %v2042
      %v2044 = vrot.slane %v2036, %v2043
      %v2046 = vunpack.c.l.s4 1934713408
      %v2047 = vunpack.c.0.s8 %v2046
      %v2048 = vlaneseq
      %v2049 = vshrl.u32 %v2048, 7
      %v2050 = vsub.s32 %v2047, %v2049
      %v2051 = vrot.slane %v2037, %v2050
      %v2052 = vcombine.low %v1996, %v2012
      %v2053 = vcombine.high %v1996, %v2012
      %v2055 = vunpack.c.l.s4 1934713408
      %v2056 = vunpack.c.0.s8 %v2055
      %v2057 = vlaneseq
      %v2058 = vshrl.u32 %v2057, 7
      %v2059 = vsub.s32 %v2056, %v2058
      %v2060 = vrot.slane %v2052, %v2059
      %v2062 = vunpack.c.l.s4 1934713408
      %v2063 = vunpack.c.0.s8 %v2062
      %v2064 = vlaneseq
      %v2065 = vshrl.u32 %v2064, 7
      %v2066 = vsub.s32 %v2063, %v2065
      %v2067 = vrot.slane %v2053, %v2066
      %v2068 = vcombine.low %v2003, %v2019
      %v2069 = vcombine.high %v2003, %v2019
      %v2071 = vunpack.c.l.s4 1934713408
      %v2072 = vunpack.c.0.s8 %v2071
      %v2073 = vlaneseq
      %v2074 = vshrl.u32 %v2073, 7
      %v2075 = vsub.s32 %v2072, %v2074
      %v2076 = vrot.slane %v2068, %v2075
      %v2078 = vunpack.c.l.s4 1934713408
      %v2079 = vunpack.c.0.s8 %v2078
      %v2080 = vlaneseq
      %v2081 = vshrl.u32 %v2080, 7
      %v2082 = vsub.s32 %v2079, %v2081
      %v2083 = vrot.slane %v2069, %v2082
      %v2084 = vcombine.low %v2028, %v2060
      %v2085 = vcombine.high %v2028, %v2060
      %v2086 = vcombine.low %v2035, %v2067
      %v2087 = vcombine.high %v2035, %v2067
      %v2088 = vcombine.low %v2044, %v2076
      %v2089 = vcombine.high %v2044, %v2076
      %v2090 = vcombine.low %v2051, %v2083
      %v2091 = vcombine.high %v2051, %v2083
      %v2092 = vcombine.low %v497, %v725
      %v2093 = vcombine.high %v497, %v725
      %v2095 = vunpack.c.l.s4 1983009808
      %v2096 = vunpack.c.0.s8 %v2095
      %v2097 = vlaneseq
      %v2098 = vshrl.u32 %v2097, 7
      %v2099 = vsub.s32 %v2096, %v2098
      %v2100 = vrot.slane %v2092, %v2099
      %v2102 = vunpack.c.l.s4 1983009808
      %v2103 = vunpack.c.0.s8 %v2102
      %v2104 = vlaneseq
      %v2105 = vshrl.u32 %v2104, 7
      %v2106 = vsub.s32 %v2103, %v2105
      %v2107 = vrot.slane %v2093, %v2106
      %v2108 = vcombine.low %v722, %v728
      %v2109 = vcombine.high %v722, %v728
      %v2111 = vunpack.c.l.s4 1983009808
      %v2112 = vunpack.c.0.s8 %v2111
      %v2113 = vlaneseq
      %v2114 = vshrl.u32 %v2113, 7
      %v2115 = vsub.s32 %v2112, %v2114
      %v2116 = vrot.slane %v2108, %v2115
      %v2118 = vunpack.c.l.s4 1983009808
      %v2119 = vunpack.c.0.s8 %v2118
      %v2120 = vlaneseq
      %v2121 = vshrl.u32 %v2120, 7
      %v2122 = vsub.s32 %v2119, %v2121
      %v2123 = vrot.slane %v2109, %v2122
      %v2124 = vcombine.low %v731, %v737
      %v2125 = vcombine.high %v731, %v737
      %v2127 = vunpack.c.l.s4 1983009808
      %v2128 = vunpack.c.0.s8 %v2127
      %v2129 = vlaneseq
      %v2130 = vshrl.u32 %v2129, 7
      %v2131 = vsub.s32 %v2128, %v2130
      %v2132 = vrot.slane %v2124, %v2131
      %v2134 = vunpack.c.l.s4 1983009808
      %v2135 = vunpack.c.0.s8 %v2134
      %v2136 = vlaneseq
      %v2137 = vshrl.u32 %v2136, 7
      %v2138 = vsub.s32 %v2135, %v2137
      %v2139 = vrot.slane %v2125, %v2138
      %v2140 = vcombine.low %v734, %v740
      %v2141 = vcombine.high %v734, %v740
      %v2143 = vunpack.c.l.s4 1983009808
      %v2144 = vunpack.c.0.s8 %v2143
      %v2145 = vlaneseq
      %v2146 = vshrl.u32 %v2145, 7
      %v2147 = vsub.s32 %v2144, %v2146
      %v2148 = vrot.slane %v2140, %v2147
      %v2150 = vunpack.c.l.s4 1983009808
      %v2151 = vunpack.c.0.s8 %v2150
      %v2152 = vlaneseq
      %v2153 = vshrl.u32 %v2152, 7
      %v2154 = vsub.s32 %v2151, %v2153
      %v2155 = vrot.slane %v2141, %v2154
      %v2156 = vcombine.low %v2100, %v2116
      %v2157 = vcombine.high %v2100, %v2116
      %v2159 = vunpack.c.l.s4 1934713408
      %v2160 = vunpack.c.0.s8 %v2159
      %v2161 = vlaneseq
      %v2162 = vshrl.u32 %v2161, 7
      %v2163 = vsub.s32 %v2160, %v2162
      %v2164 = vrot.slane %v2156, %v2163
      %v2166 = vunpack.c.l.s4 1934713408
      %v2167 = vunpack.c.0.s8 %v2166
      %v2168 = vlaneseq
      %v2169 = vshrl.u32 %v2168, 7
      %v2170 = vsub.s32 %v2167, %v2169
      %v2171 = vrot.slane %v2157, %v2170
      %v2172 = vcombine.low %v2107, %v2123
      %v2173 = vcombine.high %v2107, %v2123
      %v2175 = vunpack.c.l.s4 1934713408
      %v2176 = vunpack.c.0.s8 %v2175
      %v2177 = vlaneseq
      %v2178 = vshrl.u32 %v2177, 7
      %v2179 = vsub.s32 %v2176, %v2178
      %v2180 = vrot.slane %v2172, %v2179
      %v2182 = vunpack.c.l.s4 1934713408
      %v2183 = vunpack.c.0.s8 %v2182
      %v2184 = vlaneseq
      %v2185 = vshrl.u32 %v2184, 7
      %v2186 = vsub.s32 %v2183, %v2185
      %v2187 = vrot.slane %v2173, %v2186
      %v2188 = vcombine.low %v2132, %v2148
      %v2189 = vcombine.high %v2132, %v2148
      %v2191 = vunpack.c.l.s4 1934713408
      %v2192 = vunpack.c.0.s8 %v2191
      %v2193 = vlaneseq
      %v2194 = vshrl.u32 %v2193, 7
      %v2195 = vsub.s32 %v2192, %v2194
      %v2196 = vrot.slane %v2188, %v2195
      %v2198 = vunpack.c.l.s4 1934713408
      %v2199 = vunpack.c.0.s8 %v2198
      %v2200 = vlaneseq
      %v2201 = vshrl.u32 %v2200, 7
      %v2202 = vsub.s32 %v2199, %v2201
      %v2203 = vrot.slane %v2189, %v2202
      %v2204 = vcombine.low %v2139, %v2155
      %v2205 = vcombine.high %v2139, %v2155
      %v2207 = vunpack.c.l.s4 1934713408
      %v2208 = vunpack.c.0.s8 %v2207
      %v2209 = vlaneseq
      %v2210 = vshrl.u32 %v2209, 7
      %v2211 = vsub.s32 %v2208, %v2210
      %v2212 = vrot.slane %v2204, %v2211
      %v2214 = vunpack.c.l.s4 1934713408
      %v2215 = vunpack.c.0.s8 %v2214
      %v2216 = vlaneseq
      %v2217 = vshrl.u32 %v2216, 7
      %v2218 = vsub.s32 %v2215, %v2217
      %v2219 = vrot.slane %v2205, %v2218
      %v2220 = vcombine.low %v2164, %v2196
      %v2221 = vcombine.high %v2164, %v2196
      %v2222 = vcombine.low %v2171, %v2203
      %v2223 = vcombine.high %v2171, %v2203
      %v2224 = vcombine.low %v2180, %v2212
      %v2225 = vcombine.high %v2180, %v2212
      %v2226 = vcombine.low %v2187, %v2219
      %v2227 = vcombine.high %v2187, %v2219
      %v2228 = vcombine.low %v501, %v746
      %v2229 = vcombine.high %v501, %v746
      %v2231 = vunpack.c.l.s4 1983009808
      %v2232 = vunpack.c.0.s8 %v2231
      %v2233 = vlaneseq
      %v2234 = vshrl.u32 %v2233, 7
      %v2235 = vsub.s32 %v2232, %v2234
      %v2236 = vrot.slane %v2228, %v2235
      %v2238 = vunpack.c.l.s4 1983009808
      %v2239 = vunpack.c.0.s8 %v2238
      %v2240 = vlaneseq
      %v2241 = vshrl.u32 %v2240, 7
      %v2242 = vsub.s32 %v2239, %v2241
      %v2243 = vrot.slane %v2229, %v2242
      %v2244 = vcombine.low %v743, %v749
      %v2245 = vcombine.high %v743, %v749
      %v2247 = vunpack.c.l.s4 1983009808
      %v2248 = vunpack.c.0.s8 %v2247
      %v2249 = vlaneseq
      %v2250 = vshrl.u32 %v2249, 7
      %v2251 = vsub.s32 %v2248, %v2250
      %v2252 = vrot.slane %v2244, %v2251
      %v2254 = vunpack.c.l.s4 1983009808
      %v2255 = vunpack.c.0.s8 %v2254
      %v2256 = vlaneseq
      %v2257 = vshrl.u32 %v2256, 7
      %v2258 = vsub.s32 %v2255, %v2257
      %v2259 = vrot.slane %v2245, %v2258
      %v2260 = vcombine.low %v752, %v758
      %v2261 = vcombine.high %v752, %v758
      %v2263 = vunpack.c.l.s4 1983009808
      %v2264 = vunpack.c.0.s8 %v2263
      %v2265 = vlaneseq
      %v2266 = vshrl.u32 %v2265, 7
      %v2267 = vsub.s32 %v2264, %v2266
      %v2268 = vrot.slane %v2260, %v2267
      %v2270 = vunpack.c.l.s4 1983009808
      %v2271 = vunpack.c.0.s8 %v2270
      %v2272 = vlaneseq
      %v2273 = vshrl.u32 %v2272, 7
      %v2274 = vsub.s32 %v2271, %v2273
      %v2275 = vrot.slane %v2261, %v2274
      %v2276 = vcombine.low %v755, %v761
      %v2277 = vcombine.high %v755, %v761
      %v2279 = vunpack.c.l.s4 1983009808
      %v2280 = vunpack.c.0.s8 %v2279
      %v2281 = vlaneseq
      %v2282 = vshrl.u32 %v2281, 7
      %v2283 = vsub.s32 %v2280, %v2282
      %v2284 = vrot.slane %v2276, %v2283
      %v2286 = vunpack.c.l.s4 1983009808
      %v2287 = vunpack.c.0.s8 %v2286
      %v2288 = vlaneseq
      %v2289 = vshrl.u32 %v2288, 7
      %v2290 = vsub.s32 %v2287, %v2289
      %v2291 = vrot.slane %v2277, %v2290
      %v2292 = vcombine.low %v2236, %v2252
      %v2293 = vcombine.high %v2236, %v2252
      %v2295 = vunpack.c.l.s4 1934713408
      %v2296 = vunpack.c.0.s8 %v2295
      %v2297 = vlaneseq
      %v2298 = vshrl.u32 %v2297, 7
      %v2299 = vsub.s32 %v2296, %v2298
      %v2300 = vrot.slane %v2292, %v2299
      %v2302 = vunpack.c.l.s4 1934713408
      %v2303 = vunpack.c.0.s8 %v2302
      %v2304 = vlaneseq
      %v2305 = vshrl.u32 %v2304, 7
      %v2306 = vsub.s32 %v2303, %v2305
      %v2307 = vrot.slane %v2293, %v2306
      %v2308 = vcombine.low %v2243, %v2259
      %v2309 = vcombine.high %v2243, %v2259
      %v2311 = vunpack.c.l.s4 1934713408
      %v2312 = vunpack.c.0.s8 %v2311
      %v2313 = vlaneseq
      %v2314 = vshrl.u32 %v2313, 7
      %v2315 = vsub.s32 %v2312, %v2314
      %v2316 = vrot.slane %v2308, %v2315
      %v2318 = vunpack.c.l.s4 1934713408
      %v2319 = vunpack.c.0.s8 %v2318
      %v2320 = vlaneseq
      %v2321 = vshrl.u32 %v2320, 7
      %v2322 = vsub.s32 %v2319, %v2321
      %v2323 = vrot.slane %v2309, %v2322
      %v2324 = vcombine.low %v2268, %v2284
      %v2325 = vcombine.high %v2268, %v2284
      %v2327 = vunpack.c.l.s4 1934713408
      %v2328 = vunpack.c.0.s8 %v2327
      %v2329 = vlaneseq
      %v2330 = vshrl.u32 %v2329, 7
      %v2331 = vsub.s32 %v2328, %v2330
      %v2332 = vrot.slane %v2324, %v2331
      %v2334 = vunpack.c.l.s4 1934713408
      %v2335 = vunpack.c.0.s8 %v2334
      %v2336 = vlaneseq
      %v2337 = vshrl.u32 %v2336, 7
      %v2338 = vsub.s32 %v2335, %v2337
      %v2339 = vrot.slane %v2325, %v2338
      %v2340 = vcombine.low %v2275, %v2291
      %v2341 = vcombine.high %v2275, %v2291
      %v2343 = vunpack.c.l.s4 1934713408
      %v2344 = vunpack.c.0.s8 %v2343
      %v2345 = vlaneseq
      %v2346 = vshrl.u32 %v2345, 7
      %v2347 = vsub.s32 %v2344, %v2346
      %v2348 = vrot.slane %v2340, %v2347
      %v2350 = vunpack.c.l.s4 1934713408
      %v2351 = vunpack.c.0.s8 %v2350
      %v2352 = vlaneseq
      %v2353 = vshrl.u32 %v2352, 7
      %v2354 = vsub.s32 %v2351, %v2353
      %v2355 = vrot.slane %v2341, %v2354
      %v2356 = vcombine.low %v2300, %v2332
      %v2357 = vcombine.high %v2300, %v2332
      %v2358 = vcombine.low %v2307, %v2339
      %v2359 = vcombine.high %v2307, %v2339
      %v2360 = vcombine.low %v2316, %v2348
      %v2361 = vcombine.high %v2316, %v2348
      %v2362 = vcombine.low %v2323, %v2355
      %v2363 = vcombine.high %v2323, %v2355
      %v2364 = vcombine.low %v505, %v767
      %v2365 = vcombine.high %v505, %v767
      %v2367 = vunpack.c.l.s4 1983009808
      %v2368 = vunpack.c.0.s8 %v2367
      %v2369 = vlaneseq
      %v2370 = vshrl.u32 %v2369, 7
      %v2371 = vsub.s32 %v2368, %v2370
      %v2372 = vrot.slane %v2364, %v2371
      %v2374 = vunpack.c.l.s4 1983009808
      %v2375 = vunpack.c.0.s8 %v2374
      %v2376 = vlaneseq
      %v2377 = vshrl.u32 %v2376, 7
      %v2378 = vsub.s32 %v2375, %v2377
      %v2379 = vrot.slane %v2365, %v2378
      %v2380 = vcombine.low %v764, %v770
      %v2381 = vcombine.high %v764, %v770
      %v2383 = vunpack.c.l.s4 1983009808
      %v2384 = vunpack.c.0.s8 %v2383
      %v2385 = vlaneseq
      %v2386 = vshrl.u32 %v2385, 7
      %v2387 = vsub.s32 %v2384, %v2386
      %v2388 = vrot.slane %v2380, %v2387
      %v2390 = vunpack.c.l.s4 1983009808
      %v2391 = vunpack.c.0.s8 %v2390
      %v2392 = vlaneseq
      %v2393 = vshrl.u32 %v2392, 7
      %v2394 = vsub.s32 %v2391, %v2393
      %v2395 = vrot.slane %v2381, %v2394
      %v2396 = vcombine.low %v773, %v779
      %v2397 = vcombine.high %v773, %v779
      %v2399 = vunpack.c.l.s4 1983009808
      %v2400 = vunpack.c.0.s8 %v2399
      %v2401 = vlaneseq
      %v2402 = vshrl.u32 %v2401, 7
      %v2403 = vsub.s32 %v2400, %v2402
      %v2404 = vrot.slane %v2396, %v2403
      %v2406 = vunpack.c.l.s4 1983009808
      %v2407 = vunpack.c.0.s8 %v2406
      %v2408 = vlaneseq
      %v2409 = vshrl.u32 %v2408, 7
      %v2410 = vsub.s32 %v2407, %v2409
      %v2411 = vrot.slane %v2397, %v2410
      %v2412 = vcombine.low %v776, %v782
      %v2413 = vcombine.high %v776, %v782
      %v2415 = vunpack.c.l.s4 1983009808
      %v2416 = vunpack.c.0.s8 %v2415
      %v2417 = vlaneseq
      %v2418 = vshrl.u32 %v2417, 7
      %v2419 = vsub.s32 %v2416, %v2418
      %v2420 = vrot.slane %v2412, %v2419
      %v2422 = vunpack.c.l.s4 1983009808
      %v2423 = vunpack.c.0.s8 %v2422
      %v2424 = vlaneseq
      %v2425 = vshrl.u32 %v2424, 7
      %v2426 = vsub.s32 %v2423, %v2425
      %v2427 = vrot.slane %v2413, %v2426
      %v2428 = vcombine.low %v2372, %v2388
      %v2429 = vcombine.high %v2372, %v2388
      %v2431 = vunpack.c.l.s4 1934713408
      %v2432 = vunpack.c.0.s8 %v2431
      %v2433 = vlaneseq
      %v2434 = vshrl.u32 %v2433, 7
      %v2435 = vsub.s32 %v2432, %v2434
      %v2436 = vrot.slane %v2428, %v2435
      %v2438 = vunpack.c.l.s4 1934713408
      %v2439 = vunpack.c.0.s8 %v2438
      %v2440 = vlaneseq
      %v2441 = vshrl.u32 %v2440, 7
      %v2442 = vsub.s32 %v2439, %v2441
      %v2443 = vrot.slane %v2429, %v2442
      %v2444 = vcombine.low %v2379, %v2395
      %v2445 = vcombine.high %v2379, %v2395
      %v2447 = vunpack.c.l.s4 1934713408
      %v2448 = vunpack.c.0.s8 %v2447
      %v2449 = vlaneseq
      %v2450 = vshrl.u32 %v2449, 7
      %v2451 = vsub.s32 %v2448, %v2450
      %v2452 = vrot.slane %v2444, %v2451
      %v2454 = vunpack.c.l.s4 1934713408
      %v2455 = vunpack.c.0.s8 %v2454
      %v2456 = vlaneseq
      %v2457 = vshrl.u32 %v2456, 7
      %v2458 = vsub.s32 %v2455, %v2457
      %v2459 = vrot.slane %v2445, %v2458
      %v2460 = vcombine.low %v2404, %v2420
      %v2461 = vcombine.high %v2404, %v2420
      %v2463 = vunpack.c.l.s4 1934713408
      %v2464 = vunpack.c.0.s8 %v2463
      %v2465 = vlaneseq
      %v2466 = vshrl.u32 %v2465, 7
      %v2467 = vsub.s32 %v2464, %v2466
      %v2468 = vrot.slane %v2460, %v2467
      %v2470 = vunpack.c.l.s4 1934713408
      %v2471 = vunpack.c.0.s8 %v2470
      %v2472 = vlaneseq
      %v2473 = vshrl.u32 %v2472, 7
      %v2474 = vsub.s32 %v2471, %v2473
      %v2475 = vrot.slane %v2461, %v2474
      %v2476 = vcombine.low %v2411, %v2427
      %v2477 = vcombine.high %v2411, %v2427
      %v2479 = vunpack.c.l.s4 1934713408
      %v2480 = vunpack.c.0.s8 %v2479
      %v2481 = vlaneseq
      %v2482 = vshrl.u32 %v2481, 7
      %v2483 = vsub.s32 %v2480, %v2482
      %v2484 = vrot.slane %v2476, %v2483
      %v2486 = vunpack.c.l.s4 1934713408
      %v2487 = vunpack.c.0.s8 %v2486
      %v2488 = vlaneseq
      %v2489 = vshrl.u32 %v2488, 7
      %v2490 = vsub.s32 %v2487, %v2489
      %v2491 = vrot.slane %v2477, %v2490
      %v2492 = vcombine.low %v2436, %v2468
      %v2493 = vcombine.high %v2436, %v2468
      %v2494 = vcombine.low %v2443, %v2475
      %v2495 = vcombine.high %v2443, %v2475
      %v2496 = vcombine.low %v2452, %v2484
      %v2497 = vcombine.high %v2452, %v2484
      %v2498 = vcombine.low %v2459, %v2491
      %v2499 = vcombine.high %v2459, %v2491
      %v2500 = vcombine.low %v509, %v788
      %v2501 = vcombine.high %v509, %v788
      %v2503 = vunpack.c.l.s4 1983009808
      %v2504 = vunpack.c.0.s8 %v2503
      %v2505 = vlaneseq
      %v2506 = vshrl.u32 %v2505, 7
      %v2507 = vsub.s32 %v2504, %v2506
      %v2508 = vrot.slane %v2500, %v2507
      %v2510 = vunpack.c.l.s4 1983009808
      %v2511 = vunpack.c.0.s8 %v2510
      %v2512 = vlaneseq
      %v2513 = vshrl.u32 %v2512, 7
      %v2514 = vsub.s32 %v2511, %v2513
      %v2515 = vrot.slane %v2501, %v2514
      %v2516 = vcombine.low %v785, %v791
      %v2517 = vcombine.high %v785, %v791
      %v2519 = vunpack.c.l.s4 1983009808
      %v2520 = vunpack.c.0.s8 %v2519
      %v2521 = vlaneseq
      %v2522 = vshrl.u32 %v2521, 7
      %v2523 = vsub.s32 %v2520, %v2522
      %v2524 = vrot.slane %v2516, %v2523
      %v2526 = vunpack.c.l.s4 1983009808
      %v2527 = vunpack.c.0.s8 %v2526
      %v2528 = vlaneseq
      %v2529 = vshrl.u32 %v2528, 7
      %v2530 = vsub.s32 %v2527, %v2529
      %v2531 = vrot.slane %v2517, %v2530
      %v2532 = vcombine.low %v794, %v800
      %v2533 = vcombine.high %v794, %v800
      %v2535 = vunpack.c.l.s4 1983009808
      %v2536 = vunpack.c.0.s8 %v2535
      %v2537 = vlaneseq
      %v2538 = vshrl.u32 %v2537, 7
      %v2539 = vsub.s32 %v2536, %v2538
      %v2540 = vrot.slane %v2532, %v2539
      %v2542 = vunpack.c.l.s4 1983009808
      %v2543 = vunpack.c.0.s8 %v2542
      %v2544 = vlaneseq
      %v2545 = vshrl.u32 %v2544, 7
      %v2546 = vsub.s32 %v2543, %v2545
      %v2547 = vrot.slane %v2533, %v2546
      %v2548 = vcombine.low %v797, %v803
      %v2549 = vcombine.high %v797, %v803
      %v2551 = vunpack.c.l.s4 1983009808
      %v2552 = vunpack.c.0.s8 %v2551
      %v2553 = vlaneseq
      %v2554 = vshrl.u32 %v2553, 7
      %v2555 = vsub.s32 %v2552, %v2554
      %v2556 = vrot.slane %v2548, %v2555
      %v2558 = vunpack.c.l.s4 1983009808
      %v2559 = vunpack.c.0.s8 %v2558
      %v2560 = vlaneseq
      %v2561 = vshrl.u32 %v2560, 7
      %v2562 = vsub.s32 %v2559, %v2561
      %v2563 = vrot.slane %v2549, %v2562
      %v2564 = vcombine.low %v2508, %v2524
      %v2565 = vcombine.high %v2508, %v2524
      %v2567 = vunpack.c.l.s4 1934713408
      %v2568 = vunpack.c.0.s8 %v2567
      %v2569 = vlaneseq
      %v2570 = vshrl.u32 %v2569, 7
      %v2571 = vsub.s32 %v2568, %v2570
      %v2572 = vrot.slane %v2564, %v2571
      %v2574 = vunpack.c.l.s4 1934713408
      %v2575 = vunpack.c.0.s8 %v2574
      %v2576 = vlaneseq
      %v2577 = vshrl.u32 %v2576, 7
      %v2578 = vsub.s32 %v2575, %v2577
      %v2579 = vrot.slane %v2565, %v2578
      %v2580 = vcombine.low %v2515, %v2531
      %v2581 = vcombine.high %v2515, %v2531
      %v2583 = vunpack.c.l.s4 1934713408
      %v2584 = vunpack.c.0.s8 %v2583
      %v2585 = vlaneseq
      %v2586 = vshrl.u32 %v2585, 7
      %v2587 = vsub.s32 %v2584, %v2586
      %v2588 = vrot.slane %v2580, %v2587
      %v2590 = vunpack.c.l.s4 1934713408
      %v2591 = vunpack.c.0.s8 %v2590
      %v2592 = vlaneseq
      %v2593 = vshrl.u32 %v2592, 7
      %v2594 = vsub.s32 %v2591, %v2593
      %v2595 = vrot.slane %v2581, %v2594
      %v2596 = vcombine.low %v2540, %v2556
      %v2597 = vcombine.high %v2540, %v2556
      %v2599 = vunpack.c.l.s4 1934713408
      %v2600 = vunpack.c.0.s8 %v2599
      %v2601 = vlaneseq
      %v2602 = vshrl.u32 %v2601, 7
      %v2603 = vsub.s32 %v2600, %v2602
      %v2604 = vrot.slane %v2596, %v2603
      %v2606 = vunpack.c.l.s4 1934713408
      %v2607 = vunpack.c.0.s8 %v2606
      %v2608 = vlaneseq
      %v2609 = vshrl.u32 %v2608, 7
      %v2610 = vsub.s32 %v2607, %v2609
      %v2611 = vrot.slane %v2597, %v2610
      %v2612 = vcombine.low %v2547, %v2563
      %v2613 = vcombine.high %v2547, %v2563
      %v2615 = vunpack.c.l.s4 1934713408
      %v2616 = vunpack.c.0.s8 %v2615
      %v2617 = vlaneseq
      %v2618 = vshrl.u32 %v2617, 7
      %v2619 = vsub.s32 %v2616, %v2618
      %v2620 = vrot.slane %v2612, %v2619
      %v2622 = vunpack.c.l.s4 1934713408
      %v2623 = vunpack.c.0.s8 %v2622
      %v2624 = vlaneseq
      %v2625 = vshrl.u32 %v2624, 7
      %v2626 = vsub.s32 %v2623, %v2625
      %v2627 = vrot.slane %v2613, %v2626
      %v2628 = vcombine.low %v2572, %v2604
      %v2629 = vcombine.high %v2572, %v2604
      %v2630 = vcombine.low %v2579, %v2611
      %v2631 = vcombine.high %v2579, %v2611
      %v2632 = vcombine.low %v2588, %v2620
      %v2633 = vcombine.high %v2588, %v2620
      %v2634 = vcombine.low %v2595, %v2627
      %v2635 = vcombine.high %v2595, %v2627
      %v2636 = vcombine.low %v513, %v809
      %v2637 = vcombine.high %v513, %v809
      %v2639 = vunpack.c.l.s4 1983009808
      %v2640 = vunpack.c.0.s8 %v2639
      %v2641 = vlaneseq
      %v2642 = vshrl.u32 %v2641, 7
      %v2643 = vsub.s32 %v2640, %v2642
      %v2644 = vrot.slane %v2636, %v2643
      %v2646 = vunpack.c.l.s4 1983009808
      %v2647 = vunpack.c.0.s8 %v2646
      %v2648 = vlaneseq
      %v2649 = vshrl.u32 %v2648, 7
      %v2650 = vsub.s32 %v2647, %v2649
      %v2651 = vrot.slane %v2637, %v2650
      %v2652 = vcombine.low %v806, %v812
      %v2653 = vcombine.high %v806, %v812
      %v2655 = vunpack.c.l.s4 1983009808
      %v2656 = vunpack.c.0.s8 %v2655
      %v2657 = vlaneseq
      %v2658 = vshrl.u32 %v2657, 7
      %v2659 = vsub.s32 %v2656, %v2658
      %v2660 = vrot.slane %v2652, %v2659
      %v2662 = vunpack.c.l.s4 1983009808
      %v2663 = vunpack.c.0.s8 %v2662
      %v2664 = vlaneseq
      %v2665 = vshrl.u32 %v2664, 7
      %v2666 = vsub.s32 %v2663, %v2665
      %v2667 = vrot.slane %v2653, %v2666
      %v2668 = vcombine.low %v815, %v821
      %v2669 = vcombine.high %v815, %v821
      %v2671 = vunpack.c.l.s4 1983009808
      %v2672 = vunpack.c.0.s8 %v2671
      %v2673 = vlaneseq
      %v2674 = vshrl.u32 %v2673, 7
      %v2675 = vsub.s32 %v2672, %v2674
      %v2676 = vrot.slane %v2668, %v2675
      %v2678 = vunpack.c.l.s4 1983009808
      %v2679 = vunpack.c.0.s8 %v2678
      %v2680 = vlaneseq
      %v2681 = vshrl.u32 %v2680, 7
      %v2682 = vsub.s32 %v2679, %v2681
      %v2683 = vrot.slane %v2669, %v2682
      %v2684 = vcombine.low %v818, %v824
      %v2685 = vcombine.high %v818, %v824
      %v2687 = vunpack.c.l.s4 1983009808
      %v2688 = vunpack.c.0.s8 %v2687
      %v2689 = vlaneseq
      %v2690 = vshrl.u32 %v2689, 7
      %v2691 = vsub.s32 %v2688, %v2690
      %v2692 = vrot.slane %v2684, %v2691
      %v2694 = vunpack.c.l.s4 1983009808
      %v2695 = vunpack.c.0.s8 %v2694
      %v2696 = vlaneseq
      %v2697 = vshrl.u32 %v2696, 7
      %v2698 = vsub.s32 %v2695, %v2697
      %v2699 = vrot.slane %v2685, %v2698
      %v2700 = vcombine.low %v2644, %v2660
      %v2701 = vcombine.high %v2644, %v2660
      %v2703 = vunpack.c.l.s4 1934713408
      %v2704 = vunpack.c.0.s8 %v2703
      %v2705 = vlaneseq
      %v2706 = vshrl.u32 %v2705, 7
      %v2707 = vsub.s32 %v2704, %v2706
      %v2708 = vrot.slane %v2700, %v2707
      %v2710 = vunpack.c.l.s4 1934713408
      %v2711 = vunpack.c.0.s8 %v2710
      %v2712 = vlaneseq
      %v2713 = vshrl.u32 %v2712, 7
      %v2714 = vsub.s32 %v2711, %v2713
      %v2715 = vrot.slane %v2701, %v2714
      %v2716 = vcombine.low %v2651, %v2667
      %v2717 = vcombine.high %v2651, %v2667
      %v2719 = vunpack.c.l.s4 1934713408
      %v2720 = vunpack.c.0.s8 %v2719
      %v2721 = vlaneseq
      %v2722 = vshrl.u32 %v2721, 7
      %v2723 = vsub.s32 %v2720, %v2722
      %v2724 = vrot.slane %v2716, %v2723
      %v2726 = vunpack.c.l.s4 1934713408
      %v2727 = vunpack.c.0.s8 %v2726
      %v2728 = vlaneseq
      %v2729 = vshrl.u32 %v2728, 7
      %v2730 = vsub.s32 %v2727, %v2729
      %v2731 = vrot.slane %v2717, %v2730
      %v2732 = vcombine.low %v2676, %v2692
      %v2733 = vcombine.high %v2676, %v2692
      %v2735 = vunpack.c.l.s4 1934713408
      %v2736 = vunpack.c.0.s8 %v2735
      %v2737 = vlaneseq
      %v2738 = vshrl.u32 %v2737, 7
      %v2739 = vsub.s32 %v2736, %v2738
      %v2740 = vrot.slane %v2732, %v2739
      %v2742 = vunpack.c.l.s4 1934713408
      %v2743 = vunpack.c.0.s8 %v2742
      %v2744 = vlaneseq
      %v2745 = vshrl.u32 %v2744, 7
      %v2746 = vsub.s32 %v2743, %v2745
      %v2747 = vrot.slane %v2733, %v2746
      %v2748 = vcombine.low %v2683, %v2699
      %v2749 = vcombine.high %v2683, %v2699
      %v2751 = vunpack.c.l.s4 1934713408
      %v2752 = vunpack.c.0.s8 %v2751
      %v2753 = vlaneseq
      %v2754 = vshrl.u32 %v2753, 7
      %v2755 = vsub.s32 %v2752, %v2754
      %v2756 = vrot.slane %v2748, %v2755
      %v2758 = vunpack.c.l.s4 1934713408
      %v2759 = vunpack.c.0.s8 %v2758
      %v2760 = vlaneseq
      %v2761 = vshrl.u32 %v2760, 7
      %v2762 = vsub.s32 %v2759, %v2761
      %v2763 = vrot.slane %v2749, %v2762
      %v2764 = vcombine.low %v2708, %v2740
      %v2765 = vcombine.high %v2708, %v2740
      %v2766 = vcombine.low %v2715, %v2747
      %v2767 = vcombine.high %v2715, %v2747
      %v2768 = vcombine.low %v2724, %v2756
      %v2769 = vcombine.high %v2724, %v2756
      %v2770 = vcombine.low %v2731, %v2763
      %v2771 = vcombine.high %v2731, %v2763
      %v2772 = vcombine.low %v517, %v830
      %v2773 = vcombine.high %v517, %v830
      %v2775 = vunpack.c.l.s4 1983009808
      %v2776 = vunpack.c.0.s8 %v2775
      %v2777 = vlaneseq
      %v2778 = vshrl.u32 %v2777, 7
      %v2779 = vsub.s32 %v2776, %v2778
      %v2780 = vrot.slane %v2772, %v2779
      %v2782 = vunpack.c.l.s4 1983009808
      %v2783 = vunpack.c.0.s8 %v2782
      %v2784 = vlaneseq
      %v2785 = vshrl.u32 %v2784, 7
      %v2786 = vsub.s32 %v2783, %v2785
      %v2787 = vrot.slane %v2773, %v2786
      %v2788 = vcombine.low %v827, %v833
      %v2789 = vcombine.high %v827, %v833
      %v2791 = vunpack.c.l.s4 1983009808
      %v2792 = vunpack.c.0.s8 %v2791
      %v2793 = vlaneseq
      %v2794 = vshrl.u32 %v2793, 7
      %v2795 = vsub.s32 %v2792, %v2794
      %v2796 = vrot.slane %v2788, %v2795
      %v2798 = vunpack.c.l.s4 1983009808
      %v2799 = vunpack.c.0.s8 %v2798
      %v2800 = vlaneseq
      %v2801 = vshrl.u32 %v2800, 7
      %v2802 = vsub.s32 %v2799, %v2801
      %v2803 = vrot.slane %v2789, %v2802
      %v2804 = vcombine.low %v836, %v842
      %v2805 = vcombine.high %v836, %v842
      %v2807 = vunpack.c.l.s4 1983009808
      %v2808 = vunpack.c.0.s8 %v2807
      %v2809 = vlaneseq
      %v2810 = vshrl.u32 %v2809, 7
      %v2811 = vsub.s32 %v2808, %v2810
      %v2812 = vrot.slane %v2804, %v2811
      %v2814 = vunpack.c.l.s4 1983009808
      %v2815 = vunpack.c.0.s8 %v2814
      %v2816 = vlaneseq
      %v2817 = vshrl.u32 %v2816, 7
      %v2818 = vsub.s32 %v2815, %v2817
      %v2819 = vrot.slane %v2805, %v2818
      %v2820 = vcombine.low %v839, %v845
      %v2821 = vcombine.high %v839, %v845
      %v2823 = vunpack.c.l.s4 1983009808
      %v2824 = vunpack.c.0.s8 %v2823
      %v2825 = vlaneseq
      %v2826 = vshrl.u32 %v2825, 7
      %v2827 = vsub.s32 %v2824, %v2826
      %v2828 = vrot.slane %v2820, %v2827
      %v2830 = vunpack.c.l.s4 1983009808
      %v2831 = vunpack.c.0.s8 %v2830
      %v2832 = vlaneseq
      %v2833 = vshrl.u32 %v2832, 7
      %v2834 = vsub.s32 %v2831, %v2833
      %v2835 = vrot.slane %v2821, %v2834
      %v2836 = vcombine.low %v2780, %v2796
      %v2837 = vcombine.high %v2780, %v2796
      %v2839 = vunpack.c.l.s4 1934713408
      %v2840 = vunpack.c.0.s8 %v2839
      %v2841 = vlaneseq
      %v2842 = vshrl.u32 %v2841, 7
      %v2843 = vsub.s32 %v2840, %v2842
      %v2844 = vrot.slane %v2836, %v2843
      %v2846 = vunpack.c.l.s4 1934713408
      %v2847 = vunpack.c.0.s8 %v2846
      %v2848 = vlaneseq
      %v2849 = vshrl.u32 %v2848, 7
      %v2850 = vsub.s32 %v2847, %v2849
      %v2851 = vrot.slane %v2837, %v2850
      %v2852 = vcombine.low %v2787, %v2803
      %v2853 = vcombine.high %v2787, %v2803
      %v2855 = vunpack.c.l.s4 1934713408
      %v2856 = vunpack.c.0.s8 %v2855
      %v2857 = vlaneseq
      %v2858 = vshrl.u32 %v2857, 7
      %v2859 = vsub.s32 %v2856, %v2858
      %v2860 = vrot.slane %v2852, %v2859
      %v2862 = vunpack.c.l.s4 1934713408
      %v2863 = vunpack.c.0.s8 %v2862
      %v2864 = vlaneseq
      %v2865 = vshrl.u32 %v2864, 7
      %v2866 = vsub.s32 %v2863, %v2865
      %v2867 = vrot.slane %v2853, %v2866
      %v2868 = vcombine.low %v2812, %v2828
      %v2869 = vcombine.high %v2812, %v2828
      %v2871 = vunpack.c.l.s4 1934713408
      %v2872 = vunpack.c.0.s8 %v2871
      %v2873 = vlaneseq
      %v2874 = vshrl.u32 %v2873, 7
      %v2875 = vsub.s32 %v2872, %v2874
      %v2876 = vrot.slane %v2868, %v2875
      %v2878 = vunpack.c.l.s4 1934713408
      %v2879 = vunpack.c.0.s8 %v2878
      %v2880 = vlaneseq
      %v2881 = vshrl.u32 %v2880, 7
      %v2882 = vsub.s32 %v2879, %v2881
      %v2883 = vrot.slane %v2869, %v2882
      %v2884 = vcombine.low %v2819, %v2835
      %v2885 = vcombine.high %v2819, %v2835
      %v2887 = vunpack.c.l.s4 1934713408
      %v2888 = vunpack.c.0.s8 %v2887
      %v2889 = vlaneseq
      %v2890 = vshrl.u32 %v2889, 7
      %v2891 = vsub.s32 %v2888, %v2890
      %v2892 = vrot.slane %v2884, %v2891
      %v2894 = vunpack.c.l.s4 1934713408
      %v2895 = vunpack.c.0.s8 %v2894
      %v2896 = vlaneseq
      %v2897 = vshrl.u32 %v2896, 7
      %v2898 = vsub.s32 %v2895, %v2897
      %v2899 = vrot.slane %v2885, %v2898
      %v2900 = vcombine.low %v2844, %v2876
      %v2901 = vcombine.high %v2844, %v2876
      %v2902 = vcombine.low %v2851, %v2883
      %v2903 = vcombine.high %v2851, %v2883
      %v2904 = vcombine.low %v2860, %v2892
      %v2905 = vcombine.high %v2860, %v2892
      %v2906 = vcombine.low %v2867, %v2899
      %v2907 = vcombine.high %v2867, %v2899
      %v2908 = vcombine.low %v521, %v851
      %v2909 = vcombine.high %v521, %v851
      %v2911 = vunpack.c.l.s4 1983009808
      %v2912 = vunpack.c.0.s8 %v2911
      %v2913 = vlaneseq
      %v2914 = vshrl.u32 %v2913, 7
      %v2915 = vsub.s32 %v2912, %v2914
      %v2916 = vrot.slane %v2908, %v2915
      %v2918 = vunpack.c.l.s4 1983009808
      %v2919 = vunpack.c.0.s8 %v2918
      %v2920 = vlaneseq
      %v2921 = vshrl.u32 %v2920, 7
      %v2922 = vsub.s32 %v2919, %v2921
      %v2923 = vrot.slane %v2909, %v2922
      %v2924 = vcombine.low %v848, %v854
      %v2925 = vcombine.high %v848, %v854
      %v2927 = vunpack.c.l.s4 1983009808
      %v2928 = vunpack.c.0.s8 %v2927
      %v2929 = vlaneseq
      %v2930 = vshrl.u32 %v2929, 7
      %v2931 = vsub.s32 %v2928, %v2930
      %v2932 = vrot.slane %v2924, %v2931
      %v2934 = vunpack.c.l.s4 1983009808
      %v2935 = vunpack.c.0.s8 %v2934
      %v2936 = vlaneseq
      %v2937 = vshrl.u32 %v2936, 7
      %v2938 = vsub.s32 %v2935, %v2937
      %v2939 = vrot.slane %v2925, %v2938
      %v2940 = vcombine.low %v857, %v863
      %v2941 = vcombine.high %v857, %v863
      %v2943 = vunpack.c.l.s4 1983009808
      %v2944 = vunpack.c.0.s8 %v2943
      %v2945 = vlaneseq
      %v2946 = vshrl.u32 %v2945, 7
      %v2947 = vsub.s32 %v2944, %v2946
      %v2948 = vrot.slane %v2940, %v2947
      %v2950 = vunpack.c.l.s4 1983009808
      %v2951 = vunpack.c.0.s8 %v2950
      %v2952 = vlaneseq
      %v2953 = vshrl.u32 %v2952, 7
      %v2954 = vsub.s32 %v2951, %v2953
      %v2955 = vrot.slane %v2941, %v2954
      %v2956 = vcombine.low %v860, %v866
      %v2957 = vcombine.high %v860, %v866
      %v2959 = vunpack.c.l.s4 1983009808
      %v2960 = vunpack.c.0.s8 %v2959
      %v2961 = vlaneseq
      %v2962 = vshrl.u32 %v2961, 7
      %v2963 = vsub.s32 %v2960, %v2962
      %v2964 = vrot.slane %v2956, %v2963
      %v2966 = vunpack.c.l.s4 1983009808
      %v2967 = vunpack.c.0.s8 %v2966
      %v2968 = vlaneseq
      %v2969 = vshrl.u32 %v2968, 7
      %v2970 = vsub.s32 %v2967, %v2969
      %v2971 = vrot.slane %v2957, %v2970
      %v2972 = vcombine.low %v2916, %v2932
      %v2973 = vcombine.high %v2916, %v2932
      %v2975 = vunpack.c.l.s4 1934713408
      %v2976 = vunpack.c.0.s8 %v2975
      %v2977 = vlaneseq
      %v2978 = vshrl.u32 %v2977, 7
      %v2979 = vsub.s32 %v2976, %v2978
      %v2980 = vrot.slane %v2972, %v2979
      %v2982 = vunpack.c.l.s4 1934713408
      %v2983 = vunpack.c.0.s8 %v2982
      %v2984 = vlaneseq
      %v2985 = vshrl.u32 %v2984, 7
      %v2986 = vsub.s32 %v2983, %v2985
      %v2987 = vrot.slane %v2973, %v2986
      %v2988 = vcombine.low %v2923, %v2939
      %v2989 = vcombine.high %v2923, %v2939
      %v2991 = vunpack.c.l.s4 1934713408
      %v2992 = vunpack.c.0.s8 %v2991
      %v2993 = vlaneseq
      %v2994 = vshrl.u32 %v2993, 7
      %v2995 = vsub.s32 %v2992, %v2994
      %v2996 = vrot.slane %v2988, %v2995
      %v2998 = vunpack.c.l.s4 1934713408
      %v2999 = vunpack.c.0.s8 %v2998
      %v3000 = vlaneseq
      %v3001 = vshrl.u32 %v3000, 7
      %v3002 = vsub.s32 %v2999, %v3001
      %v3003 = vrot.slane %v2989, %v3002
      %v3004 = vcombine.low %v2948, %v2964
      %v3005 = vcombine.high %v2948, %v2964
      %v3007 = vunpack.c.l.s4 1934713408
      %v3008 = vunpack.c.0.s8 %v3007
      %v3009 = vlaneseq
      %v3010 = vshrl.u32 %v3009, 7
      %v3011 = vsub.s32 %v3008, %v3010
      %v3012 = vrot.slane %v3004, %v3011
      %v3014 = vunpack.c.l.s4 1934713408
      %v3015 = vunpack.c.0.s8 %v3014
      %v3016 = vlaneseq
      %v3017 = vshrl.u32 %v3016, 7
      %v3018 = vsub.s32 %v3015, %v3017
      %v3019 = vrot.slane %v3005, %v3018
      %v3020 = vcombine.low %v2955, %v2971
      %v3021 = vcombine.high %v2955, %v2971
      %v3023 = vunpack.c.l.s4 1934713408
      %v3024 = vunpack.c.0.s8 %v3023
      %v3025 = vlaneseq
      %v3026 = vshrl.u32 %v3025, 7
      %v3027 = vsub.s32 %v3024, %v3026
      %v3028 = vrot.slane %v3020, %v3027
      %v3030 = vunpack.c.l.s4 1934713408
      %v3031 = vunpack.c.0.s8 %v3030
      %v3032 = vlaneseq
      %v3033 = vshrl.u32 %v3032, 7
      %v3034 = vsub.s32 %v3031, %v3033
      %v3035 = vrot.slane %v3021, %v3034
      %v3036 = vcombine.low %v2980, %v3012
      %v3037 = vcombine.high %v2980, %v3012
      %v3038 = vcombine.low %v2987, %v3019
      %v3039 = vcombine.high %v2987, %v3019
      %v3040 = vcombine.low %v2996, %v3028
      %v3041 = vcombine.high %v2996, %v3028
      %v3042 = vcombine.low %v3003, %v3035
      %v3043 = vcombine.high %v3003, %v3035
      %vm3044 = vcmask 15360
      %v3045 = vsel %vm3044, %v996, -inf
      %3046 = vmax.xlane.f32.xlu0 %v3045
      %v3047 = vpop.xlane.xlu0 %3046
      %v3048 = vsel %vm3044, %v1132, -inf
      %3049 = vmax.xlane.f32.xlu0 %v3048
      %v3050 = vpop.xlane.xlu0 %3049
      %v3051 = vsel %vm3044, %v1268, -inf
      %3052 = vmax.xlane.f32.xlu0 %v3051
      %v3053 = vpop.xlane.xlu0 %3052
      %v3054 = vsel %vm3044, %v1404, -inf
      %3055 = vmax.xlane.f32.xlu0 %v3054
      %v3056 = vpop.xlane.xlu0 %3055
      %v3057 = vsel %vm3044, %v1540, -inf
      %3058 = vmax.xlane.f32.xlu0 %v3057
      %v3059 = vpop.xlane.xlu0 %3058
      %v3060 = vsel %vm3044, %v1676, -inf
      %3061 = vmax.xlane.f32.xlu0 %v3060
      %v3062 = vpop.xlane.xlu0 %3061
      %v3063 = vsel %vm3044, %v1812, -inf
      %3064 = vmax.xlane.f32.xlu0 %v3063
      %v3065 = vpop.xlane.xlu0 %3064
      %v3066 = vsel %vm3044, %v1948, -inf
      %3067 = vmax.xlane.f32.xlu0 %v3066
      %v3068 = vpop.xlane.xlu0 %3067
      %v3069 = vsel %vm3044, %v2084, -inf
      %3070 = vmax.xlane.f32.xlu0 %v3069
      %v3071 = vpop.xlane.xlu0 %3070
      %v3072 = vsel %vm3044, %v2220, -inf
      %3073 = vmax.xlane.f32.xlu0 %v3072
      %v3074 = vpop.xlane.xlu0 %3073
      %v3075 = vsel %vm3044, %v2356, -inf
      %3076 = vmax.xlane.f32.xlu0 %v3075
      %v3077 = vpop.xlane.xlu0 %3076
      %v3078 = vsel %vm3044, %v2492, -inf
      %3079 = vmax.xlane.f32.xlu0 %v3078
      %v3080 = vpop.xlane.xlu0 %3079
      %v3081 = vsel %vm3044, %v2628, -inf
      %3082 = vmax.xlane.f32.xlu0 %v3081
      %v3083 = vpop.xlane.xlu0 %3082
      %v3084 = vsel %vm3044, %v2764, -inf
      %3085 = vmax.xlane.f32.xlu0 %v3084
      %v3086 = vpop.xlane.xlu0 %3085
      %v3087 = vsel %vm3044, %v2900, -inf
      %3088 = vmax.xlane.f32.xlu0 %v3087
      %v3089 = vpop.xlane.xlu0 %3088
      %v3090 = vsel %vm3044, %v3036, -inf
      %3091 = vmax.xlane.f32.xlu0 %v3090
      %v3092 = vpop.xlane.xlu0 %3091
      %v3093 = vsel %vm3044, %v997, -inf
      %3094 = vmax.xlane.f32.xlu0 %v3093
      %v3095 = vpop.xlane.xlu0 %3094
      %v3096 = vsel %vm3044, %v1133, -inf
      %3097 = vmax.xlane.f32.xlu0 %v3096
      %v3098 = vpop.xlane.xlu0 %3097
      %v3099 = vsel %vm3044, %v1269, -inf
      %3100 = vmax.xlane.f32.xlu0 %v3099
      %v3101 = vpop.xlane.xlu0 %3100
      %v3102 = vsel %vm3044, %v1405, -inf
      %3103 = vmax.xlane.f32.xlu0 %v3102
      %v3104 = vpop.xlane.xlu0 %3103
      %v3105 = vsel %vm3044, %v1541, -inf
      %3106 = vmax.xlane.f32.xlu0 %v3105
      %v3107 = vpop.xlane.xlu0 %3106
      %v3108 = vsel %vm3044, %v1677, -inf
      %3109 = vmax.xlane.f32.xlu0 %v3108
      %v3110 = vpop.xlane.xlu0 %3109
      %v3111 = vsel %vm3044, %v1813, -inf
      %3112 = vmax.xlane.f32.xlu0 %v3111
      %v3113 = vpop.xlane.xlu0 %3112
      %v3114 = vsel %vm3044, %v1949, -inf
      %3115 = vmax.xlane.f32.xlu0 %v3114
      %v3116 = vpop.xlane.xlu0 %3115
      %v3117 = vsel %vm3044, %v2085, -inf
      %3118 = vmax.xlane.f32.xlu0 %v3117
      %v3119 = vpop.xlane.xlu0 %3118
      %v3120 = vsel %vm3044, %v2221, -inf
      %3121 = vmax.xlane.f32.xlu0 %v3120
      %v3122 = vpop.xlane.xlu0 %3121
      %v3123 = vsel %vm3044, %v2357, -inf
      %3124 = vmax.xlane.f32.xlu0 %v3123
      %v3125 = vpop.xlane.xlu0 %3124
      %v3126 = vsel %vm3044, %v2493, -inf
      %3127 = vmax.xlane.f32.xlu0 %v3126
      %v3128 = vpop.xlane.xlu0 %3127
      %v3129 = vsel %vm3044, %v2629, -inf
      %3130 = vmax.xlane.f32.xlu0 %v3129
      %v3131 = vpop.xlane.xlu0 %3130
      %v3132 = vsel %vm3044, %v2765, -inf
      %3133 = vmax.xlane.f32.xlu0 %v3132
      %v3134 = vpop.xlane.xlu0 %3133
      %v3135 = vsel %vm3044, %v2901, -inf
      %3136 = vmax.xlane.f32.xlu0 %v3135
      %v3137 = vpop.xlane.xlu0 %3136
      %v3138 = vsel %vm3044, %v3037, -inf
      %3139 = vmax.xlane.f32.xlu0 %v3138
      %v3140 = vpop.xlane.xlu0 %3139
      %v3141 = vsel %vm3044, %v998, -inf
      %3142 = vmax.xlane.f32.xlu0 %v3141
      %v3143 = vpop.xlane.xlu0 %3142
      %v3144 = vsel %vm3044, %v1134, -inf
      %3145 = vmax.xlane.f32.xlu0 %v3144
      %v3146 = vpop.xlane.xlu0 %3145
      %v3147 = vsel %vm3044, %v1270, -inf
      %3148 = vmax.xlane.f32.xlu0 %v3147
      %v3149 = vpop.xlane.xlu0 %3148
      %v3150 = vsel %vm3044, %v1406, -inf
      %3151 = vmax.xlane.f32.xlu0 %v3150
      %v3152 = vpop.xlane.xlu0 %3151
      %v3153 = vsel %vm3044, %v1542, -inf
      %3154 = vmax.xlane.f32.xlu0 %v3153
      %v3155 = vpop.xlane.xlu0 %3154
      %v3156 = vsel %vm3044, %v1678, -inf
      %3157 = vmax.xlane.f32.xlu0 %v3156
      %v3158 = vpop.xlane.xlu0 %3157
      %v3159 = vsel %vm3044, %v1814, -inf
      %3160 = vmax.xlane.f32.xlu0 %v3159
      %v3161 = vpop.xlane.xlu0 %3160
      %v3162 = vsel %vm3044, %v1950, -inf
      %3163 = vmax.xlane.f32.xlu0 %v3162
      %v3164 = vpop.xlane.xlu0 %3163
      %v3165 = vsel %vm3044, %v2086, -inf
      %3166 = vmax.xlane.f32.xlu0 %v3165
      %v3167 = vpop.xlane.xlu0 %3166
      %v3168 = vsel %vm3044, %v2222, -inf
      %3169 = vmax.xlane.f32.xlu0 %v3168
      %v3170 = vpop.xlane.xlu0 %3169
      %v3171 = vsel %vm3044, %v2358, -inf
      %3172 = vmax.xlane.f32.xlu0 %v3171
      %v3173 = vpop.xlane.xlu0 %3172
      %v3174 = vsel %vm3044, %v2494, -inf
      %3175 = vmax.xlane.f32.xlu0 %v3174
      %v3176 = vpop.xlane.xlu0 %3175
      %v3177 = vsel %vm3044, %v2630, -inf
      %3178 = vmax.xlane.f32.xlu0 %v3177
      %v3179 = vpop.xlane.xlu0 %3178
      %v3180 = vsel %vm3044, %v2766, -inf
      %3181 = vmax.xlane.f32.xlu0 %v3180
      %v3182 = vpop.xlane.xlu0 %3181
      %v3183 = vsel %vm3044, %v2902, -inf
      %3184 = vmax.xlane.f32.xlu0 %v3183
      %v3185 = vpop.xlane.xlu0 %3184
      %v3186 = vsel %vm3044, %v3038, -inf
      %3187 = vmax.xlane.f32.xlu0 %v3186
      %v3188 = vpop.xlane.xlu0 %3187
      %v3189 = vsel %vm3044, %v999, -inf
      %3190 = vmax.xlane.f32.xlu0 %v3189
      %v3191 = vpop.xlane.xlu0 %3190
      %v3192 = vsel %vm3044, %v1135, -inf
      %3193 = vmax.xlane.f32.xlu0 %v3192
      %v3194 = vpop.xlane.xlu0 %3193
      %v3195 = vsel %vm3044, %v1271, -inf
      %3196 = vmax.xlane.f32.xlu0 %v3195
      %v3197 = vpop.xlane.xlu0 %3196
      %v3198 = vsel %vm3044, %v1407, -inf
      %3199 = vmax.xlane.f32.xlu0 %v3198
      %v3200 = vpop.xlane.xlu0 %3199
      %v3201 = vsel %vm3044, %v1543, -inf
      %3202 = vmax.xlane.f32.xlu0 %v3201
      %v3203 = vpop.xlane.xlu0 %3202
      %v3204 = vsel %vm3044, %v1679, -inf
      %3205 = vmax.xlane.f32.xlu0 %v3204
      %v3206 = vpop.xlane.xlu0 %3205
      %v3207 = vsel %vm3044, %v1815, -inf
      %3208 = vmax.xlane.f32.xlu0 %v3207
      %v3209 = vpop.xlane.xlu0 %3208
      %v3210 = vsel %vm3044, %v1951, -inf
      %3211 = vmax.xlane.f32.xlu0 %v3210
      %v3212 = vpop.xlane.xlu0 %3211
      %v3213 = vsel %vm3044, %v2087, -inf
      %3214 = vmax.xlane.f32.xlu0 %v3213
      %v3215 = vpop.xlane.xlu0 %3214
      %v3216 = vsel %vm3044, %v2223, -inf
      %3217 = vmax.xlane.f32.xlu0 %v3216
      %v3218 = vpop.xlane.xlu0 %3217
      %v3219 = vsel %vm3044, %v2359, -inf
      %3220 = vmax.xlane.f32.xlu0 %v3219
      %v3221 = vpop.xlane.xlu0 %3220
      %v3222 = vsel %vm3044, %v2495, -inf
      %3223 = vmax.xlane.f32.xlu0 %v3222
      %v3224 = vpop.xlane.xlu0 %3223
      %v3225 = vsel %vm3044, %v2631, -inf
      %3226 = vmax.xlane.f32.xlu0 %v3225
      %v3227 = vpop.xlane.xlu0 %3226
      %v3228 = vsel %vm3044, %v2767, -inf
      %3229 = vmax.xlane.f32.xlu0 %v3228
      %v3230 = vpop.xlane.xlu0 %3229
      %v3231 = vsel %vm3044, %v2903, -inf
      %3232 = vmax.xlane.f32.xlu0 %v3231
      %v3233 = vpop.xlane.xlu0 %3232
      %v3234 = vsel %vm3044, %v3039, -inf
      %3235 = vmax.xlane.f32.xlu0 %v3234
      %v3236 = vpop.xlane.xlu0 %3235
      %v3237 = vsel %vm3044, %v1000, -inf
      %3238 = vmax.xlane.f32.xlu0 %v3237
      %v3239 = vpop.xlane.xlu0 %3238
      %v3240 = vsel %vm3044, %v1136, -inf
      %3241 = vmax.xlane.f32.xlu0 %v3240
      %v3242 = vpop.xlane.xlu0 %3241
      %v3243 = vsel %vm3044, %v1272, -inf
      %3244 = vmax.xlane.f32.xlu0 %v3243
      %v3245 = vpop.xlane.xlu0 %3244
      %v3246 = vsel %vm3044, %v1408, -inf
      %3247 = vmax.xlane.f32.xlu0 %v3246
      %v3248 = vpop.xlane.xlu0 %3247
      %v3249 = vsel %vm3044, %v1544, -inf
      %3250 = vmax.xlane.f32.xlu0 %v3249
      %v3251 = vpop.xlane.xlu0 %3250
      %v3252 = vsel %vm3044, %v1680, -inf
      %3253 = vmax.xlane.f32.xlu0 %v3252
      %v3254 = vpop.xlane.xlu0 %3253
      %v3255 = vsel %vm3044, %v1816, -inf
      %3256 = vmax.xlane.f32.xlu0 %v3255
      %v3257 = vpop.xlane.xlu0 %3256
      %v3258 = vsel %vm3044, %v1952, -inf
      %3259 = vmax.xlane.f32.xlu0 %v3258
      %v3260 = vpop.xlane.xlu0 %3259
      %v3261 = vsel %vm3044, %v2088, -inf
      %3262 = vmax.xlane.f32.xlu0 %v3261
      %v3263 = vpop.xlane.xlu0 %3262
      %v3264 = vsel %vm3044, %v2224, -inf
      %3265 = vmax.xlane.f32.xlu0 %v3264
      %v3266 = vpop.xlane.xlu0 %3265
      %v3267 = vsel %vm3044, %v2360, -inf
      %3268 = vmax.xlane.f32.xlu0 %v3267
      %v3269 = vpop.xlane.xlu0 %3268
      %v3270 = vsel %vm3044, %v2496, -inf
      %3271 = vmax.xlane.f32.xlu0 %v3270
      %v3272 = vpop.xlane.xlu0 %3271
      %v3273 = vsel %vm3044, %v2632, -inf
      %3274 = vmax.xlane.f32.xlu0 %v3273
      %v3275 = vpop.xlane.xlu0 %3274
      %v3276 = vsel %vm3044, %v2768, -inf
      %3277 = vmax.xlane.f32.xlu0 %v3276
      %v3278 = vpop.xlane.xlu0 %3277
      %v3279 = vsel %vm3044, %v2904, -inf
      %3280 = vmax.xlane.f32.xlu0 %v3279
      %v3281 = vpop.xlane.xlu0 %3280
      %v3282 = vsel %vm3044, %v3040, -inf
      %3283 = vmax.xlane.f32.xlu0 %v3282
      %v3284 = vpop.xlane.xlu0 %3283
      %v3285 = vsel %vm3044, %v1001, -inf
      %3286 = vmax.xlane.f32.xlu0 %v3285
      %v3287 = vpop.xlane.xlu0 %3286
      %v3288 = vsel %vm3044, %v1137, -inf
      %3289 = vmax.xlane.f32.xlu0 %v3288
      %v3290 = vpop.xlane.xlu0 %3289
      %v3291 = vsel %vm3044, %v1273, -inf
      %3292 = vmax.xlane.f32.xlu0 %v3291
      %v3293 = vpop.xlane.xlu0 %3292
      %v3294 = vsel %vm3044, %v1409, -inf
      %3295 = vmax.xlane.f32.xlu0 %v3294
      %v3296 = vpop.xlane.xlu0 %3295
      %v3297 = vsel %vm3044, %v1545, -inf
      %3298 = vmax.xlane.f32.xlu0 %v3297
      %v3299 = vpop.xlane.xlu0 %3298
      %v3300 = vsel %vm3044, %v1681, -inf
      %3301 = vmax.xlane.f32.xlu0 %v3300
      %v3302 = vpop.xlane.xlu0 %3301
      %v3303 = vsel %vm3044, %v1817, -inf
      %3304 = vmax.xlane.f32.xlu0 %v3303
      %v3305 = vpop.xlane.xlu0 %3304
      %v3306 = vsel %vm3044, %v1953, -inf
      %3307 = vmax.xlane.f32.xlu0 %v3306
      %v3308 = vpop.xlane.xlu0 %3307
      %v3309 = vsel %vm3044, %v2089, -inf
      %3310 = vmax.xlane.f32.xlu0 %v3309
      %v3311 = vpop.xlane.xlu0 %3310
      %v3312 = vsel %vm3044, %v2225, -inf
      %3313 = vmax.xlane.f32.xlu0 %v3312
      %v3314 = vpop.xlane.xlu0 %3313
      %v3315 = vsel %vm3044, %v2361, -inf
      %3316 = vmax.xlane.f32.xlu0 %v3315
      %v3317 = vpop.xlane.xlu0 %3316
      %v3318 = vsel %vm3044, %v2497, -inf
      %3319 = vmax.xlane.f32.xlu0 %v3318
      %v3320 = vpop.xlane.xlu0 %3319
      %v3321 = vsel %vm3044, %v2633, -inf
      %3322 = vmax.xlane.f32.xlu0 %v3321
      %v3323 = vpop.xlane.xlu0 %3322
      %v3324 = vsel %vm3044, %v2769, -inf
      %3325 = vmax.xlane.f32.xlu0 %v3324
      %v3326 = vpop.xlane.xlu0 %3325
      %v3327 = vsel %vm3044, %v2905, -inf
      %3328 = vmax.xlane.f32.xlu0 %v3327
      %v3329 = vpop.xlane.xlu0 %3328
      %v3330 = vsel %vm3044, %v3041, -inf
      %3331 = vmax.xlane.f32.xlu0 %v3330
      %v3332 = vpop.xlane.xlu0 %3331
      %v3333 = vsel %vm3044, %v1002, -inf
      %3334 = vmax.xlane.f32.xlu0 %v3333
      %v3335 = vpop.xlane.xlu0 %3334
      %v3336 = vsel %vm3044, %v1138, -inf
      %3337 = vmax.xlane.f32.xlu0 %v3336
      %v3338 = vpop.xlane.xlu0 %3337
      %v3339 = vsel %vm3044, %v1274, -inf
      %3340 = vmax.xlane.f32.xlu0 %v3339
      %v3341 = vpop.xlane.xlu0 %3340
      %v3342 = vsel %vm3044, %v1410, -inf
      %3343 = vmax.xlane.f32.xlu0 %v3342
      %v3344 = vpop.xlane.xlu0 %3343
      %v3345 = vsel %vm3044, %v1546, -inf
      %3346 = vmax.xlane.f32.xlu0 %v3345
      %v3347 = vpop.xlane.xlu0 %3346
      %v3348 = vsel %vm3044, %v1682, -inf
      %3349 = vmax.xlane.f32.xlu0 %v3348
      %v3350 = vpop.xlane.xlu0 %3349
      %v3351 = vsel %vm3044, %v1818, -inf
      %3352 = vmax.xlane.f32.xlu0 %v3351
      %v3353 = vpop.xlane.xlu0 %3352
      %v3354 = vsel %vm3044, %v1954, -inf
      %3355 = vmax.xlane.f32.xlu0 %v3354
      %v3356 = vpop.xlane.xlu0 %3355
      %v3357 = vsel %vm3044, %v2090, -inf
      %3358 = vmax.xlane.f32.xlu0 %v3357
      %v3359 = vpop.xlane.xlu0 %3358
      %v3360 = vsel %vm3044, %v2226, -inf
      %3361 = vmax.xlane.f32.xlu0 %v3360
      %v3362 = vpop.xlane.xlu0 %3361
      %v3363 = vsel %vm3044, %v2362, -inf
      %3364 = vmax.xlane.f32.xlu0 %v3363
      %v3365 = vpop.xlane.xlu0 %3364
      %v3366 = vsel %vm3044, %v2498, -inf
      %3367 = vmax.xlane.f32.xlu0 %v3366
      %v3368 = vpop.xlane.xlu0 %3367
      %v3369 = vsel %vm3044, %v2634, -inf
      %3370 = vmax.xlane.f32.xlu0 %v3369
      %v3371 = vpop.xlane.xlu0 %3370
      %v3372 = vsel %vm3044, %v2770, -inf
      %3373 = vmax.xlane.f32.xlu0 %v3372
      %v3374 = vpop.xlane.xlu0 %3373
      %v3375 = vsel %vm3044, %v2906, -inf
      %3376 = vmax.xlane.f32.xlu0 %v3375
      %v3377 = vpop.xlane.xlu0 %3376
      %v3378 = vsel %vm3044, %v3042, -inf
      %3379 = vmax.xlane.f32.xlu0 %v3378
      %v3380 = vpop.xlane.xlu0 %3379
      %v3381 = vsel %vm3044, %v1003, -inf
      %3382 = vmax.xlane.f32.xlu0 %v3381
      %v3383 = vpop.xlane.xlu0 %3382
      %v3384 = vsel %vm3044, %v1139, -inf
      %3385 = vmax.xlane.f32.xlu0 %v3384
      %v3386 = vpop.xlane.xlu0 %3385
      %v3387 = vsel %vm3044, %v1275, -inf
      %3388 = vmax.xlane.f32.xlu0 %v3387
      %v3389 = vpop.xlane.xlu0 %3388
      %v3390 = vsel %vm3044, %v1411, -inf
      %3391 = vmax.xlane.f32.xlu0 %v3390
      %v3392 = vpop.xlane.xlu0 %3391
      %v3393 = vsel %vm3044, %v1547, -inf
      %3394 = vmax.xlane.f32.xlu0 %v3393
      %v3395 = vpop.xlane.xlu0 %3394
      %v3396 = vsel %vm3044, %v1683, -inf
      %3397 = vmax.xlane.f32.xlu0 %v3396
      %v3398 = vpop.xlane.xlu0 %3397
      %v3399 = vsel %vm3044, %v1819, -inf
      %3400 = vmax.xlane.f32.xlu0 %v3399
      %v3401 = vpop.xlane.xlu0 %3400
      %v3402 = vsel %vm3044, %v1955, -inf
      %3403 = vmax.xlane.f32.xlu0 %v3402
      %v3404 = vpop.xlane.xlu0 %3403
      %v3405 = vsel %vm3044, %v2091, -inf
      %3406 = vmax.xlane.f32.xlu0 %v3405
      %v3407 = vpop.xlane.xlu0 %3406
      %v3408 = vsel %vm3044, %v2227, -inf
      %3409 = vmax.xlane.f32.xlu0 %v3408
      %v3410 = vpop.xlane.xlu0 %3409
      %v3411 = vsel %vm3044, %v2363, -inf
      %3412 = vmax.xlane.f32.xlu0 %v3411
      %v3413 = vpop.xlane.xlu0 %3412
      %v3414 = vsel %vm3044, %v2499, -inf
      %3415 = vmax.xlane.f32.xlu0 %v3414
      %v3416 = vpop.xlane.xlu0 %3415
      %v3417 = vsel %vm3044, %v2635, -inf
      %3418 = vmax.xlane.f32.xlu0 %v3417
      %v3419 = vpop.xlane.xlu0 %3418
      %v3420 = vsel %vm3044, %v2771, -inf
      %3421 = vmax.xlane.f32.xlu0 %v3420
      %v3422 = vpop.xlane.xlu0 %3421
      %v3423 = vsel %vm3044, %v2907, -inf
      %3424 = vmax.xlane.f32.xlu0 %v3423
      %v3425 = vpop.xlane.xlu0 %3424
      %v3426 = vsel %vm3044, %v3043, -inf
      %3427 = vmax.xlane.f32.xlu0 %v3426
      %v3428 = vpop.xlane.xlu0 %3427
      %v3429 = vmax.f32 %v3047, 0.0
      %v3430 = vmax.f32 %v3050, 0.0
      %v3431 = vmax.f32 %v3053, 0.0
      %v3432 = vmax.f32 %v3056, 0.0
      %v3433 = vmax.f32 %v3059, 0.0
      %v3434 = vmax.f32 %v3062, 0.0
      %v3435 = vmax.f32 %v3065, 0.0
      %v3436 = vmax.f32 %v3068, 0.0
      %v3437 = vmax.f32 %v3071, 0.0
      %v3438 = vmax.f32 %v3074, 0.0
      %v3439 = vmax.f32 %v3077, 0.0
      %v3440 = vmax.f32 %v3080, 0.0
      %v3441 = vmax.f32 %v3083, 0.0
      %v3442 = vmax.f32 %v3086, 0.0
      %v3443 = vmax.f32 %v3089, 0.0
      %v3444 = vmax.f32 %v3092, 0.0
      %v3445 = vmax.f32 %v3095, 0.0
      %v3446 = vmax.f32 %v3098, 0.0
      %v3447 = vmax.f32 %v3101, 0.0
      %v3448 = vmax.f32 %v3104, 0.0
      %v3449 = vmax.f32 %v3107, 0.0
      %v3450 = vmax.f32 %v3110, 0.0
      %v3451 = vmax.f32 %v3113, 0.0
      %v3452 = vmax.f32 %v3116, 0.0
      %v3453 = vmax.f32 %v3119, 0.0
      %v3454 = vmax.f32 %v3122, 0.0
      %v3455 = vmax.f32 %v3125, 0.0
      %v3456 = vmax.f32 %v3128, 0.0
      %v3457 = vmax.f32 %v3131, 0.0
      %v3458 = vmax.f32 %v3134, 0.0
      %v3459 = vmax.f32 %v3137, 0.0
      %v3460 = vmax.f32 %v3140, 0.0
      %v3461 = vmax.f32 %v3143, 0.0
      %v3462 = vmax.f32 %v3146, 0.0
      %v3463 = vmax.f32 %v3149, 0.0
      %v3464 = vmax.f32 %v3152, 0.0
      %v3465 = vmax.f32 %v3155, 0.0
      %v3466 = vmax.f32 %v3158, 0.0
      %v3467 = vmax.f32 %v3161, 0.0
      %v3468 = vmax.f32 %v3164, 0.0
      %v3469 = vmax.f32 %v3167, 0.0
      %v3470 = vmax.f32 %v3170, 0.0
      %v3471 = vmax.f32 %v3173, 0.0
      %v3472 = vmax.f32 %v3176, 0.0
      %v3473 = vmax.f32 %v3179, 0.0
      %v3474 = vmax.f32 %v3182, 0.0
      %v3475 = vmax.f32 %v3185, 0.0
      %v3476 = vmax.f32 %v3188, 0.0
      %v3477 = vmax.f32 %v3191, 0.0
      %v3478 = vmax.f32 %v3194, 0.0
      %v3479 = vmax.f32 %v3197, 0.0
      %v3480 = vmax.f32 %v3200, 0.0
      %v3481 = vmax.f32 %v3203, 0.0
      %v3482 = vmax.f32 %v3206, 0.0
      %v3483 = vmax.f32 %v3209, 0.0
      %v3484 = vmax.f32 %v3212, 0.0
      %v3485 = vmax.f32 %v3215, 0.0
      %v3486 = vmax.f32 %v3218, 0.0
      %v3487 = vmax.f32 %v3221, 0.0
      %v3488 = vmax.f32 %v3224, 0.0
      %v3489 = vmax.f32 %v3227, 0.0
      %v3490 = vmax.f32 %v3230, 0.0
      %v3491 = vmax.f32 %v3233, 0.0
      %v3492 = vmax.f32 %v3236, 0.0
      %v3493 = vmax.f32 %v3239, 0.0
      %v3494 = vmax.f32 %v3242, 0.0
      %v3495 = vmax.f32 %v3245, 0.0
      %v3496 = vmax.f32 %v3248, 0.0
      %v3497 = vmax.f32 %v3251, 0.0
      %v3498 = vmax.f32 %v3254, 0.0
      %v3499 = vmax.f32 %v3257, 0.0
      %v3500 = vmax.f32 %v3260, 0.0
      %v3501 = vmax.f32 %v3263, 0.0
      %v3502 = vmax.f32 %v3266, 0.0
      %v3503 = vmax.f32 %v3269, 0.0
      %v3504 = vmax.f32 %v3272, 0.0
      %v3505 = vmax.f32 %v3275, 0.0
      %v3506 = vmax.f32 %v3278, 0.0
      %v3507 = vmax.f32 %v3281, 0.0
      %v3508 = vmax.f32 %v3284, 0.0
      %v3509 = vmax.f32 %v3287, 0.0
      %v3510 = vmax.f32 %v3290, 0.0
      %v3511 = vmax.f32 %v3293, 0.0
      %v3512 = vmax.f32 %v3296, 0.0
      %v3513 = vmax.f32 %v3299, 0.0
      %v3514 = vmax.f32 %v3302, 0.0
      %v3515 = vmax.f32 %v3305, 0.0
      %v3516 = vmax.f32 %v3308, 0.0
      %v3517 = vmax.f32 %v3311, 0.0
      %v3518 = vmax.f32 %v3314, 0.0
      %v3519 = vmax.f32 %v3317, 0.0
      %v3520 = vmax.f32 %v3320, 0.0
      %v3521 = vmax.f32 %v3323, 0.0
      %v3522 = vmax.f32 %v3326, 0.0
      %v3523 = vmax.f32 %v3329, 0.0
      %v3524 = vmax.f32 %v3332, 0.0
      %v3525 = vmax.f32 %v3335, 0.0
      %v3526 = vmax.f32 %v3338, 0.0
      %v3527 = vmax.f32 %v3341, 0.0
      %v3528 = vmax.f32 %v3344, 0.0
      %v3529 = vmax.f32 %v3347, 0.0
      %v3530 = vmax.f32 %v3350, 0.0
      %v3531 = vmax.f32 %v3353, 0.0
      %v3532 = vmax.f32 %v3356, 0.0
      %v3533 = vmax.f32 %v3359, 0.0
      %v3534 = vmax.f32 %v3362, 0.0
      %v3535 = vmax.f32 %v3365, 0.0
      %v3536 = vmax.f32 %v3368, 0.0
      %v3537 = vmax.f32 %v3371, 0.0
      %v3538 = vmax.f32 %v3374, 0.0
      %v3539 = vmax.f32 %v3377, 0.0
      %v3540 = vmax.f32 %v3380, 0.0
      %v3541 = vmax.f32 %v3383, 0.0
      %v3542 = vmax.f32 %v3386, 0.0
      %v3543 = vmax.f32 %v3389, 0.0
      %v3544 = vmax.f32 %v3392, 0.0
      %v3545 = vmax.f32 %v3395, 0.0
      %v3546 = vmax.f32 %v3398, 0.0
      %v3547 = vmax.f32 %v3401, 0.0
      %v3548 = vmax.f32 %v3404, 0.0
      %v3549 = vmax.f32 %v3407, 0.0
      %v3550 = vmax.f32 %v3410, 0.0
      %v3551 = vmax.f32 %v3413, 0.0
      %v3552 = vmax.f32 %v3416, 0.0
      %v3553 = vmax.f32 %v3419, 0.0
      %v3554 = vmax.f32 %v3422, 0.0
      %v3555 = vmax.f32 %v3425, 0.0
      %v3556 = vmax.f32 %v3428, 0.0
      %3558 = vrot.lane.b32.xlu0 %v524, 126
      %v3559 = vpop.permute.xlu0 %3558
      %3561 = vrot.lane.b32.xlu0 %v524, 124
      %v3562 = vpop.permute.xlu0 %3561
      %3564 = vrot.lane.b32.xlu0 %v524, 122
      %v3565 = vpop.permute.xlu0 %3564
      %3567 = vrot.lane.b32.xlu0 %v524, 120
      %v3568 = vpop.permute.xlu0 %3567
      %3570 = vrot.lane.b32.xlu0 %v524, 118
      %v3571 = vpop.permute.xlu0 %3570
      %3573 = vrot.lane.b32.xlu0 %v524, 116
      %v3574 = vpop.permute.xlu0 %3573
      %v3576 = vcombine.low %v524, %v3562
      %v3577 = vcombine.high %v524, %v3562
      %v3579 = vunpack.c.l.s4 1983009808
      %v3580 = vunpack.c.0.s8 %v3579
      %v3581 = vlaneseq
      %v3582 = vshrl.u32 %v3581, 7
      %v3583 = vsub.s32 %v3580, %v3582
      %v3584 = vrot.slane %v3576, %v3583
      %v3586 = vunpack.c.l.s4 1983009808
      %v3587 = vunpack.c.0.s8 %v3586
      %v3588 = vlaneseq
      %v3589 = vshrl.u32 %v3588, 7
      %v3590 = vsub.s32 %v3587, %v3589
      %v3591 = vrot.slane %v3577, %v3590
      %v3592 = vcombine.low %v3559, %v3565
      %v3593 = vcombine.high %v3559, %v3565
      %v3595 = vunpack.c.l.s4 1983009808
      %v3596 = vunpack.c.0.s8 %v3595
      %v3597 = vlaneseq
      %v3598 = vshrl.u32 %v3597, 7
      %v3599 = vsub.s32 %v3596, %v3598
      %v3600 = vrot.slane %v3592, %v3599
      %v3602 = vunpack.c.l.s4 1983009808
      %v3603 = vunpack.c.0.s8 %v3602
      %v3604 = vlaneseq
      %v3605 = vshrl.u32 %v3604, 7
      %v3606 = vsub.s32 %v3603, %v3605
      %v3607 = vrot.slane %v3593, %v3606
      %v3608 = vcombine.low %v3568, %v3574
      %v3609 = vcombine.high %v3568, %v3574
      %v3611 = vunpack.c.l.s4 1983009808
      %v3612 = vunpack.c.0.s8 %v3611
      %v3613 = vlaneseq
      %v3614 = vshrl.u32 %v3613, 7
      %v3615 = vsub.s32 %v3612, %v3614
      %v3616 = vrot.slane %v3608, %v3615
      %v3618 = vunpack.c.l.s4 1983009808
      %v3619 = vunpack.c.0.s8 %v3618
      %v3620 = vlaneseq
      %v3621 = vshrl.u32 %v3620, 7
      %v3622 = vsub.s32 %v3619, %v3621
      %v3623 = vrot.slane %v3609, %v3622
      %v3624 = vcombine.high %v3571, 0.0
      %v3626 = vunpack.c.l.s4 1983009808
      %v3627 = vunpack.c.0.s8 %v3626
      %v3628 = vlaneseq
      %v3629 = vshrl.u32 %v3628, 7
      %v3630 = vsub.s32 %v3627, %v3629
      %v3631 = vrot.slane %v3571, %v3630
      %v3633 = vunpack.c.l.s4 1983009808
      %v3634 = vunpack.c.0.s8 %v3633
      %v3635 = vlaneseq
      %v3636 = vshrl.u32 %v3635, 7
      %v3637 = vsub.s32 %v3634, %v3636
      %v3638 = vrot.slane %v3624, %v3637
      %v3639 = vcombine.low %v3584, %v3600
      %v3640 = vcombine.high %v3584, %v3600
      %v3642 = vunpack.c.l.s4 1934713408
      %v3643 = vunpack.c.0.s8 %v3642
      %v3644 = vlaneseq
      %v3645 = vshrl.u32 %v3644, 7
      %v3646 = vsub.s32 %v3643, %v3645
      %v3647 = vrot.slane %v3639, %v3646
      %v3649 = vunpack.c.l.s4 1934713408
      %v3650 = vunpack.c.0.s8 %v3649
      %v3651 = vlaneseq
      %v3652 = vshrl.u32 %v3651, 7
      %v3653 = vsub.s32 %v3650, %v3652
      %v3654 = vrot.slane %v3640, %v3653
      %v3655 = vcombine.low %v3591, %v3607
      %v3656 = vcombine.high %v3591, %v3607
      %v3658 = vunpack.c.l.s4 1934713408
      %v3659 = vunpack.c.0.s8 %v3658
      %v3660 = vlaneseq
      %v3661 = vshrl.u32 %v3660, 7
      %v3662 = vsub.s32 %v3659, %v3661
      %v3663 = vrot.slane %v3655, %v3662
      %v3665 = vunpack.c.l.s4 1934713408
      %v3666 = vunpack.c.0.s8 %v3665
      %v3667 = vlaneseq
      %v3668 = vshrl.u32 %v3667, 7
      %v3669 = vsub.s32 %v3666, %v3668
      %v3670 = vrot.slane %v3656, %v3669
      %v3671 = vcombine.low %v3616, %v3631
      %v3672 = vcombine.high %v3616, %v3631
      %v3674 = vunpack.c.l.s4 1934713408
      %v3675 = vunpack.c.0.s8 %v3674
      %v3676 = vlaneseq
      %v3677 = vshrl.u32 %v3676, 7
      %v3678 = vsub.s32 %v3675, %v3677
      %v3679 = vrot.slane %v3671, %v3678
      %v3681 = vunpack.c.l.s4 1934713408
      %v3682 = vunpack.c.0.s8 %v3681
      %v3683 = vlaneseq
      %v3684 = vshrl.u32 %v3683, 7
      %v3685 = vsub.s32 %v3682, %v3684
      %v3686 = vrot.slane %v3672, %v3685
      %v3687 = vcombine.low %v3623, %v3638
      %v3688 = vcombine.high %v3623, %v3638
      %v3690 = vunpack.c.l.s4 1934713408
      %v3691 = vunpack.c.0.s8 %v3690
      %v3692 = vlaneseq
      %v3693 = vshrl.u32 %v3692, 7
      %v3694 = vsub.s32 %v3691, %v3693
      %v3695 = vrot.slane %v3687, %v3694
      %v3697 = vunpack.c.l.s4 1934713408
      %v3698 = vunpack.c.0.s8 %v3697
      %v3699 = vlaneseq
      %v3700 = vshrl.u32 %v3699, 7
      %v3701 = vsub.s32 %v3698, %v3700
      %v3702 = vrot.slane %v3688, %v3701
      %v3703 = vcombine.low %v3647, %v3679
      %v3704 = vcombine.high %v3647, %v3679
      %v3705 = vcombine.low %v3654, %v3686
      %v3706 = vcombine.high %v3654, %v3686
      %v3707 = vcombine.low %v3663, %v3695
      %v3708 = vcombine.high %v3663, %v3695
      %v3709 = vcombine.low %v3670, %v3702
      %v3710 = vcombine.high %v3670, %v3702
      %vm3711 = vcmask 14336
      %v3712 = vsel %vm3711, %v3703, -inf
      %3713 = vmax.xlane.f32.xlu0 %v3712
      %v3714 = vpop.xlane.xlu0 %3713
      %v3715 = vsel %vm3711, %v3704, -inf
      %3716 = vmax.xlane.f32.xlu0 %v3715
      %v3717 = vpop.xlane.xlu0 %3716
      %v3718 = vsel %vm3711, %v3705, -inf
      %3719 = vmax.xlane.f32.xlu0 %v3718
      %v3720 = vpop.xlane.xlu0 %3719
      %v3721 = vsel %vm3711, %v3706, -inf
      %3722 = vmax.xlane.f32.xlu0 %v3721
      %v3723 = vpop.xlane.xlu0 %3722
      %v3724 = vsel %vm3711, %v3707, -inf
      %3725 = vmax.xlane.f32.xlu0 %v3724
      %v3726 = vpop.xlane.xlu0 %3725
      %v3727 = vsel %vm3711, %v3708, -inf
      %3728 = vmax.xlane.f32.xlu0 %v3727
      %v3729 = vpop.xlane.xlu0 %3728
      %v3730 = vsel %vm3711, %v3709, -inf
      %3731 = vmax.xlane.f32.xlu0 %v3730
      %v3732 = vpop.xlane.xlu0 %3731
      %v3733 = vsel %vm3711, %v3710, -inf
      %3734 = vmax.xlane.f32.xlu0 %v3733
      %v3735 = vpop.xlane.xlu0 %3734
      %v3736 = vmax.f32 %v3714, 0.0
      %v3737 = vmax.f32 %v3717, 0.0
      %v3738 = vmax.f32 %v3720, 0.0
      %v3739 = vmax.f32 %v3723, 0.0
      %v3740 = vmax.f32 %v3726, 0.0
      %v3741 = vmax.f32 %v3729, 0.0
      %v3742 = vmax.f32 %v3732, 0.0
      %v3743 = vmax.f32 %v3735, 0.0
      %v3752 = vlaneseq
      %v3753 = vshrl.u32 %v3752, 7
      %v3754 = vsub.s32 %v222, %v3753
      %v3755 = vrot.slane %v3429, %v3754
      %v3756 = vlaneseq
      %v3757 = vshrl.u32 %v3756, 7
      %v3758 = vsub.s32 %v222, %v3757
      %v3759 = vrot.slane %v3445, %v3758
      %v3760 = vlaneseq
      %v3761 = vshrl.u32 %v3760, 7
      %v3762 = vsub.s32 %v222, %v3761
      %v3763 = vrot.slane %v3461, %v3762
      %v3764 = vlaneseq
      %v3765 = vshrl.u32 %v3764, 7
      %v3766 = vsub.s32 %v222, %v3765
      %v3767 = vrot.slane %v3477, %v3766
      %v3768 = vlaneseq
      %v3769 = vshrl.u32 %v3768, 7
      %v3770 = vsub.s32 %v222, %v3769
      %v3771 = vrot.slane %v3493, %v3770
      %v3772 = vlaneseq
      %v3773 = vshrl.u32 %v3772, 7
      %v3774 = vsub.s32 %v222, %v3773
      %v3775 = vrot.slane %v3509, %v3774
      %v3776 = vlaneseq
      %v3777 = vshrl.u32 %v3776, 7
      %v3778 = vsub.s32 %v222, %v3777
      %v3779 = vrot.slane %v3525, %v3778
      %v3780 = vlaneseq
      %v3781 = vshrl.u32 %v3780, 7
      %v3782 = vsub.s32 %v222, %v3781
      %v3783 = vrot.slane %v3541, %v3782
      %vm3784 = vcmask 1041409
      %v3785 = vsel %vm3784, %v3759, %v3755
      %vm3786 = vcmask 1042434
      %v3787 = vsel %vm3786, %v3763, %v3785
      %vm3788 = vcmask 1043459
      %v3789 = vsel %vm3788, %v3767, %v3787
      %vm3790 = vcmask 1044484
      %v3791 = vsel %vm3790, %v3771, %v3789
      %vm3792 = vcmask 1045509
      %v3793 = vsel %vm3792, %v3775, %v3791
      %vm3794 = vcmask 1046534
      %v3795 = vsel %vm3794, %v3779, %v3793
      %vm3796 = vcmask 1047559
      %v3797 = vsel %vm3796, %v3783, %v3795
      %vm3799 = vcmask 56320
      %3800 = vst.msk [vmem:[%s204] sm:$0xff] %vm3799, %v3797
      %v3809 = vlaneseq
      %v3810 = vshrl.u32 %v3809, 7
      %v3811 = vsub.s32 %v222, %v3810
      %v3812 = vrot.slane %v3736, %v3811
      %v3813 = vlaneseq
      %v3814 = vshrl.u32 %v3813, 7
      %v3815 = vsub.s32 %v222, %v3814
      %v3816 = vrot.slane %v3737, %v3815
      %v3817 = vlaneseq
      %v3818 = vshrl.u32 %v3817, 7
      %v3819 = vsub.s32 %v222, %v3818
      %v3820 = vrot.slane %v3738, %v3819
      %v3821 = vlaneseq
      %v3822 = vshrl.u32 %v3821, 7
      %v3823 = vsub.s32 %v222, %v3822
      %v3824 = vrot.slane %v3739, %v3823
      %v3825 = vlaneseq
      %v3826 = vshrl.u32 %v3825, 7
      %v3827 = vsub.s32 %v222, %v3826
      %v3828 = vrot.slane %v3740, %v3827
      %v3829 = vlaneseq
      %v3830 = vshrl.u32 %v3829, 7
      %v3831 = vsub.s32 %v222, %v3830
      %v3832 = vrot.slane %v3741, %v3831
      %v3833 = vlaneseq
      %v3834 = vshrl.u32 %v3833, 7
      %v3835 = vsub.s32 %v222, %v3834
      %v3836 = vrot.slane %v3742, %v3835
      %v3837 = vlaneseq
      %v3838 = vshrl.u32 %v3837, 7
      %v3839 = vsub.s32 %v222, %v3838
      %v3840 = vrot.slane %v3743, %v3839
      %v3841 = vsel %vm3784, %v3816, %v3812
      %v3842 = vsel %vm3786, %v3820, %v3841
      %v3843 = vsel %vm3788, %v3824, %v3842
      %v3844 = vsel %vm3790, %v3828, %v3843
      %v3845 = vsel %vm3792, %v3832, %v3844
      %v3846 = vsel %vm3794, %v3836, %v3845
      %v3847 = vsel %vm3796, %v3840, %v3846
      %3849 = vst.msk [vmem:[%s204 + $0x8] sm:$0xff] %vm3799, %v3847
      %v3858 = vadd.s32 %v222, 4294967289
      %v3859 = vlaneseq
      %v3860 = vshrl.u32 %v3859, 7
      %v3861 = vsub.s32 %v3858, %v3860
      %v3862 = vrot.slane %v3430, %v3861
      %v3863 = vlaneseq
      %v3864 = vshrl.u32 %v3863, 7
      %v3865 = vsub.s32 %v3858, %v3864
      %v3866 = vrot.slane %v3446, %v3865
      %v3867 = vlaneseq
      %v3868 = vshrl.u32 %v3867, 7
      %v3869 = vsub.s32 %v3858, %v3868
      %v3870 = vrot.slane %v3462, %v3869
      %v3871 = vlaneseq
      %v3872 = vshrl.u32 %v3871, 7
      %v3873 = vsub.s32 %v3858, %v3872
      %v3874 = vrot.slane %v3478, %v3873
      %v3875 = vlaneseq
      %v3876 = vshrl.u32 %v3875, 7
      %v3877 = vsub.s32 %v3858, %v3876
      %v3878 = vrot.slane %v3494, %v3877
      %v3879 = vlaneseq
      %v3880 = vshrl.u32 %v3879, 7
      %v3881 = vsub.s32 %v3858, %v3880
      %v3882 = vrot.slane %v3510, %v3881
      %v3883 = vlaneseq
      %v3884 = vshrl.u32 %v3883, 7
      %v3885 = vsub.s32 %v3858, %v3884
      %v3886 = vrot.slane %v3526, %v3885
      %v3887 = vlaneseq
      %v3888 = vshrl.u32 %v3887, 7
      %v3889 = vsub.s32 %v3858, %v3888
      %v3890 = vrot.slane %v3542, %v3889
      %v3891 = vsel %vm3784, %v3866, %v3862
      %v3892 = vsel %vm3786, %v3870, %v3891
      %v3893 = vsel %vm3788, %v3874, %v3892
      %v3894 = vsel %vm3790, %v3878, %v3893
      %v3895 = vsel %vm3792, %v3882, %v3894
      %v3896 = vsel %vm3794, %v3886, %v3895
      %v3897 = vsel %vm3796, %v3890, %v3896
      %vm3899 = vcmask 113720
      %3900 = vst.msk [vmem:[%s204] sm:$0xff] %vm3899, %v3897
      %v3901 = vlaneseq
      %v3902 = vshrl.u32 %v3901, 7
      %v3903 = vsub.s32 %v3858, %v3902
      %v3904 = vrot.slane %v3736, %v3903
      %v3905 = vlaneseq
      %v3906 = vshrl.u32 %v3905, 7
      %v3907 = vsub.s32 %v3858, %v3906
      %v3908 = vrot.slane %v3737, %v3907
      %v3909 = vlaneseq
      %v3910 = vshrl.u32 %v3909, 7
      %v3911 = vsub.s32 %v3858, %v3910
      %v3912 = vrot.slane %v3738, %v3911
      %v3913 = vlaneseq
      %v3914 = vshrl.u32 %v3913, 7
      %v3915 = vsub.s32 %v3858, %v3914
      %v3916 = vrot.slane %v3739, %v3915
      %v3917 = vlaneseq
      %v3918 = vshrl.u32 %v3917, 7
      %v3919 = vsub.s32 %v3858, %v3918
      %v3920 = vrot.slane %v3740, %v3919
      %v3921 = vlaneseq
      %v3922 = vshrl.u32 %v3921, 7
      %v3923 = vsub.s32 %v3858, %v3922
      %v3924 = vrot.slane %v3741, %v3923
      %v3925 = vlaneseq
      %v3926 = vshrl.u32 %v3925, 7
      %v3927 = vsub.s32 %v3858, %v3926
      %v3928 = vrot.slane %v3742, %v3927
      %v3929 = vlaneseq
      %v3930 = vshrl.u32 %v3929, 7
      %v3931 = vsub.s32 %v3858, %v3930
      %v3932 = vrot.slane %v3743, %v3931
      %v3933 = vsel %vm3784, %v3908, %v3904
      %v3934 = vsel %vm3786, %v3912, %v3933
      %v3935 = vsel %vm3788, %v3916, %v3934
      %v3936 = vsel %vm3790, %v3920, %v3935
      %v3937 = vsel %vm3792, %v3924, %v3936
      %v3938 = vsel %vm3794, %v3928, %v3937
      %v3939 = vsel %vm3796, %v3932, %v3938
      %3941 = vst.msk [vmem:[%s204 + $0x8] sm:$0xff] %vm3899, %v3939
      %v3950 = vadd.s32 %v222, 4294967282
      %v3951 = vlaneseq
      %v3952 = vshrl.u32 %v3951, 7
      %v3953 = vsub.s32 %v3950, %v3952
      %v3954 = vrot.slane %v3431, %v3953
      %v3955 = vlaneseq
      %v3956 = vshrl.u32 %v3955, 7
      %v3957 = vsub.s32 %v3950, %v3956
      %v3958 = vrot.slane %v3447, %v3957
      %v3959 = vlaneseq
      %v3960 = vshrl.u32 %v3959, 7
      %v3961 = vsub.s32 %v3950, %v3960
      %v3962 = vrot.slane %v3463, %v3961
      %v3963 = vlaneseq
      %v3964 = vshrl.u32 %v3963, 7
      %v3965 = vsub.s32 %v3950, %v3964
      %v3966 = vrot.slane %v3479, %v3965
      %v3967 = vlaneseq
      %v3968 = vshrl.u32 %v3967, 7
      %v3969 = vsub.s32 %v3950, %v3968
      %v3970 = vrot.slane %v3495, %v3969
      %v3971 = vlaneseq
      %v3972 = vshrl.u32 %v3971, 7
      %v3973 = vsub.s32 %v3950, %v3972
      %v3974 = vrot.slane %v3511, %v3973
      %v3975 = vlaneseq
      %v3976 = vshrl.u32 %v3975, 7
      %v3977 = vsub.s32 %v3950, %v3976
      %v3978 = vrot.slane %v3527, %v3977
      %v3979 = vlaneseq
      %v3980 = vshrl.u32 %v3979, 7
      %v3981 = vsub.s32 %v3950, %v3980
      %v3982 = vrot.slane %v3543, %v3981
      %v3983 = vsel %vm3784, %v3958, %v3954
      %v3984 = vsel %vm3786, %v3962, %v3983
      %v3985 = vsel %vm3788, %v3966, %v3984
      %v3986 = vsel %vm3790, %v3970, %v3985
      %v3987 = vsel %vm3792, %v3974, %v3986
      %v3988 = vsel %vm3794, %v3978, %v3987
      %v3989 = vsel %vm3796, %v3982, %v3988
      %vm3991 = vcmask 171120
      %3992 = vst.msk [vmem:[%s204] sm:$0xff] %vm3991, %v3989
      %v3993 = vlaneseq
      %v3994 = vshrl.u32 %v3993, 7
      %v3995 = vsub.s32 %v3950, %v3994
      %v3996 = vrot.slane %v3736, %v3995
      %v3997 = vlaneseq
      %v3998 = vshrl.u32 %v3997, 7
      %v3999 = vsub.s32 %v3950, %v3998
      %v4000 = vrot.slane %v3737, %v3999
      %v4001 = vlaneseq
      %v4002 = vshrl.u32 %v4001, 7
      %v4003 = vsub.s32 %v3950, %v4002
      %v4004 = vrot.slane %v3738, %v4003
      %v4005 = vlaneseq
      %v4006 = vshrl.u32 %v4005, 7
      %v4007 = vsub.s32 %v3950, %v4006
      %v4008 = vrot.slane %v3739, %v4007
      %v4009 = vlaneseq
      %v4010 = vshrl.u32 %v4009, 7
      %v4011 = vsub.s32 %v3950, %v4010
      %v4012 = vrot.slane %v3740, %v4011
      %v4013 = vlaneseq
      %v4014 = vshrl.u32 %v4013, 7
      %v4015 = vsub.s32 %v3950, %v4014
      %v4016 = vrot.slane %v3741, %v4015
      %v4017 = vlaneseq
      %v4018 = vshrl.u32 %v4017, 7
      %v4019 = vsub.s32 %v3950, %v4018
      %v4020 = vrot.slane %v3742, %v4019
      %v4021 = vlaneseq
      %v4022 = vshrl.u32 %v4021, 7
      %v4023 = vsub.s32 %v3950, %v4022
      %v4024 = vrot.slane %v3743, %v4023
      %v4025 = vsel %vm3784, %v4000, %v3996
      %v4026 = vsel %vm3786, %v4004, %v4025
      %v4027 = vsel %vm3788, %v4008, %v4026
      %v4028 = vsel %vm3790, %v4012, %v4027
      %v4029 = vsel %vm3792, %v4016, %v4028
      %v4030 = vsel %vm3794, %v4020, %v4029
      %v4031 = vsel %vm3796, %v4024, %v4030
      %4033 = vst.msk [vmem:[%s204 + $0x8] sm:$0xff] %vm3991, %v4031
      %v4042 = vadd.s32 %v222, 4294967275
      %v4043 = vlaneseq
      %v4044 = vshrl.u32 %v4043, 7
      %v4045 = vsub.s32 %v4042, %v4044
      %v4046 = vrot.slane %v3432, %v4045
      %v4047 = vlaneseq
      %v4048 = vshrl.u32 %v4047, 7
      %v4049 = vsub.s32 %v4042, %v4048
      %v4050 = vrot.slane %v3448, %v4049
      %v4051 = vlaneseq
      %v4052 = vshrl.u32 %v4051, 7
      %v4053 = vsub.s32 %v4042, %v4052
      %v4054 = vrot.slane %v3464, %v4053
      %v4055 = vlaneseq
      %v4056 = vshrl.u32 %v4055, 7
      %v4057 = vsub.s32 %v4042, %v4056
      %v4058 = vrot.slane %v3480, %v4057
      %v4059 = vlaneseq
      %v4060 = vshrl.u32 %v4059, 7
      %v4061 = vsub.s32 %v4042, %v4060
      %v4062 = vrot.slane %v3496, %v4061
      %v4063 = vlaneseq
      %v4064 = vshrl.u32 %v4063, 7
      %v4065 = vsub.s32 %v4042, %v4064
      %v4066 = vrot.slane %v3512, %v4065
      %v4067 = vlaneseq
      %v4068 = vshrl.u32 %v4067, 7
      %v4069 = vsub.s32 %v4042, %v4068
      %v4070 = vrot.slane %v3528, %v4069
      %v4071 = vlaneseq
      %v4072 = vshrl.u32 %v4071, 7
      %v4073 = vsub.s32 %v4042, %v4072
      %v4074 = vrot.slane %v3544, %v4073
      %v4075 = vsel %vm3784, %v4050, %v4046
      %v4076 = vsel %vm3786, %v4054, %v4075
      %v4077 = vsel %vm3788, %v4058, %v4076
      %v4078 = vsel %vm3790, %v4062, %v4077
      %v4079 = vsel %vm3792, %v4066, %v4078
      %v4080 = vsel %vm3794, %v4070, %v4079
      %v4081 = vsel %vm3796, %v4074, %v4080
      %vm4083 = vcmask 228520
      %4084 = vst.msk [vmem:[%s204] sm:$0xff] %vm4083, %v4081
      %v4085 = vlaneseq
      %v4086 = vshrl.u32 %v4085, 7
      %v4087 = vsub.s32 %v4042, %v4086
      %v4088 = vrot.slane %v3736, %v4087
      %v4089 = vlaneseq
      %v4090 = vshrl.u32 %v4089, 7
      %v4091 = vsub.s32 %v4042, %v4090
      %v4092 = vrot.slane %v3737, %v4091
      %v4093 = vlaneseq
      %v4094 = vshrl.u32 %v4093, 7
      %v4095 = vsub.s32 %v4042, %v4094
      %v4096 = vrot.slane %v3738, %v4095
      %v4097 = vlaneseq
      %v4098 = vshrl.u32 %v4097, 7
      %v4099 = vsub.s32 %v4042, %v4098
      %v4100 = vrot.slane %v3739, %v4099
      %v4101 = vlaneseq
      %v4102 = vshrl.u32 %v4101, 7
      %v4103 = vsub.s32 %v4042, %v4102
      %v4104 = vrot.slane %v3740, %v4103
      %v4105 = vlaneseq
      %v4106 = vshrl.u32 %v4105, 7
      %v4107 = vsub.s32 %v4042, %v4106
      %v4108 = vrot.slane %v3741, %v4107
      %v4109 = vlaneseq
      %v4110 = vshrl.u32 %v4109, 7
      %v4111 = vsub.s32 %v4042, %v4110
      %v4112 = vrot.slane %v3742, %v4111
      %v4113 = vlaneseq
      %v4114 = vshrl.u32 %v4113, 7
      %v4115 = vsub.s32 %v4042, %v4114
      %v4116 = vrot.slane %v3743, %v4115
      %v4117 = vsel %vm3784, %v4092, %v4088
      %v4118 = vsel %vm3786, %v4096, %v4117
      %v4119 = vsel %vm3788, %v4100, %v4118
      %v4120 = vsel %vm3790, %v4104, %v4119
      %v4121 = vsel %vm3792, %v4108, %v4120
      %v4122 = vsel %vm3794, %v4112, %v4121
      %v4123 = vsel %vm3796, %v4116, %v4122
      %4125 = vst.msk [vmem:[%s204 + $0x8] sm:$0xff] %vm4083, %v4123
      %v4134 = vadd.s32 %v222, 4294967268
      %v4135 = vlaneseq
      %v4136 = vshrl.u32 %v4135, 7
      %v4137 = vsub.s32 %v4134, %v4136
      %v4138 = vrot.slane %v3433, %v4137
      %v4139 = vlaneseq
      %v4140 = vshrl.u32 %v4139, 7
      %v4141 = vsub.s32 %v4134, %v4140
      %v4142 = vrot.slane %v3449, %v4141
      %v4143 = vlaneseq
      %v4144 = vshrl.u32 %v4143, 7
      %v4145 = vsub.s32 %v4134, %v4144
      %v4146 = vrot.slane %v3465, %v4145
      %v4147 = vlaneseq
      %v4148 = vshrl.u32 %v4147, 7
      %v4149 = vsub.s32 %v4134, %v4148
      %v4150 = vrot.slane %v3481, %v4149
      %v4151 = vlaneseq
      %v4152 = vshrl.u32 %v4151, 7
      %v4153 = vsub.s32 %v4134, %v4152
      %v4154 = vrot.slane %v3497, %v4153
      %v4155 = vlaneseq
      %v4156 = vshrl.u32 %v4155, 7
      %v4157 = vsub.s32 %v4134, %v4156
      %v4158 = vrot.slane %v3513, %v4157
      %v4159 = vlaneseq
      %v4160 = vshrl.u32 %v4159, 7
      %v4161 = vsub.s32 %v4134, %v4160
      %v4162 = vrot.slane %v3529, %v4161
      %v4163 = vlaneseq
      %v4164 = vshrl.u32 %v4163, 7
      %v4165 = vsub.s32 %v4134, %v4164
      %v4166 = vrot.slane %v3545, %v4165
      %v4167 = vsel %vm3784, %v4142, %v4138
      %v4168 = vsel %vm3786, %v4146, %v4167
      %v4169 = vsel %vm3788, %v4150, %v4168
      %v4170 = vsel %vm3790, %v4154, %v4169
      %v4171 = vsel %vm3792, %v4158, %v4170
      %v4172 = vsel %vm3794, %v4162, %v4171
      %v4173 = vsel %vm3796, %v4166, %v4172
      %vm4175 = vcmask 285920
      %4176 = vst.msk [vmem:[%s204] sm:$0xff] %vm4175, %v4173
      %v4177 = vlaneseq
      %v4178 = vshrl.u32 %v4177, 7
      %v4179 = vsub.s32 %v4134, %v4178
      %v4180 = vrot.slane %v3736, %v4179
      %v4181 = vlaneseq
      %v4182 = vshrl.u32 %v4181, 7
      %v4183 = vsub.s32 %v4134, %v4182
      %v4184 = vrot.slane %v3737, %v4183
      %v4185 = vlaneseq
      %v4186 = vshrl.u32 %v4185, 7
      %v4187 = vsub.s32 %v4134, %v4186
      %v4188 = vrot.slane %v3738, %v4187
      %v4189 = vlaneseq
      %v4190 = vshrl.u32 %v4189, 7
      %v4191 = vsub.s32 %v4134, %v4190
      %v4192 = vrot.slane %v3739, %v4191
      %v4193 = vlaneseq
      %v4194 = vshrl.u32 %v4193, 7
      %v4195 = vsub.s32 %v4134, %v4194
      %v4196 = vrot.slane %v3740, %v4195
      %v4197 = vlaneseq
      %v4198 = vshrl.u32 %v4197, 7
      %v4199 = vsub.s32 %v4134, %v4198
      %v4200 = vrot.slane %v3741, %v4199
      %v4201 = vlaneseq
      %v4202 = vshrl.u32 %v4201, 7
      %v4203 = vsub.s32 %v4134, %v4202
      %v4204 = vrot.slane %v3742, %v4203
      %v4205 = vlaneseq
      %v4206 = vshrl.u32 %v4205, 7
      %v4207 = vsub.s32 %v4134, %v4206
      %v4208 = vrot.slane %v3743, %v4207
      %v4209 = vsel %vm3784, %v4184, %v4180
      %v4210 = vsel %vm3786, %v4188, %v4209
      %v4211 = vsel %vm3788, %v4192, %v4210
      %v4212 = vsel %vm3790, %v4196, %v4211
      %v4213 = vsel %vm3792, %v4200, %v4212
      %v4214 = vsel %vm3794, %v4204, %v4213
      %v4215 = vsel %vm3796, %v4208, %v4214
      %4217 = vst.msk [vmem:[%s204 + $0x8] sm:$0xff] %vm4175, %v4215
      %v4226 = vadd.s32 %v222, 4294967261
      %v4227 = vlaneseq
      %v4228 = vshrl.u32 %v4227, 7
      %v4229 = vsub.s32 %v4226, %v4228
      %v4230 = vrot.slane %v3434, %v4229
      %v4231 = vlaneseq
      %v4232 = vshrl.u32 %v4231, 7
      %v4233 = vsub.s32 %v4226, %v4232
      %v4234 = vrot.slane %v3450, %v4233
      %v4235 = vlaneseq
      %v4236 = vshrl.u32 %v4235, 7
      %v4237 = vsub.s32 %v4226, %v4236
      %v4238 = vrot.slane %v3466, %v4237
      %v4239 = vlaneseq
      %v4240 = vshrl.u32 %v4239, 7
      %v4241 = vsub.s32 %v4226, %v4240
      %v4242 = vrot.slane %v3482, %v4241
      %v4243 = vlaneseq
      %v4244 = vshrl.u32 %v4243, 7
      %v4245 = vsub.s32 %v4226, %v4244
      %v4246 = vrot.slane %v3498, %v4245
      %v4247 = vlaneseq
      %v4248 = vshrl.u32 %v4247, 7
      %v4249 = vsub.s32 %v4226, %v4248
      %v4250 = vrot.slane %v3514, %v4249
      %v4251 = vlaneseq
      %v4252 = vshrl.u32 %v4251, 7
      %v4253 = vsub.s32 %v4226, %v4252
      %v4254 = vrot.slane %v3530, %v4253
      %v4255 = vlaneseq
      %v4256 = vshrl.u32 %v4255, 7
      %v4257 = vsub.s32 %v4226, %v4256
      %v4258 = vrot.slane %v3546, %v4257
      %v4259 = vsel %vm3784, %v4234, %v4230
      %v4260 = vsel %vm3786, %v4238, %v4259
      %v4261 = vsel %vm3788, %v4242, %v4260
      %v4262 = vsel %vm3790, %v4246, %v4261
      %v4263 = vsel %vm3792, %v4250, %v4262
      %v4264 = vsel %vm3794, %v4254, %v4263
      %v4265 = vsel %vm3796, %v4258, %v4264
      %vm4267 = vcmask 343320
      %4268 = vst.msk [vmem:[%s204] sm:$0xff] %vm4267, %v4265
      %v4269 = vlaneseq
      %v4270 = vshrl.u32 %v4269, 7
      %v4271 = vsub.s32 %v4226, %v4270
      %v4272 = vrot.slane %v3736, %v4271
      %v4273 = vlaneseq
      %v4274 = vshrl.u32 %v4273, 7
      %v4275 = vsub.s32 %v4226, %v4274
      %v4276 = vrot.slane %v3737, %v4275
      %v4277 = vlaneseq
      %v4278 = vshrl.u32 %v4277, 7
      %v4279 = vsub.s32 %v4226, %v4278
      %v4280 = vrot.slane %v3738, %v4279
      %v4281 = vlaneseq
      %v4282 = vshrl.u32 %v4281, 7
      %v4283 = vsub.s32 %v4226, %v4282
      %v4284 = vrot.slane %v3739, %v4283
      %v4285 = vlaneseq
      %v4286 = vshrl.u32 %v4285, 7
      %v4287 = vsub.s32 %v4226, %v4286
      %v4288 = vrot.slane %v3740, %v4287
      %v4289 = vlaneseq
      %v4290 = vshrl.u32 %v4289, 7
      %v4291 = vsub.s32 %v4226, %v4290
      %v4292 = vrot.slane %v3741, %v4291
      %v4293 = vlaneseq
      %v4294 = vshrl.u32 %v4293, 7
      %v4295 = vsub.s32 %v4226, %v4294
      %v4296 = vrot.slane %v3742, %v4295
      %v4297 = vlaneseq
      %v4298 = vshrl.u32 %v4297, 7
      %v4299 = vsub.s32 %v4226, %v4298
      %v4300 = vrot.slane %v3743, %v4299
      %v4301 = vsel %vm3784, %v4276, %v4272
      %v4302 = vsel %vm3786, %v4280, %v4301
      %v4303 = vsel %vm3788, %v4284, %v4302
      %v4304 = vsel %vm3790, %v4288, %v4303
      %v4305 = vsel %vm3792, %v4292, %v4304
      %v4306 = vsel %vm3794, %v4296, %v4305
      %v4307 = vsel %vm3796, %v4300, %v4306
      %4309 = vst.msk [vmem:[%s204 + $0x8] sm:$0xff] %vm4267, %v4307
      %v4318 = vadd.s32 %v222, 4294967254
      %v4319 = vlaneseq
      %v4320 = vshrl.u32 %v4319, 7
      %v4321 = vsub.s32 %v4318, %v4320
      %v4322 = vrot.slane %v3435, %v4321
      %v4323 = vlaneseq
      %v4324 = vshrl.u32 %v4323, 7
      %v4325 = vsub.s32 %v4318, %v4324
      %v4326 = vrot.slane %v3451, %v4325
      %v4327 = vlaneseq
      %v4328 = vshrl.u32 %v4327, 7
      %v4329 = vsub.s32 %v4318, %v4328
      %v4330 = vrot.slane %v3467, %v4329
      %v4331 = vlaneseq
      %v4332 = vshrl.u32 %v4331, 7
      %v4333 = vsub.s32 %v4318, %v4332
      %v4334 = vrot.slane %v3483, %v4333
      %v4335 = vlaneseq
      %v4336 = vshrl.u32 %v4335, 7
      %v4337 = vsub.s32 %v4318, %v4336
      %v4338 = vrot.slane %v3499, %v4337
      %v4339 = vlaneseq
      %v4340 = vshrl.u32 %v4339, 7
      %v4341 = vsub.s32 %v4318, %v4340
      %v4342 = vrot.slane %v3515, %v4341
      %v4343 = vlaneseq
      %v4344 = vshrl.u32 %v4343, 7
      %v4345 = vsub.s32 %v4318, %v4344
      %v4346 = vrot.slane %v3531, %v4345
      %v4347 = vlaneseq
      %v4348 = vshrl.u32 %v4347, 7
      %v4349 = vsub.s32 %v4318, %v4348
      %v4350 = vrot.slane %v3547, %v4349
      %v4351 = vsel %vm3784, %v4326, %v4322
      %v4352 = vsel %vm3786, %v4330, %v4351
      %v4353 = vsel %vm3788, %v4334, %v4352
      %v4354 = vsel %vm3790, %v4338, %v4353
      %v4355 = vsel %vm3792, %v4342, %v4354
      %v4356 = vsel %vm3794, %v4346, %v4355
      %v4357 = vsel %vm3796, %v4350, %v4356
      %vm4359 = vcmask 400720
      %4360 = vst.msk [vmem:[%s204] sm:$0xff] %vm4359, %v4357
      %v4361 = vlaneseq
      %v4362 = vshrl.u32 %v4361, 7
      %v4363 = vsub.s32 %v4318, %v4362
      %v4364 = vrot.slane %v3736, %v4363
      %v4365 = vlaneseq
      %v4366 = vshrl.u32 %v4365, 7
      %v4367 = vsub.s32 %v4318, %v4366
      %v4368 = vrot.slane %v3737, %v4367
      %v4369 = vlaneseq
      %v4370 = vshrl.u32 %v4369, 7
      %v4371 = vsub.s32 %v4318, %v4370
      %v4372 = vrot.slane %v3738, %v4371
      %v4373 = vlaneseq
      %v4374 = vshrl.u32 %v4373, 7
      %v4375 = vsub.s32 %v4318, %v4374
      %v4376 = vrot.slane %v3739, %v4375
      %v4377 = vlaneseq
      %v4378 = vshrl.u32 %v4377, 7
      %v4379 = vsub.s32 %v4318, %v4378
      %v4380 = vrot.slane %v3740, %v4379
      %v4381 = vlaneseq
      %v4382 = vshrl.u32 %v4381, 7
      %v4383 = vsub.s32 %v4318, %v4382
      %v4384 = vrot.slane %v3741, %v4383
      %v4385 = vlaneseq
      %v4386 = vshrl.u32 %v4385, 7
      %v4387 = vsub.s32 %v4318, %v4386
      %v4388 = vrot.slane %v3742, %v4387
      %v4389 = vlaneseq
      %v4390 = vshrl.u32 %v4389, 7
      %v4391 = vsub.s32 %v4318, %v4390
      %v4392 = vrot.slane %v3743, %v4391
      %v4393 = vsel %vm3784, %v4368, %v4364
      %v4394 = vsel %vm3786, %v4372, %v4393
      %v4395 = vsel %vm3788, %v4376, %v4394
      %v4396 = vsel %vm3790, %v4380, %v4395
      %v4397 = vsel %vm3792, %v4384, %v4396
      %v4398 = vsel %vm3794, %v4388, %v4397
      %v4399 = vsel %vm3796, %v4392, %v4398
      %4401 = vst.msk [vmem:[%s204 + $0x8] sm:$0xff] %vm4359, %v4399
      %v4410 = vadd.s32 %v222, 4294967247
      %v4411 = vlaneseq
      %v4412 = vshrl.u32 %v4411, 7
      %v4413 = vsub.s32 %v4410, %v4412
      %v4414 = vrot.slane %v3436, %v4413
      %v4415 = vlaneseq
      %v4416 = vshrl.u32 %v4415, 7
      %v4417 = vsub.s32 %v4410, %v4416
      %v4418 = vrot.slane %v3452, %v4417
      %v4419 = vlaneseq
      %v4420 = vshrl.u32 %v4419, 7
      %v4421 = vsub.s32 %v4410, %v4420
      %v4422 = vrot.slane %v3468, %v4421
      %v4423 = vlaneseq
      %v4424 = vshrl.u32 %v4423, 7
      %v4425 = vsub.s32 %v4410, %v4424
      %v4426 = vrot.slane %v3484, %v4425
      %v4427 = vlaneseq
      %v4428 = vshrl.u32 %v4427, 7
      %v4429 = vsub.s32 %v4410, %v4428
      %v4430 = vrot.slane %v3500, %v4429
      %v4431 = vlaneseq
      %v4432 = vshrl.u32 %v4431, 7
      %v4433 = vsub.s32 %v4410, %v4432
      %v4434 = vrot.slane %v3516, %v4433
      %v4435 = vlaneseq
      %v4436 = vshrl.u32 %v4435, 7
      %v4437 = vsub.s32 %v4410, %v4436
      %v4438 = vrot.slane %v3532, %v4437
      %v4439 = vlaneseq
      %v4440 = vshrl.u32 %v4439, 7
      %v4441 = vsub.s32 %v4410, %v4440
      %v4442 = vrot.slane %v3548, %v4441
      %v4443 = vsel %vm3784, %v4418, %v4414
      %v4444 = vsel %vm3786, %v4422, %v4443
      %v4445 = vsel %vm3788, %v4426, %v4444
      %v4446 = vsel %vm3790, %v4430, %v4445
      %v4447 = vsel %vm3792, %v4434, %v4446
      %v4448 = vsel %vm3794, %v4438, %v4447
      %v4449 = vsel %vm3796, %v4442, %v4448
      %vm4451 = vcmask 458120
      %4452 = vst.msk [vmem:[%s204] sm:$0xff] %vm4451, %v4449
      %v4453 = vlaneseq
      %v4454 = vshrl.u32 %v4453, 7
      %v4455 = vsub.s32 %v4410, %v4454
      %v4456 = vrot.slane %v3736, %v4455
      %v4457 = vlaneseq
      %v4458 = vshrl.u32 %v4457, 7
      %v4459 = vsub.s32 %v4410, %v4458
      %v4460 = vrot.slane %v3737, %v4459
      %v4461 = vlaneseq
      %v4462 = vshrl.u32 %v4461, 7
      %v4463 = vsub.s32 %v4410, %v4462
      %v4464 = vrot.slane %v3738, %v4463
      %v4465 = vlaneseq
      %v4466 = vshrl.u32 %v4465, 7
      %v4467 = vsub.s32 %v4410, %v4466
      %v4468 = vrot.slane %v3739, %v4467
      %v4469 = vlaneseq
      %v4470 = vshrl.u32 %v4469, 7
      %v4471 = vsub.s32 %v4410, %v4470
      %v4472 = vrot.slane %v3740, %v4471
      %v4473 = vlaneseq
      %v4474 = vshrl.u32 %v4473, 7
      %v4475 = vsub.s32 %v4410, %v4474
      %v4476 = vrot.slane %v3741, %v4475
      %v4477 = vlaneseq
      %v4478 = vshrl.u32 %v4477, 7
      %v4479 = vsub.s32 %v4410, %v4478
      %v4480 = vrot.slane %v3742, %v4479
      %v4481 = vlaneseq
      %v4482 = vshrl.u32 %v4481, 7
      %v4483 = vsub.s32 %v4410, %v4482
      %v4484 = vrot.slane %v3743, %v4483
      %v4485 = vsel %vm3784, %v4460, %v4456
      %v4486 = vsel %vm3786, %v4464, %v4485
      %v4487 = vsel %vm3788, %v4468, %v4486
      %v4488 = vsel %vm3790, %v4472, %v4487
      %v4489 = vsel %vm3792, %v4476, %v4488
      %v4490 = vsel %vm3794, %v4480, %v4489
      %v4491 = vsel %vm3796, %v4484, %v4490
      %4493 = vst.msk [vmem:[%s204 + $0x8] sm:$0xff] %vm4451, %v4491
      %v4502 = vadd.s32 %v222, 4294967240
      %v4503 = vlaneseq
      %v4504 = vshrl.u32 %v4503, 7
      %v4505 = vsub.s32 %v4502, %v4504
      %v4506 = vrot.slane %v3437, %v4505
      %v4507 = vlaneseq
      %v4508 = vshrl.u32 %v4507, 7
      %v4509 = vsub.s32 %v4502, %v4508
      %v4510 = vrot.slane %v3453, %v4509
      %v4511 = vlaneseq
      %v4512 = vshrl.u32 %v4511, 7
      %v4513 = vsub.s32 %v4502, %v4512
      %v4514 = vrot.slane %v3469, %v4513
      %v4515 = vlaneseq
      %v4516 = vshrl.u32 %v4515, 7
      %v4517 = vsub.s32 %v4502, %v4516
      %v4518 = vrot.slane %v3485, %v4517
      %v4519 = vlaneseq
      %v4520 = vshrl.u32 %v4519, 7
      %v4521 = vsub.s32 %v4502, %v4520
      %v4522 = vrot.slane %v3501, %v4521
      %v4523 = vlaneseq
      %v4524 = vshrl.u32 %v4523, 7
      %v4525 = vsub.s32 %v4502, %v4524
      %v4526 = vrot.slane %v3517, %v4525
      %v4527 = vlaneseq
      %v4528 = vshrl.u32 %v4527, 7
      %v4529 = vsub.s32 %v4502, %v4528
      %v4530 = vrot.slane %v3533, %v4529
      %v4531 = vlaneseq
      %v4532 = vshrl.u32 %v4531, 7
      %v4533 = vsub.s32 %v4502, %v4532
      %v4534 = vrot.slane %v3549, %v4533
      %v4535 = vsel %vm3784, %v4510, %v4506
      %v4536 = vsel %vm3786, %v4514, %v4535
      %v4537 = vsel %vm3788, %v4518, %v4536
      %v4538 = vsel %vm3790, %v4522, %v4537
      %v4539 = vsel %vm3792, %v4526, %v4538
      %v4540 = vsel %vm3794, %v4530, %v4539
      %v4541 = vsel %vm3796, %v4534, %v4540
      %vm4543 = vcmask 515520
      %4544 = vst.msk [vmem:[%s204] sm:$0xff] %vm4543, %v4541
      %v4545 = vlaneseq
      %v4546 = vshrl.u32 %v4545, 7
      %v4547 = vsub.s32 %v4502, %v4546
      %v4548 = vrot.slane %v3736, %v4547
      %v4549 = vlaneseq
      %v4550 = vshrl.u32 %v4549, 7
      %v4551 = vsub.s32 %v4502, %v4550
      %v4552 = vrot.slane %v3737, %v4551
      %v4553 = vlaneseq
      %v4554 = vshrl.u32 %v4553, 7
      %v4555 = vsub.s32 %v4502, %v4554
      %v4556 = vrot.slane %v3738, %v4555
      %v4557 = vlaneseq
      %v4558 = vshrl.u32 %v4557, 7
      %v4559 = vsub.s32 %v4502, %v4558
      %v4560 = vrot.slane %v3739, %v4559
      %v4561 = vlaneseq
      %v4562 = vshrl.u32 %v4561, 7
      %v4563 = vsub.s32 %v4502, %v4562
      %v4564 = vrot.slane %v3740, %v4563
      %v4565 = vlaneseq
      %v4566 = vshrl.u32 %v4565, 7
      %v4567 = vsub.s32 %v4502, %v4566
      %v4568 = vrot.slane %v3741, %v4567
      %v4569 = vlaneseq
      %v4570 = vshrl.u32 %v4569, 7
      %v4571 = vsub.s32 %v4502, %v4570
      %v4572 = vrot.slane %v3742, %v4571
      %v4573 = vlaneseq
      %v4574 = vshrl.u32 %v4573, 7
      %v4575 = vsub.s32 %v4502, %v4574
      %v4576 = vrot.slane %v3743, %v4575
      %v4577 = vsel %vm3784, %v4552, %v4548
      %v4578 = vsel %vm3786, %v4556, %v4577
      %v4579 = vsel %vm3788, %v4560, %v4578
      %v4580 = vsel %vm3790, %v4564, %v4579
      %v4581 = vsel %vm3792, %v4568, %v4580
      %v4582 = vsel %vm3794, %v4572, %v4581
      %v4583 = vsel %vm3796, %v4576, %v4582
      %4585 = vst.msk [vmem:[%s204 + $0x8] sm:$0xff] %vm4543, %v4583
      %v4594 = vadd.s32 %v222, 4294967233
      %v4595 = vlaneseq
      %v4596 = vshrl.u32 %v4595, 7
      %v4597 = vsub.s32 %v4594, %v4596
      %v4598 = vrot.slane %v3438, %v4597
      %v4599 = vlaneseq
      %v4600 = vshrl.u32 %v4599, 7
      %v4601 = vsub.s32 %v4594, %v4600
      %v4602 = vrot.slane %v3454, %v4601
      %v4603 = vlaneseq
      %v4604 = vshrl.u32 %v4603, 7
      %v4605 = vsub.s32 %v4594, %v4604
      %v4606 = vrot.slane %v3470, %v4605
      %v4607 = vlaneseq
      %v4608 = vshrl.u32 %v4607, 7
      %v4609 = vsub.s32 %v4594, %v4608
      %v4610 = vrot.slane %v3486, %v4609
      %v4611 = vlaneseq
      %v4612 = vshrl.u32 %v4611, 7
      %v4613 = vsub.s32 %v4594, %v4612
      %v4614 = vrot.slane %v3502, %v4613
      %v4615 = vlaneseq
      %v4616 = vshrl.u32 %v4615, 7
      %v4617 = vsub.s32 %v4594, %v4616
      %v4618 = vrot.slane %v3518, %v4617
      %v4619 = vlaneseq
      %v4620 = vshrl.u32 %v4619, 7
      %v4621 = vsub.s32 %v4594, %v4620
      %v4622 = vrot.slane %v3534, %v4621
      %v4623 = vlaneseq
      %v4624 = vshrl.u32 %v4623, 7
      %v4625 = vsub.s32 %v4594, %v4624
      %v4626 = vrot.slane %v3550, %v4625
      %v4627 = vsel %vm3784, %v4602, %v4598
      %v4628 = vsel %vm3786, %v4606, %v4627
      %v4629 = vsel %vm3788, %v4610, %v4628
      %v4630 = vsel %vm3790, %v4614, %v4629
      %v4631 = vsel %vm3792, %v4618, %v4630
      %v4632 = vsel %vm3794, %v4622, %v4631
      %v4633 = vsel %vm3796, %v4626, %v4632
      %vm4635 = vcmask 572920
      %4636 = vst.msk [vmem:[%s204] sm:$0xff] %vm4635, %v4633
      %v4637 = vlaneseq
      %v4638 = vshrl.u32 %v4637, 7
      %v4639 = vsub.s32 %v4594, %v4638
      %v4640 = vrot.slane %v3736, %v4639
      %v4641 = vlaneseq
      %v4642 = vshrl.u32 %v4641, 7
      %v4643 = vsub.s32 %v4594, %v4642
      %v4644 = vrot.slane %v3737, %v4643
      %v4645 = vlaneseq
      %v4646 = vshrl.u32 %v4645, 7
      %v4647 = vsub.s32 %v4594, %v4646
      %v4648 = vrot.slane %v3738, %v4647
      %v4649 = vlaneseq
      %v4650 = vshrl.u32 %v4649, 7
      %v4651 = vsub.s32 %v4594, %v4650
      %v4652 = vrot.slane %v3739, %v4651
      %v4653 = vlaneseq
      %v4654 = vshrl.u32 %v4653, 7
      %v4655 = vsub.s32 %v4594, %v4654
      %v4656 = vrot.slane %v3740, %v4655
      %v4657 = vlaneseq
      %v4658 = vshrl.u32 %v4657, 7
      %v4659 = vsub.s32 %v4594, %v4658
      %v4660 = vrot.slane %v3741, %v4659
      %v4661 = vlaneseq
      %v4662 = vshrl.u32 %v4661, 7
      %v4663 = vsub.s32 %v4594, %v4662
      %v4664 = vrot.slane %v3742, %v4663
      %v4665 = vlaneseq
      %v4666 = vshrl.u32 %v4665, 7
      %v4667 = vsub.s32 %v4594, %v4666
      %v4668 = vrot.slane %v3743, %v4667
      %v4669 = vsel %vm3784, %v4644, %v4640
      %v4670 = vsel %vm3786, %v4648, %v4669
      %v4671 = vsel %vm3788, %v4652, %v4670
      %v4672 = vsel %vm3790, %v4656, %v4671
      %v4673 = vsel %vm3792, %v4660, %v4672
      %v4674 = vsel %vm3794, %v4664, %v4673
      %v4675 = vsel %vm3796, %v4668, %v4674
      %4677 = vst.msk [vmem:[%s204 + $0x8] sm:$0xff] %vm4635, %v4675
      %v4686 = vadd.s32 %v222, 4294967226
      %v4687 = vlaneseq
      %v4688 = vshrl.u32 %v4687, 7
      %v4689 = vsub.s32 %v4686, %v4688
      %v4690 = vrot.slane %v3439, %v4689
      %v4691 = vlaneseq
      %v4692 = vshrl.u32 %v4691, 7
      %v4693 = vsub.s32 %v4686, %v4692
      %v4694 = vrot.slane %v3455, %v4693
      %v4695 = vlaneseq
      %v4696 = vshrl.u32 %v4695, 7
      %v4697 = vsub.s32 %v4686, %v4696
      %v4698 = vrot.slane %v3471, %v4697
      %v4699 = vlaneseq
      %v4700 = vshrl.u32 %v4699, 7
      %v4701 = vsub.s32 %v4686, %v4700
      %v4702 = vrot.slane %v3487, %v4701
      %v4703 = vlaneseq
      %v4704 = vshrl.u32 %v4703, 7
      %v4705 = vsub.s32 %v4686, %v4704
      %v4706 = vrot.slane %v3503, %v4705
      %v4707 = vlaneseq
      %v4708 = vshrl.u32 %v4707, 7
      %v4709 = vsub.s32 %v4686, %v4708
      %v4710 = vrot.slane %v3519, %v4709
      %v4711 = vlaneseq
      %v4712 = vshrl.u32 %v4711, 7
      %v4713 = vsub.s32 %v4686, %v4712
      %v4714 = vrot.slane %v3535, %v4713
      %v4715 = vlaneseq
      %v4716 = vshrl.u32 %v4715, 7
      %v4717 = vsub.s32 %v4686, %v4716
      %v4718 = vrot.slane %v3551, %v4717
      %v4719 = vsel %vm3784, %v4694, %v4690
      %v4720 = vsel %vm3786, %v4698, %v4719
      %v4721 = vsel %vm3788, %v4702, %v4720
      %v4722 = vsel %vm3790, %v4706, %v4721
      %v4723 = vsel %vm3792, %v4710, %v4722
      %v4724 = vsel %vm3794, %v4714, %v4723
      %v4725 = vsel %vm3796, %v4718, %v4724
      %vm4727 = vcmask 630320
      %4728 = vst.msk [vmem:[%s204] sm:$0xff] %vm4727, %v4725
      %v4729 = vlaneseq
      %v4730 = vshrl.u32 %v4729, 7
      %v4731 = vsub.s32 %v4686, %v4730
      %v4732 = vrot.slane %v3736, %v4731
      %v4733 = vlaneseq
      %v4734 = vshrl.u32 %v4733, 7
      %v4735 = vsub.s32 %v4686, %v4734
      %v4736 = vrot.slane %v3737, %v4735
      %v4737 = vlaneseq
      %v4738 = vshrl.u32 %v4737, 7
      %v4739 = vsub.s32 %v4686, %v4738
      %v4740 = vrot.slane %v3738, %v4739
      %v4741 = vlaneseq
      %v4742 = vshrl.u32 %v4741, 7
      %v4743 = vsub.s32 %v4686, %v4742
      %v4744 = vrot.slane %v3739, %v4743
      %v4745 = vlaneseq
      %v4746 = vshrl.u32 %v4745, 7
      %v4747 = vsub.s32 %v4686, %v4746
      %v4748 = vrot.slane %v3740, %v4747
      %v4749 = vlaneseq
      %v4750 = vshrl.u32 %v4749, 7
      %v4751 = vsub.s32 %v4686, %v4750
      %v4752 = vrot.slane %v3741, %v4751
      %v4753 = vlaneseq
      %v4754 = vshrl.u32 %v4753, 7
      %v4755 = vsub.s32 %v4686, %v4754
      %v4756 = vrot.slane %v3742, %v4755
      %v4757 = vlaneseq
      %v4758 = vshrl.u32 %v4757, 7
      %v4759 = vsub.s32 %v4686, %v4758
      %v4760 = vrot.slane %v3743, %v4759
      %v4761 = vsel %vm3784, %v4736, %v4732
      %v4762 = vsel %vm3786, %v4740, %v4761
      %v4763 = vsel %vm3788, %v4744, %v4762
      %v4764 = vsel %vm3790, %v4748, %v4763
      %v4765 = vsel %vm3792, %v4752, %v4764
      %v4766 = vsel %vm3794, %v4756, %v4765
      %v4767 = vsel %vm3796, %v4760, %v4766
      %4769 = vst.msk [vmem:[%s204 + $0x8] sm:$0xff] %vm4727, %v4767
      %v4778 = vadd.s32 %v222, 4294967219
      %v4779 = vlaneseq
      %v4780 = vshrl.u32 %v4779, 7
      %v4781 = vsub.s32 %v4778, %v4780
      %v4782 = vrot.slane %v3440, %v4781
      %v4783 = vlaneseq
      %v4784 = vshrl.u32 %v4783, 7
      %v4785 = vsub.s32 %v4778, %v4784
      %v4786 = vrot.slane %v3456, %v4785
      %v4787 = vlaneseq
      %v4788 = vshrl.u32 %v4787, 7
      %v4789 = vsub.s32 %v4778, %v4788
      %v4790 = vrot.slane %v3472, %v4789
      %v4791 = vlaneseq
      %v4792 = vshrl.u32 %v4791, 7
      %v4793 = vsub.s32 %v4778, %v4792
      %v4794 = vrot.slane %v3488, %v4793
      %v4795 = vlaneseq
      %v4796 = vshrl.u32 %v4795, 7
      %v4797 = vsub.s32 %v4778, %v4796
      %v4798 = vrot.slane %v3504, %v4797
      %v4799 = vlaneseq
      %v4800 = vshrl.u32 %v4799, 7
      %v4801 = vsub.s32 %v4778, %v4800
      %v4802 = vrot.slane %v3520, %v4801
      %v4803 = vlaneseq
      %v4804 = vshrl.u32 %v4803, 7
      %v4805 = vsub.s32 %v4778, %v4804
      %v4806 = vrot.slane %v3536, %v4805
      %v4807 = vlaneseq
      %v4808 = vshrl.u32 %v4807, 7
      %v4809 = vsub.s32 %v4778, %v4808
      %v4810 = vrot.slane %v3552, %v4809
      %v4811 = vsel %vm3784, %v4786, %v4782
      %v4812 = vsel %vm3786, %v4790, %v4811
      %v4813 = vsel %vm3788, %v4794, %v4812
      %v4814 = vsel %vm3790, %v4798, %v4813
      %v4815 = vsel %vm3792, %v4802, %v4814
      %v4816 = vsel %vm3794, %v4806, %v4815
      %v4817 = vsel %vm3796, %v4810, %v4816
      %vm4819 = vcmask 687720
      %4820 = vst.msk [vmem:[%s204] sm:$0xff] %vm4819, %v4817
      %v4821 = vlaneseq
      %v4822 = vshrl.u32 %v4821, 7
      %v4823 = vsub.s32 %v4778, %v4822
      %v4824 = vrot.slane %v3736, %v4823
      %v4825 = vlaneseq
      %v4826 = vshrl.u32 %v4825, 7
      %v4827 = vsub.s32 %v4778, %v4826
      %v4828 = vrot.slane %v3737, %v4827
      %v4829 = vlaneseq
      %v4830 = vshrl.u32 %v4829, 7
      %v4831 = vsub.s32 %v4778, %v4830
      %v4832 = vrot.slane %v3738, %v4831
      %v4833 = vlaneseq
      %v4834 = vshrl.u32 %v4833, 7
      %v4835 = vsub.s32 %v4778, %v4834
      %v4836 = vrot.slane %v3739, %v4835
      %v4837 = vlaneseq
      %v4838 = vshrl.u32 %v4837, 7
      %v4839 = vsub.s32 %v4778, %v4838
      %v4840 = vrot.slane %v3740, %v4839
      %v4841 = vlaneseq
      %v4842 = vshrl.u32 %v4841, 7
      %v4843 = vsub.s32 %v4778, %v4842
      %v4844 = vrot.slane %v3741, %v4843
      %v4845 = vlaneseq
      %v4846 = vshrl.u32 %v4845, 7
      %v4847 = vsub.s32 %v4778, %v4846
      %v4848 = vrot.slane %v3742, %v4847
      %v4849 = vlaneseq
      %v4850 = vshrl.u32 %v4849, 7
      %v4851 = vsub.s32 %v4778, %v4850
      %v4852 = vrot.slane %v3743, %v4851
      %v4853 = vsel %vm3784, %v4828, %v4824
      %v4854 = vsel %vm3786, %v4832, %v4853
      %v4855 = vsel %vm3788, %v4836, %v4854
      %v4856 = vsel %vm3790, %v4840, %v4855
      %v4857 = vsel %vm3792, %v4844, %v4856
      %v4858 = vsel %vm3794, %v4848, %v4857
      %v4859 = vsel %vm3796, %v4852, %v4858
      %4861 = vst.msk [vmem:[%s204 + $0x8] sm:$0xff] %vm4819, %v4859
      %v4870 = vadd.s32 %v222, 4294967212
      %v4871 = vlaneseq
      %v4872 = vshrl.u32 %v4871, 7
      %v4873 = vsub.s32 %v4870, %v4872
      %v4874 = vrot.slane %v3441, %v4873
      %v4875 = vlaneseq
      %v4876 = vshrl.u32 %v4875, 7
      %v4877 = vsub.s32 %v4870, %v4876
      %v4878 = vrot.slane %v3457, %v4877
      %v4879 = vlaneseq
      %v4880 = vshrl.u32 %v4879, 7
      %v4881 = vsub.s32 %v4870, %v4880
      %v4882 = vrot.slane %v3473, %v4881
      %v4883 = vlaneseq
      %v4884 = vshrl.u32 %v4883, 7
      %v4885 = vsub.s32 %v4870, %v4884
      %v4886 = vrot.slane %v3489, %v4885
      %v4887 = vlaneseq
      %v4888 = vshrl.u32 %v4887, 7
      %v4889 = vsub.s32 %v4870, %v4888
      %v4890 = vrot.slane %v3505, %v4889
      %v4891 = vlaneseq
      %v4892 = vshrl.u32 %v4891, 7
      %v4893 = vsub.s32 %v4870, %v4892
      %v4894 = vrot.slane %v3521, %v4893
      %v4895 = vlaneseq
      %v4896 = vshrl.u32 %v4895, 7
      %v4897 = vsub.s32 %v4870, %v4896
      %v4898 = vrot.slane %v3537, %v4897
      %v4899 = vlaneseq
      %v4900 = vshrl.u32 %v4899, 7
      %v4901 = vsub.s32 %v4870, %v4900
      %v4902 = vrot.slane %v3553, %v4901
      %v4903 = vsel %vm3784, %v4878, %v4874
      %v4904 = vsel %vm3786, %v4882, %v4903
      %v4905 = vsel %vm3788, %v4886, %v4904
      %v4906 = vsel %vm3790, %v4890, %v4905
      %v4907 = vsel %vm3792, %v4894, %v4906
      %v4908 = vsel %vm3794, %v4898, %v4907
      %v4909 = vsel %vm3796, %v4902, %v4908
      %vm4911 = vcmask 745120
      %4912 = vst.msk [vmem:[%s204] sm:$0xff] %vm4911, %v4909
      %v4913 = vlaneseq
      %v4914 = vshrl.u32 %v4913, 7
      %v4915 = vsub.s32 %v4870, %v4914
      %v4916 = vrot.slane %v3736, %v4915
      %v4917 = vlaneseq
      %v4918 = vshrl.u32 %v4917, 7
      %v4919 = vsub.s32 %v4870, %v4918
      %v4920 = vrot.slane %v3737, %v4919
      %v4921 = vlaneseq
      %v4922 = vshrl.u32 %v4921, 7
      %v4923 = vsub.s32 %v4870, %v4922
      %v4924 = vrot.slane %v3738, %v4923
      %v4925 = vlaneseq
      %v4926 = vshrl.u32 %v4925, 7
      %v4927 = vsub.s32 %v4870, %v4926
      %v4928 = vrot.slane %v3739, %v4927
      %v4929 = vlaneseq
      %v4930 = vshrl.u32 %v4929, 7
      %v4931 = vsub.s32 %v4870, %v4930
      %v4932 = vrot.slane %v3740, %v4931
      %v4933 = vlaneseq
      %v4934 = vshrl.u32 %v4933, 7
      %v4935 = vsub.s32 %v4870, %v4934
      %v4936 = vrot.slane %v3741, %v4935
      %v4937 = vlaneseq
      %v4938 = vshrl.u32 %v4937, 7
      %v4939 = vsub.s32 %v4870, %v4938
      %v4940 = vrot.slane %v3742, %v4939
      %v4941 = vlaneseq
      %v4942 = vshrl.u32 %v4941, 7
      %v4943 = vsub.s32 %v4870, %v4942
      %v4944 = vrot.slane %v3743, %v4943
      %v4945 = vsel %vm3784, %v4920, %v4916
      %v4946 = vsel %vm3786, %v4924, %v4945
      %v4947 = vsel %vm3788, %v4928, %v4946
      %v4948 = vsel %vm3790, %v4932, %v4947
      %v4949 = vsel %vm3792, %v4936, %v4948
      %v4950 = vsel %vm3794, %v4940, %v4949
      %v4951 = vsel %vm3796, %v4944, %v4950
      %4953 = vst.msk [vmem:[%s204 + $0x8] sm:$0xff] %vm4911, %v4951
      %v4962 = vadd.s32 %v222, 4294967205
      %v4963 = vlaneseq
      %v4964 = vshrl.u32 %v4963, 7
      %v4965 = vsub.s32 %v4962, %v4964
      %v4966 = vrot.slane %v3442, %v4965
      %v4967 = vlaneseq
      %v4968 = vshrl.u32 %v4967, 7
      %v4969 = vsub.s32 %v4962, %v4968
      %v4970 = vrot.slane %v3458, %v4969
      %v4971 = vlaneseq
      %v4972 = vshrl.u32 %v4971, 7
      %v4973 = vsub.s32 %v4962, %v4972
      %v4974 = vrot.slane %v3474, %v4973
      %v4975 = vlaneseq
      %v4976 = vshrl.u32 %v4975, 7
      %v4977 = vsub.s32 %v4962, %v4976
      %v4978 = vrot.slane %v3490, %v4977
      %v4979 = vlaneseq
      %v4980 = vshrl.u32 %v4979, 7
      %v4981 = vsub.s32 %v4962, %v4980
      %v4982 = vrot.slane %v3506, %v4981
      %v4983 = vlaneseq
      %v4984 = vshrl.u32 %v4983, 7
      %v4985 = vsub.s32 %v4962, %v4984
      %v4986 = vrot.slane %v3522, %v4985
      %v4987 = vlaneseq
      %v4988 = vshrl.u32 %v4987, 7
      %v4989 = vsub.s32 %v4962, %v4988
      %v4990 = vrot.slane %v3538, %v4989
      %v4991 = vlaneseq
      %v4992 = vshrl.u32 %v4991, 7
      %v4993 = vsub.s32 %v4962, %v4992
      %v4994 = vrot.slane %v3554, %v4993
      %v4995 = vsel %vm3784, %v4970, %v4966
      %v4996 = vsel %vm3786, %v4974, %v4995
      %v4997 = vsel %vm3788, %v4978, %v4996
      %v4998 = vsel %vm3790, %v4982, %v4997
      %v4999 = vsel %vm3792, %v4986, %v4998
      %v5000 = vsel %vm3794, %v4990, %v4999
      %v5001 = vsel %vm3796, %v4994, %v5000
      %vm5003 = vcmask 802520
      %5004 = vst.msk [vmem:[%s204] sm:$0xff] %vm5003, %v5001
      %v5005 = vlaneseq
      %v5006 = vshrl.u32 %v5005, 7
      %v5007 = vsub.s32 %v4962, %v5006
      %v5008 = vrot.slane %v3736, %v5007
      %v5009 = vlaneseq
      %v5010 = vshrl.u32 %v5009, 7
      %v5011 = vsub.s32 %v4962, %v5010
      %v5012 = vrot.slane %v3737, %v5011
      %v5013 = vlaneseq
      %v5014 = vshrl.u32 %v5013, 7
      %v5015 = vsub.s32 %v4962, %v5014
      %v5016 = vrot.slane %v3738, %v5015
      %v5017 = vlaneseq
      %v5018 = vshrl.u32 %v5017, 7
      %v5019 = vsub.s32 %v4962, %v5018
      %v5020 = vrot.slane %v3739, %v5019
      %v5021 = vlaneseq
      %v5022 = vshrl.u32 %v5021, 7
      %v5023 = vsub.s32 %v4962, %v5022
      %v5024 = vrot.slane %v3740, %v5023
      %v5025 = vlaneseq
      %v5026 = vshrl.u32 %v5025, 7
      %v5027 = vsub.s32 %v4962, %v5026
      %v5028 = vrot.slane %v3741, %v5027
      %v5029 = vlaneseq
      %v5030 = vshrl.u32 %v5029, 7
      %v5031 = vsub.s32 %v4962, %v5030
      %v5032 = vrot.slane %v3742, %v5031
      %v5033 = vlaneseq
      %v5034 = vshrl.u32 %v5033, 7
      %v5035 = vsub.s32 %v4962, %v5034
      %v5036 = vrot.slane %v3743, %v5035
      %v5037 = vsel %vm3784, %v5012, %v5008
      %v5038 = vsel %vm3786, %v5016, %v5037
      %v5039 = vsel %vm3788, %v5020, %v5038
      %v5040 = vsel %vm3790, %v5024, %v5039
      %v5041 = vsel %vm3792, %v5028, %v5040
      %v5042 = vsel %vm3794, %v5032, %v5041
      %v5043 = vsel %vm3796, %v5036, %v5042
      %5045 = vst.msk [vmem:[%s204 + $0x8] sm:$0xff] %vm5003, %v5043
      %v5054 = vadd.s32 %v222, 4294967198
      %v5055 = vlaneseq
      %v5056 = vshrl.u32 %v5055, 7
      %v5057 = vsub.s32 %v5054, %v5056
      %v5058 = vrot.slane %v3443, %v5057
      %v5059 = vlaneseq
      %v5060 = vshrl.u32 %v5059, 7
      %v5061 = vsub.s32 %v5054, %v5060
      %v5062 = vrot.slane %v3459, %v5061
      %v5063 = vlaneseq
      %v5064 = vshrl.u32 %v5063, 7
      %v5065 = vsub.s32 %v5054, %v5064
      %v5066 = vrot.slane %v3475, %v5065
      %v5067 = vlaneseq
      %v5068 = vshrl.u32 %v5067, 7
      %v5069 = vsub.s32 %v5054, %v5068
      %v5070 = vrot.slane %v3491, %v5069
      %v5071 = vlaneseq
      %v5072 = vshrl.u32 %v5071, 7
      %v5073 = vsub.s32 %v5054, %v5072
      %v5074 = vrot.slane %v3507, %v5073
      %v5075 = vlaneseq
      %v5076 = vshrl.u32 %v5075, 7
      %v5077 = vsub.s32 %v5054, %v5076
      %v5078 = vrot.slane %v3523, %v5077
      %v5079 = vlaneseq
      %v5080 = vshrl.u32 %v5079, 7
      %v5081 = vsub.s32 %v5054, %v5080
      %v5082 = vrot.slane %v3539, %v5081
      %v5083 = vlaneseq
      %v5084 = vshrl.u32 %v5083, 7
      %v5085 = vsub.s32 %v5054, %v5084
      %v5086 = vrot.slane %v3555, %v5085
      %v5087 = vsel %vm3784, %v5062, %v5058
      %v5088 = vsel %vm3786, %v5066, %v5087
      %v5089 = vsel %vm3788, %v5070, %v5088
      %v5090 = vsel %vm3790, %v5074, %v5089
      %v5091 = vsel %vm3792, %v5078, %v5090
      %v5092 = vsel %vm3794, %v5082, %v5091
      %v5093 = vsel %vm3796, %v5086, %v5092
      %vm5095 = vcmask 859920
      %5096 = vst.msk [vmem:[%s204] sm:$0xff] %vm5095, %v5093
      %v5097 = vlaneseq
      %v5098 = vshrl.u32 %v5097, 7
      %v5099 = vsub.s32 %v5054, %v5098
      %v5100 = vrot.slane %v3736, %v5099
      %v5101 = vlaneseq
      %v5102 = vshrl.u32 %v5101, 7
      %v5103 = vsub.s32 %v5054, %v5102
      %v5104 = vrot.slane %v3737, %v5103
      %v5105 = vlaneseq
      %v5106 = vshrl.u32 %v5105, 7
      %v5107 = vsub.s32 %v5054, %v5106
      %v5108 = vrot.slane %v3738, %v5107
      %v5109 = vlaneseq
      %v5110 = vshrl.u32 %v5109, 7
      %v5111 = vsub.s32 %v5054, %v5110
      %v5112 = vrot.slane %v3739, %v5111
      %v5113 = vlaneseq
      %v5114 = vshrl.u32 %v5113, 7
      %v5115 = vsub.s32 %v5054, %v5114
      %v5116 = vrot.slane %v3740, %v5115
      %v5117 = vlaneseq
      %v5118 = vshrl.u32 %v5117, 7
      %v5119 = vsub.s32 %v5054, %v5118
      %v5120 = vrot.slane %v3741, %v5119
      %v5121 = vlaneseq
      %v5122 = vshrl.u32 %v5121, 7
      %v5123 = vsub.s32 %v5054, %v5122
      %v5124 = vrot.slane %v3742, %v5123
      %v5125 = vlaneseq
      %v5126 = vshrl.u32 %v5125, 7
      %v5127 = vsub.s32 %v5054, %v5126
      %v5128 = vrot.slane %v3743, %v5127
      %v5129 = vsel %vm3784, %v5104, %v5100
      %v5130 = vsel %vm3786, %v5108, %v5129
      %v5131 = vsel %vm3788, %v5112, %v5130
      %v5132 = vsel %vm3790, %v5116, %v5131
      %v5133 = vsel %vm3792, %v5120, %v5132
      %v5134 = vsel %vm3794, %v5124, %v5133
      %v5135 = vsel %vm3796, %v5128, %v5134
      %5137 = vst.msk [vmem:[%s204 + $0x8] sm:$0xff] %vm5095, %v5135
      %v5146 = vadd.s32 %v222, 4294967191
      %v5147 = vlaneseq
      %v5148 = vshrl.u32 %v5147, 7
      %v5149 = vsub.s32 %v5146, %v5148
      %v5150 = vrot.slane %v3444, %v5149
      %v5151 = vlaneseq
      %v5152 = vshrl.u32 %v5151, 7
      %v5153 = vsub.s32 %v5146, %v5152
      %v5154 = vrot.slane %v3460, %v5153
      %v5155 = vlaneseq
      %v5156 = vshrl.u32 %v5155, 7
      %v5157 = vsub.s32 %v5146, %v5156
      %v5158 = vrot.slane %v3476, %v5157
      %v5159 = vlaneseq
      %v5160 = vshrl.u32 %v5159, 7
      %v5161 = vsub.s32 %v5146, %v5160
      %v5162 = vrot.slane %v3492, %v5161
      %v5163 = vlaneseq
      %v5164 = vshrl.u32 %v5163, 7
      %v5165 = vsub.s32 %v5146, %v5164
      %v5166 = vrot.slane %v3508, %v5165
      %v5167 = vlaneseq
      %v5168 = vshrl.u32 %v5167, 7
      %v5169 = vsub.s32 %v5146, %v5168
      %v5170 = vrot.slane %v3524, %v5169
      %v5171 = vlaneseq
      %v5172 = vshrl.u32 %v5171, 7
      %v5173 = vsub.s32 %v5146, %v5172
      %v5174 = vrot.slane %v3540, %v5173
      %v5175 = vlaneseq
      %v5176 = vshrl.u32 %v5175, 7
      %v5177 = vsub.s32 %v5146, %v5176
      %v5178 = vrot.slane %v3556, %v5177
      %v5179 = vsel %vm3784, %v5154, %v5150
      %v5180 = vsel %vm3786, %v5158, %v5179
      %v5181 = vsel %vm3788, %v5162, %v5180
      %v5182 = vsel %vm3790, %v5166, %v5181
      %v5183 = vsel %vm3792, %v5170, %v5182
      %v5184 = vsel %vm3794, %v5174, %v5183
      %v5185 = vsel %vm3796, %v5178, %v5184
      %vm5187 = vcmask 917320
      %5188 = vst.msk [vmem:[%s204] sm:$0xff] %vm5187, %v5185
      %v5189 = vlaneseq
      %v5190 = vshrl.u32 %v5189, 7
      %v5191 = vsub.s32 %v5146, %v5190
      %v5192 = vrot.slane %v3736, %v5191
      %v5193 = vlaneseq
      %v5194 = vshrl.u32 %v5193, 7
      %v5195 = vsub.s32 %v5146, %v5194
      %v5196 = vrot.slane %v3737, %v5195
      %v5197 = vlaneseq
      %v5198 = vshrl.u32 %v5197, 7
      %v5199 = vsub.s32 %v5146, %v5198
      %v5200 = vrot.slane %v3738, %v5199
      %v5201 = vlaneseq
      %v5202 = vshrl.u32 %v5201, 7
      %v5203 = vsub.s32 %v5146, %v5202
      %v5204 = vrot.slane %v3739, %v5203
      %v5205 = vlaneseq
      %v5206 = vshrl.u32 %v5205, 7
      %v5207 = vsub.s32 %v5146, %v5206
      %v5208 = vrot.slane %v3740, %v5207
      %v5209 = vlaneseq
      %v5210 = vshrl.u32 %v5209, 7
      %v5211 = vsub.s32 %v5146, %v5210
      %v5212 = vrot.slane %v3741, %v5211
      %v5213 = vlaneseq
      %v5214 = vshrl.u32 %v5213, 7
      %v5215 = vsub.s32 %v5146, %v5214
      %v5216 = vrot.slane %v3742, %v5215
      %v5217 = vlaneseq
      %v5218 = vshrl.u32 %v5217, 7
      %v5219 = vsub.s32 %v5146, %v5218
      %v5220 = vrot.slane %v3743, %v5219
      %v5221 = vsel %vm3784, %v5196, %v5192
      %v5222 = vsel %vm3786, %v5200, %v5221
      %v5223 = vsel %vm3788, %v5204, %v5222
      %v5224 = vsel %vm3790, %v5208, %v5223
      %v5225 = vsel %vm3792, %v5212, %v5224
      %v5226 = vsel %vm3794, %v5216, %v5225
      %v5227 = vsel %vm3796, %v5220, %v5226
      %5229 = vst.msk [vmem:[%s204 + $0x8] sm:$0xff] %vm5187, %v5227
      %p5230 = scmp.lt.s32.totalorder %s16, 1
      %s5231 = scalar_select %p5230, %s16, 1
      %s5232 = smul.addr %s5231, 2
      %s5233 = smul.addr %s5232, 8
      %s5234 = scalar_lea.vmem %s3, %s5233
      %p5235 = scmp.lt.s32.totalorder %s16, 1
      %s5236 = scalar_select %p5235, %s16, 1
      %s5237 = smul.addr %s5236, 8
      %s5238 = scalar_lea.vmem %s4, %s5237
      // Predicated region
      $region33: #{mspidna_block.1} parent=31 // pred_check
        %p5239 = pneg %p102
      $region34: #{mspidna_block.1} parent=31 // pred_check_branch
        %5241 = sbr.rel (%p5239) target = $region36
      $region35: #{mspidna_block.1} parent=31 // pred_region
        _
      $region36: #{mspidna_block.1} parent=31 // pred_fallthru
        _
      // Predicated region
      $region37: #{mspidna_block.1} parent=31 // pred_check
        %p5242 = pneg %p128
      $region38: #{mspidna_block.1} parent=31 // pred_check_branch
        %5244 = sbr.rel (%p5242) target = $region40
      $region39: #{mspidna_block.1} parent=31 // pred_region
        _
      $region40: #{mspidna_block.1} parent=31 // pred_fallthru
        _
    $region32: #{mspidna_block.1} parent=5 // pred_fallthru
      _
    %p5245 = scmp.le.s32.totalorder 2, %s11
    // Predicated region
    $region41: #{mspidna_block.1} parent=5 // pred_check
      %p5246 = pneg %p5245
    $region42: #{mspidna_block.1} parent=5 // pred_check_branch
      %5248 = sbr.rel (%p5246) target = $region44
    $region43: #{mspidna_block.1} parent=5 // pred_region
      %s5249 = ssub.s32 %s11, 2
      // Predicated region
      $region45: #{mspidna_block.1} parent=43 // pred_check
        %p5250 = pneg %p108
      $region46: #{mspidna_block.1} parent=43 // pred_check_branch
        %5252 = sbr.rel (%p5250) target = $region48
      $region47: #{mspidna_block.1} parent=43 // pred_region
        %p5253 = scmp.lt.s32.totalorder %s17, 1
        %s5254 = scalar_select %p5253, %s17, 1
        %s5255 = smul.addr %s5254, 2
        %s5256 = smul.addr %s5255, 8
        %s5257 = scalar_lea.vmem %s3, %s5256
      $region48: #{mspidna_block.1} parent=43 // pred_fallthru
        _
      // Predicated region
      $region49: #{mspidna_block.1} parent=43 // pred_check
        %p5258 = pneg %p134
      $region50: #{mspidna_block.1} parent=43 // pred_check_branch
        %5260 = sbr.rel (%p5258) target = $region52
      $region51: #{mspidna_block.1} parent=43 // pred_region
        %p5261 = scmp.lt.s32.totalorder %s17, 1
        %s5262 = scalar_select %p5261, %s17, 1
        %s5263 = smul.addr %s5262, 8
        %s5264 = scalar_lea.vmem %s4, %s5263
      $region52: #{mspidna_block.1} parent=43 // pred_fallthru
        _
    $region44: #{mspidna_block.1} parent=5 // pred_fallthru
      _
  $region6: #{mspidna_block.1} parent=0 // loop_footer
    %s15 = sadd.s32 1, %s11
  $region7: #{mspidna_block.1} parent=0 // loop_footer_branch
    %10 = sbr.rel target = $region3
  $region8: #{mspidna_block.1} parent=0 // loop_exit
    _

</llo_original>
